<compile_context>
chip_gen: v5e
topology: v5e:2x2
jax: 0.10.0
libtpu: 0.0.40
codegen_flags: <defaults>
</compile_context>

<pallas_src>
import jax
import jax.numpy as jnp
from jax.experimental import pallas as pl
from jax.experimental.pallas import tpu as pltpu


def _round_up(x, m):
    return (x + m - 1) // m * m


# ---------------------------------------------------------------------------
# Fused Pallas kernels
# ---------------------------------------------------------------------------
# Both kernels consume a "residue-batched" matmul problem:
#   X: (R, N, K) bf16  (or (N, K) shared across residues for the 1x1 block)
#       -- R independent row blocks; padded rows/columns are exactly zero.
#   W: (R, K, C) bf16  -- per-residue weight matrix (padded cols are zero).
# and produce Y[r] = X[r] @ W[r] with the block's post-op fused in.


def _fused_matmul_bn_relu(x, w, n_valid, *, shared_x=False, eps=1e-5):
    """Batched matmul + training-mode BatchNorm2d (biased var) + ReLU.

    BN statistics are per output channel, so output-channel tiles are
    independent -> grid over the channel axis ("parallel"); every grid step
    sees the full X (all residues / rows) and its own channel slice of W.
    """
    R, Kp, Cp = w.shape
    if shared_x:
        Np = x.shape[0]
    else:
        assert x.shape[0] == R
        Np = x.shape[1]
    assert x.shape[-1] == Kp
    c_tile = 256 if Cp % 256 == 0 else 128
    inv_n = 1.0 / float(n_valid)

    def kernel(x_ref, w_ref, o_ref):
        xv = x_ref[...]
        if shared_x:
            # vreg-level broadcast across output pixels (no HBM round trip).
            xv = jnp.broadcast_to(xv[None], (R, Np, Kp))
        y = jnp.einsum('rnk,rkc->rnc', xv, w_ref[...],
                       preferred_element_type=jnp.float32)
        # Padded rows/cols of X and W are exactly zero, so their contribution
        # to the sums is zero -> no masking needed; divide by the true count.
        s1 = jnp.sum(y, axis=(0, 1), keepdims=True)
        s2 = jnp.sum(y * y, axis=(0, 1), keepdims=True)
        mean = s1 * inv_n
        var = jnp.maximum(s2 * inv_n - mean * mean, 0.0)   # biased variance
        y = (y - mean) * jax.lax.rsqrt(var + eps)
        o_ref[...] = jnp.maximum(y, 0.0).astype(o_ref.dtype)

    x_spec = (pl.BlockSpec((Np, Kp), lambda j: (0, 0)) if shared_x
              else pl.BlockSpec((R, Np, Kp), lambda j: (0, 0, 0)))
    return pl.pallas_call(
        kernel,
        out_shape=jax.ShapeDtypeStruct((R, Np, Cp), jnp.bfloat16),
        grid=(Cp // c_tile,),
        in_specs=[x_spec,
                  pl.BlockSpec((R, Kp, c_tile), lambda j: (0, 0, j))],
        out_specs=pl.BlockSpec((R, Np, c_tile), lambda j: (0, 0, j)),
        compiler_params=pltpu.CompilerParams(
            dimension_semantics=("parallel",)),
    )(x, w)


def _fused_matmul_tanh(x, w, row_tile):
    """Final block (no BN): rows are independent -> grid over (residue, rows)."""
    R, Np, Kp = x.shape
    Cp = w.shape[2]

    def kernel(x_ref, w_ref, o_ref):
        y = jnp.dot(x_ref[...], w_ref[...], preferred_element_type=jnp.float32)
        o_ref[...] = jnp.tanh(y).astype(o_ref.dtype)

    return pl.pallas_call(
        kernel,
        out_shape=jax.ShapeDtypeStruct((R, Np, Cp), jnp.float32),
        grid=(R, Np // row_tile),
        in_specs=[pl.BlockSpec((None, row_tile, Kp), lambda r, i: (r, i, 0)),
                  pl.BlockSpec((None, Kp, Cp), lambda r, i: (r, 0, 0))],
        out_specs=pl.BlockSpec((None, row_tile, Cp), lambda r, i: (r, i, 0)),
        compiler_params=pltpu.CompilerParams(
            dimension_semantics=("parallel", "parallel")),
    )(x, w)


# ---------------------------------------------------------------------------
# One-time weight preparation (hoisted out of the forward path)
# ---------------------------------------------------------------------------
def prepare_generator(config, raw_weights):
    """Build static per-block plans + prepped bf16 weights (done once)."""
    lat = config['latent_dim']
    channels = [lat] + config['generator_channels'] + [config['im_channels']]
    nb = len(config['generator_kernel_size'])
    H = W = 1
    blocks, prepped = [], []
    for i in range(nb):
        K = config['generator_kernel_size'][i]
        s = config['generator_stride'][i]
        p = config['generator_padding'][i]
        op = config['generator_output_padding'][i]
        Cin, Cout = channels[i], channels[i + 1]
        w = raw_weights[i].astype(jnp.float32)          # (Cin, Cout, K, K)
        Ho = (H - 1) * s - 2 * p + K + op
        Wo = (W - 1) * s - 2 * p + K + op
        apply_bn = (i != nb - 1)
        Cp = _round_up(Cout, 128)

        if H == 1 and W == 1:
            # 1x1 input: ConvTranspose2d is a plain dense map z -> (Ho,Wo,Cout)
            # with one (Cin, Cout) weight per output pixel (zero outside the
            # kernel footprint); batch over the R = Ho*Wo output positions.
            taps = []
            for oh in range(Ho):
                for ow in range(Wo):
                    kh, kw = oh + p, ow + p
                    if kh < K and kw < K:
                        taps.append(w[:, :, kh, kw])
                    else:
                        taps.append(jnp.zeros((Cin, Cout), jnp.float32))
            Kcp = _round_up(Cin, 128)
            Wm = jnp.stack(taps, axis=0)                       # (R, Cin, Cout)
            Wm = jnp.pad(Wm, ((0, 0), (0, Kcp - Cin), (0, Cp - Cout)))
            blocks.append(dict(kind='dense', Ho=Ho, Wo=Wo, Cin=Cin, Cout=Cout,
                               Kcp=Kcp, Cp=Cp, apply_bn=apply_bn))
        else:
            # Sub-pixel decomposition of the transposed conv.
            pad_lo = K - 1 - p
            assert Ho % s == 0 and Wo % s == 0, (
                "TODO(synk): non-uniform residue grids not implemented")
            rplans = []
            for rh in range(s):
                kr_h = (pad_lo - rh) % s
                khs = list(range(kr_h, K, s))
                base_h = (rh + kr_h - pad_lo) // s
                for rw in range(s):
                    kr_w = (pad_lo - rw) % s
                    kws = list(range(kr_w, K, s))
                    base_w = (rw + kr_w - pad_lo) // s
                    assert khs and kws, "TODO(synk): kernel smaller than stride"
                    rplans.append(dict(khs=khs, kws=kws,
                                       base_h=base_h, base_w=base_w))
            nh, nw = Ho // s, Wo // s
            PT = max(0, -min(rp['base_h'] for rp in rplans))
            PB = max(0, max(rp['base_h'] + len(rp['khs']) - 1 + nh
                            for rp in rplans) - H)
            PL = max(0, -min(rp['base_w'] for rp in rplans))
            PR = max(0, max(rp['base_w'] + len(rp['kws']) - 1 + nw
                            for rp in rplans) - W)
            Tmax = max(len(rp['khs']) * len(rp['kws']) for rp in rplans)
            Kcp = _round_up(Tmax * Cin, 128)
            w_res, res_static = [], []
            for rp in rplans:
                taps_w, tap_offsets = [], []
                for jh, kh in enumerate(rp['khs']):
                    for jw, kw in enumerate(rp['kws']):
                        taps_w.append(w[:, :, K - 1 - kh, K - 1 - kw])  # flipped
                        tap_offsets.append((rp['base_h'] + jh + PT,
                                            rp['base_w'] + jw + PL))
                Wr = jnp.stack(taps_w, axis=0).reshape(len(taps_w) * Cin, Cout)
                Wr = jnp.pad(Wr, ((0, Kcp - Wr.shape[0]), (0, Cp - Cout)))
                w_res.append(Wr)
                res_static.append(dict(tap_offsets=tuple(tap_offsets)))
            Wm = jnp.stack(w_res, axis=0)                      # (s*s, Kcp, Cp)
            blocks.append(dict(kind='conv', s=s, Ho=Ho, Wo=Wo, Cin=Cin,
                               Cout=Cout, Kcp=Kcp, Cp=Cp,
                               pads=(PT, PB, PL, PR), residues=res_static,
                               apply_bn=apply_bn))
        prepped.append(Wm.astype(jnp.bfloat16))
        H, W = Ho, Wo
    return blocks, prepped


# ---------------------------------------------------------------------------
# Forward pass
# ---------------------------------------------------------------------------
def generator_forward(z_nchw, prepped_weights, blocks):
    """z_nchw: (B, lat_dim, 1, 1) float32, NCHW like the PyTorch module."""
    B = z_nchw.shape[0]
    x = z_nchw.reshape(B, -1).astype(jnp.bfloat16)       # (B, lat_dim)
    out = None
    for blk, Wm in zip(blocks, prepped_weights):
        Ho, Wo, Cout = blk['Ho'], blk['Wo'], blk['Cout']
        Kcp = blk['Kcp']
        if blk['kind'] == 'dense':
            R = Ho * Wo
            Np = _round_up(B, 16)
            zp = jnp.pad(x, ((0, Np - B), (0, Kcp - x.shape[1])))
            if blk['apply_bn']:
                # X shared across the R output pixels -> broadcast in-kernel.
                Y = _fused_matmul_bn_relu(zp, Wm, n_valid=B * Ho * Wo,
                                          shared_x=True)
            else:
                # Single-block generator corner case (not hit by the test cfg).
                rt = 256 if Np % 256 == 0 else Np
                X = jnp.broadcast_to(zp[None], (R, Np, Kcp))
                Y = _fused_matmul_tanh(X, Wm, rt)
            Y = Y[:, :B, :Cout]
            out = Y.reshape(Ho, Wo, B, Cout).transpose(2, 0, 1, 3)
        else:
            s = blk['s']
            PT, PB, PL, PR = blk['pads']
            Cin = blk['Cin']
            nh, nw = Ho // s, Wo // s
            Nr = B * nh * nw
            if blk['apply_bn']:
                Nrp = _round_up(Nr, 16)
            else:
                rt = 256 if Nr >= 256 else _round_up(Nr, 16)
                Nrp = _round_up(Nr, rt)
            xpad = jnp.pad(out, ((0, 0), (PT, PB), (PL, PR), (0, 0)))
            # TODO(synk): build these patch columns inside the kernel from a
            # VMEM-resident xpad tile to avoid the HBM round trip of the
            # (R, Nr, T*Cin) patch tensor.
            mats = []
            for res in blk['residues']:
                patches = [xpad[:, hoff:hoff + nh, woff:woff + nw, :]
                           for (hoff, woff) in res['tap_offsets']]
                pm = jnp.stack(patches, axis=3).reshape(Nr, len(patches) * Cin)
                mats.append(jnp.pad(pm, ((0, 0), (0, Kcp - pm.shape[1]))))
            X = jnp.stack(mats, axis=0)                  # (s*s, Nr, Kcp) bf16
            X = jnp.pad(X, ((0, 0), (0, Nrp - Nr), (0, 0)))
            if blk['apply_bn']:
                Y = _fused_matmul_bn_relu(X, Wm, n_valid=B * Ho * Wo)
            else:
                Y = _fused_matmul_tanh(X, Wm, rt)
            Y = Y[:, :Nr, :Cout]
            out = (Y.reshape(s, s, B, nh, nw, Cout)
                     .transpose(2, 3, 0, 4, 1, 5)
                     .reshape(B, Ho, Wo, Cout))
    return jnp.transpose(out, (0, 3, 1, 2)).astype(jnp.float32)   # -> NCHW


def init_params(config, key):
    channels = ([config['latent_dim']] + config['generator_channels']
                + [config['im_channels']])
    params = []
    for i, k in enumerate(config['generator_kernel_size']):
        key, sub = jax.random.split(key)
        # PyTorch ConvTranspose2d weight layout: (Cin, Cout, K, K), bias=False
        w = 0.02 * jax.random.normal(
            sub, (channels[i], channels[i + 1], k, k), jnp.float32)
        params.append(w)
    return params


def reference_forward(z_nchw, raw_weights, config):
    """Pure-JAX float32 reference (lhs-dilated conv == ConvTranspose2d)."""
    nb = len(config['generator_kernel_size'])
    x = jnp.transpose(z_nchw, (0, 2, 3, 1))
    for i in range(nb):
        w = raw_weights[i]
        K = config['generator_kernel_size'][i]
        s = config['generator_stride'][i]
        p = config['generator_padding'][i]
        op = config['generator_output_padding'][i]
        wf = jnp.transpose(w[:, :, ::-1, ::-1], (2, 3, 0, 1))     # HWIO, flipped
        x = jax.lax.conv_general_dilated(
            x, wf, window_strides=(1, 1),
            padding=[(K - 1 - p, K - 1 - p + op)] * 2,
            lhs_dilation=(s, s),
            dimension_numbers=('NHWC', 'HWIO', 'NHWC'),
            precision=jax.lax.Precision.HIGHEST)
        if i != nb - 1:
            mean = jnp.mean(x, axis=(0, 1, 2), keepdims=True)
            var = jnp.mean(jnp.square(x - mean), axis=(0, 1, 2), keepdims=True)
            x = jnp.maximum((x - mean) * jax.lax.rsqrt(var + 1e-5), 0.0)
        else:
            x = jnp.tanh(x)
    return jnp.transpose(x, (0, 3, 1, 2))


if __name__ == "__main__":
    config = {
        'latent_dim': 32,
        'im_channels': 3,
        'generator_channels': [32, 16, 8],
        'generator_kernel_size': [4, 4, 4, 4],
        'generator_stride': [1, 2, 2, 2],
        'generator_padding': [0, 1, 1, 1],
        'generator_output_padding': [0, 0, 0, 0],
    }

    key = jax.random.PRNGKey(0)
    key, zkey = jax.random.split(key)
    raw_params = init_params(config, key)
    blocks, prepped = prepare_generator(config, raw_params)

    B = 2
    z = jax.random.normal(zkey, (B, config['latent_dim'], 1, 1), jnp.float32)

    fwd = jax.jit(lambda z_, w_: generator_forward(z_, w_, blocks))
    out = jax.block_until_ready(fwd(z, prepped))

    expected_shape = (B, config['im_channels'], 32, 32)
    assert out.shape == expected_shape, (out.shape, expected_shape)
    assert bool(jnp.all(jnp.isfinite(out)))
    assert bool(jnp.all(jnp.abs(out) <= 1.0 + 1e-6))   # Tanh range

    # Cross-check against a float32 XLA reference (bf16 kernel operands =>
    # small numeric differences are expected; structural bugs would be huge).
    ref = jax.jit(lambda z_, w_: reference_forward(z_, w_, config))(z, raw_params)
    ref = jax.block_until_ready(ref)
    rel_err = float(jnp.linalg.norm(out - ref) / (jnp.linalg.norm(ref) + 1e-12))
    assert rel_err < 0.1, f"mismatch vs float32 reference: rel_err={rel_err}"

    print("KERNEL_OK")
</pallas_src>

<mosaic_0001>
module attributes {stable_mosaic.version = 11 : i64} {
  func.func @kernel(%arg0: i32, %arg1: memref<16x128xbf16, #tpu.memory_space<vmem>>, %arg2: memref<16x128x128xbf16, #tpu.memory_space<vmem>>, %arg3: memref<16x16x128xbf16, #tpu.memory_space<vmem>>) attributes {dimension_semantics = [#tpu.dimension_semantics<parallel>], iteration_bounds = array<i64: 1>, scalar_prefetch = 0 : i64, scratch_operands = 0 : i64, tpu.core_type = #tpu.core_type<tc>, window_params = [{pipeline_mode = #tpu.pipeline_mode<synchronous>, transform_indices = @transform_0, window_bounds = array<i64: 16, 128>}, {transform_indices = @transform_1, window_bounds = array<i64: 16, 128, 128>}, {transform_indices = @transform_2, window_bounds = array<i64: 16, 16, 128>}]} {
    %c0 = arith.constant 0 : index
    %c0_0 = arith.constant 0 : index
    %0 = vector.load %arg1[%c0, %c0_0] : memref<16x128xbf16, #tpu.memory_space<vmem>>, vector<16x128xbf16>
    %1 = vector.shape_cast %0 : vector<16x128xbf16> to vector<1x16x128xbf16>
    %2 = vector.shape_cast %1 : vector<1x16x128xbf16> to vector<1x16x128xbf16>
    %3 = vector.broadcast %2 : vector<1x16x128xbf16> to vector<16x16x128xbf16>
    %c0_1 = arith.constant 0 : index
    %c0_2 = arith.constant 0 : index
    %c0_3 = arith.constant 0 : index
    %4 = vector.load %arg2[%c0_1, %c0_2, %c0_3] : memref<16x128x128xbf16, #tpu.memory_space<vmem>>, vector<16x128x128xbf16>
    "tpu.trace_start"() <{level = 10 : i32, message = "rnk,rkc->rnc"}> : () -> ()
    %cst = arith.constant dense<0.000000e+00> : vector<16x16x128xf32>
    %5 = tpu.matmul %3, %4, %cst {dimension_numbers = #tpu.dot_dimension_numbers<[2], [1], [1], [2], [0, 0, 0, 1, 1, 2], [0], [0]>} : vector<16x16x128xbf16>, vector<16x128x128xbf16>, vector<16x16x128xf32> -> vector<16x16x128xf32>
    "tpu.trace_stop"() : () -> ()
    %cst_4 = arith.constant dense<0.000000e+00> : vector<128xf32>
    %6 = vector.multi_reduction <add>, %5, %cst_4 [0, 1] : vector<16x16x128xf32> to vector<128xf32>
    %7 = vector.shape_cast %6 : vector<128xf32> to vector<1x1x128xf32>
    %8 = arith.mulf %5, %5 : vector<16x16x128xf32>
    %cst_5 = arith.constant dense<0.000000e+00> : vector<128xf32>
    %9 = vector.multi_reduction <add>, %8, %cst_5 [0, 1] : vector<16x16x128xf32> to vector<128xf32>
    %10 = vector.shape_cast %9 : vector<128xf32> to vector<1x1x128xf32>
    %cst_6 = arith.constant 3.125000e-02 : f32
    %11 = vector.broadcast %cst_6 : f32 to vector<1x1x128xf32>
    %12 = arith.mulf %7, %11 : vector<1x1x128xf32>
    %cst_7 = arith.constant 3.125000e-02 : f32
    %13 = vector.broadcast %cst_7 : f32 to vector<1x1x128xf32>
    %14 = arith.mulf %10, %13 : vector<1x1x128xf32>
    %15 = arith.mulf %12, %12 : vector<1x1x128xf32>
    %16 = arith.subf %14, %15 : vector<1x1x128xf32>
    %cst_8 = arith.constant 0.000000e+00 : f32
    %17 = vector.broadcast %cst_8 : f32 to vector<1x1x128xf32>
    %18 = arith.maximumf %16, %17 : vector<1x1x128xf32>
    %19 = vector.broadcast %12 : vector<1x1x128xf32> to vector<16x16x128xf32>
    %20 = arith.subf %5, %19 : vector<16x16x128xf32>
    %cst_9 = arith.constant 9.99999974E-6 : f32
    %21 = vector.broadcast %cst_9 : f32 to vector<1x1x128xf32>
    %22 = arith.addf %18, %21 : vector<1x1x128xf32>
    %23 = math.rsqrt %22 : vector<1x1x128xf32>
    %24 = vector.broadcast %23 : vector<1x1x128xf32> to vector<16x16x128xf32>
    %25 = arith.mulf %20, %24 : vector<16x16x128xf32>
    %cst_10 = arith.constant 0.000000e+00 : f32
    %26 = vector.broadcast %cst_10 : f32 to vector<16x16x128xf32>
    %27 = arith.maximumf %25, %26 : vector<16x16x128xf32>
    %28 = arith.truncf %27 : vector<16x16x128xf32> to vector<16x16x128xbf16>
    %c0_11 = arith.constant 0 : index
    %c0_12 = arith.constant 0 : index
    %c0_13 = arith.constant 0 : index
    %29 = vector.load %arg3[%c0_11, %c0_12, %c0_13] : memref<16x16x128xbf16, #tpu.memory_space<vmem>>, vector<16x16x128xbf16>
    tpu.vector_store %arg3[%c0_11, %c0_12, %c0_13], %28 {strides = array<i32>} : memref<16x16x128xbf16, #tpu.memory_space<vmem>>, vector<16x16x128xbf16>,
    return
  }
  func.func @transform_0(%arg0: i32) -> (i32, i32) {
    %c0_i32 = arith.constant 0 : i32
    %c0_i32_0 = arith.constant 0 : i32
    %c0_i32_1 = arith.constant 0 : i32
    return %c0_i32, %c0_i32_0 : i32, i32
  }
  func.func @transform_1(%arg0: i32) -> (i32, i32, i32) {
    %c0_i32 = arith.constant 0 : i32
    %c0_i32_0 = arith.constant 0 : i32
    %c0_i32_1 = arith.constant 0 : i32
    return %c0_i32, %c0_i32_0, %arg0 : i32, i32, i32
  }
  func.func @transform_2(%arg0: i32) -> (i32, i32, i32) {
    %c0_i32 = arith.constant 0 : i32
    %c0_i32_0 = arith.constant 0 : i32
    %c0_i32_1 = arith.constant 0 : i32
    return %c0_i32, %c0_i32_0, %arg0 : i32, i32, i32
  }
}

module attributes {stable_mosaic.version = 11 : i64} {
  func.func @kernel(%arg0: i32, %arg1: memref<4x32x128xbf16, #tpu.memory_space<vmem>>, %arg2: memref<4x128x128xbf16, #tpu.memory_space<vmem>>, %arg3: memref<4x32x128xbf16, #tpu.memory_space<vmem>>) attributes {dimension_semantics = [#tpu.dimension_semantics<parallel>], iteration_bounds = array<i64: 1>, scalar_prefetch = 0 : i64, scratch_operands = 0 : i64, tpu.core_type = #tpu.core_type<tc>, window_params = [{pipeline_mode = #tpu.pipeline_mode<synchronous>, transform_indices = @transform_0, window_bounds = array<i64: 4, 32, 128>}, {transform_indices = @transform_1, window_bounds = array<i64: 4, 128, 128>}, {transform_indices = @transform_2, window_bounds = array<i64: 4, 32, 128>}]} {
    %c0 = arith.constant 0 : index
    %c0_0 = arith.constant 0 : index
    %c0_1 = arith.constant 0 : index
    %0 = vector.load %arg1[%c0, %c0_0, %c0_1] : memref<4x32x128xbf16, #tpu.memory_space<vmem>>, vector<4x32x128xbf16>
    %c0_2 = arith.constant 0 : index
    %c0_3 = arith.constant 0 : index
    %c0_4 = arith.constant 0 : index
    %1 = vector.load %arg2[%c0_2, %c0_3, %c0_4] : memref<4x128x128xbf16, #tpu.memory_space<vmem>>, vector<4x128x128xbf16>
    "tpu.trace_start"() <{level = 10 : i32, message = "rnk,rkc->rnc"}> : () -> ()
    %cst = arith.constant dense<0.000000e+00> : vector<4x32x128xf32>
    %2 = tpu.matmul %0, %1, %cst {dimension_numbers = #tpu.dot_dimension_numbers<[2], [1], [1], [2], [0, 0, 0, 1, 1, 2], [0], [0]>} : vector<4x32x128xbf16>, vector<4x128x128xbf16>, vector<4x32x128xf32> -> vector<4x32x128xf32>
    "tpu.trace_stop"() : () -> ()
    %cst_5 = arith.constant dense<0.000000e+00> : vector<128xf32>
    %3 = vector.multi_reduction <add>, %2, %cst_5 [0, 1] : vector<4x32x128xf32> to vector<128xf32>
    %4 = vector.shape_cast %3 : vector<128xf32> to vector<1x1x128xf32>
    %5 = arith.mulf %2, %2 : vector<4x32x128xf32>
    %cst_6 = arith.constant dense<0.000000e+00> : vector<128xf32>
    %6 = vector.multi_reduction <add>, %5, %cst_6 [0, 1] : vector<4x32x128xf32> to vector<128xf32>
    %7 = vector.shape_cast %6 : vector<128xf32> to vector<1x1x128xf32>
    %cst_7 = arith.constant 7.812500e-03 : f32
    %8 = vector.broadcast %cst_7 : f32 to vector<1x1x128xf32>
    %9 = arith.mulf %4, %8 : vector<1x1x128xf32>
    %cst_8 = arith.constant 7.812500e-03 : f32
    %10 = vector.broadcast %cst_8 : f32 to vector<1x1x128xf32>
    %11 = arith.mulf %7, %10 : vector<1x1x128xf32>
    %12 = arith.mulf %9, %9 : vector<1x1x128xf32>
    %13 = arith.subf %11, %12 : vector<1x1x128xf32>
    %cst_9 = arith.constant 0.000000e+00 : f32
    %14 = vector.broadcast %cst_9 : f32 to vector<1x1x128xf32>
    %15 = arith.maximumf %13, %14 : vector<1x1x128xf32>
    %16 = vector.broadcast %9 : vector<1x1x128xf32> to vector<4x32x128xf32>
    %17 = arith.subf %2, %16 : vector<4x32x128xf32>
    %cst_10 = arith.constant 9.99999974E-6 : f32
    %18 = vector.broadcast %cst_10 : f32 to vector<1x1x128xf32>
    %19 = arith.addf %15, %18 : vector<1x1x128xf32>
    %20 = math.rsqrt %19 : vector<1x1x128xf32>
    %21 = vector.broadcast %20 : vector<1x1x128xf32> to vector<4x32x128xf32>
    %22 = arith.mulf %17, %21 : vector<4x32x128xf32>
    %cst_11 = arith.constant 0.000000e+00 : f32
    %23 = vector.broadcast %cst_11 : f32 to vector<4x32x128xf32>
    %24 = arith.maximumf %22, %23 : vector<4x32x128xf32>
    %25 = arith.truncf %24 : vector<4x32x128xf32> to vector<4x32x128xbf16>
    %c0_12 = arith.constant 0 : index
    %c0_13 = arith.constant 0 : index
    %c0_14 = arith.constant 0 : index
    %26 = vector.load %arg3[%c0_12, %c0_13, %c0_14] : memref<4x32x128xbf16, #tpu.memory_space<vmem>>, vector<4x32x128xbf16>
    tpu.vector_store %arg3[%c0_12, %c0_13, %c0_14], %25 {strides = array<i32>} : memref<4x32x128xbf16, #tpu.memory_space<vmem>>, vector<4x32x128xbf16>,
    return
  }
  func.func @transform_0(%arg0: i32) -> (i32, i32, i32) {
    %c0_i32 = arith.constant 0 : i32
    %c0_i32_0 = arith.constant 0 : i32
    %c0_i32_1 = arith.constant 0 : i32
    %c0_i32_2 = arith.constant 0 : i32
    return %c0_i32, %c0_i32_0, %c0_i32_1 : i32, i32, i32
  }
  func.func @transform_1(%arg0: i32) -> (i32, i32, i32) {
    %c0_i32 = arith.constant 0 : i32
    %c0_i32_0 = arith.constant 0 : i32
    %c0_i32_1 = arith.constant 0 : i32
    return %c0_i32, %c0_i32_0, %arg0 : i32, i32, i32
  }
  func.func @transform_2(%arg0: i32) -> (i32, i32, i32) {
    %c0_i32 = arith.constant 0 : i32
    %c0_i32_0 = arith.constant 0 : i32
    %c0_i32_1 = arith.constant 0 : i32
    return %c0_i32, %c0_i32_0, %arg0 : i32, i32, i32
  }
}

module attributes {stable_mosaic.version = 11 : i64} {
  func.func @kernel(%arg0: i32, %arg1: memref<4x128x128xbf16, #tpu.memory_space<vmem>>, %arg2: memref<4x128x128xbf16, #tpu.memory_space<vmem>>, %arg3: memref<4x128x128xbf16, #tpu.memory_space<vmem>>) attributes {dimension_semantics = [#tpu.dimension_semantics<parallel>], iteration_bounds = array<i64: 1>, scalar_prefetch = 0 : i64, scratch_operands = 0 : i64, tpu.core_type = #tpu.core_type<tc>, window_params = [{pipeline_mode = #tpu.pipeline_mode<synchronous>, transform_indices = @transform_0, window_bounds = array<i64: 4, 128, 128>}, {transform_indices = @transform_1, window_bounds = array<i64: 4, 128, 128>}, {transform_indices = @transform_2, window_bounds = array<i64: 4, 128, 128>}]} {
    %c0 = arith.constant 0 : index
    %c0_0 = arith.constant 0 : index
    %c0_1 = arith.constant 0 : index
    %0 = vector.load %arg1[%c0, %c0_0, %c0_1] : memref<4x128x128xbf16, #tpu.memory_space<vmem>>, vector<4x128x128xbf16>
    %c0_2 = arith.constant 0 : index
    %c0_3 = arith.constant 0 : index
    %c0_4 = arith.constant 0 : index
    %1 = vector.load %arg2[%c0_2, %c0_3, %c0_4] : memref<4x128x128xbf16, #tpu.memory_space<vmem>>, vector<4x128x128xbf16>
    "tpu.trace_start"() <{level = 10 : i32, message = "rnk,rkc->rnc"}> : () -> ()
    %cst = arith.constant dense<0.000000e+00> : vector<4x128x128xf32>
    %2 = tpu.matmul %0, %1, %cst {dimension_numbers = #tpu.dot_dimension_numbers<[2], [1], [1], [2], [0, 0, 0, 1, 1, 2], [0], [0]>} : vector<4x128x128xbf16>, vector<4x128x128xbf16>, vector<4x128x128xf32> -> vector<4x128x128xf32>
    "tpu.trace_stop"() : () -> ()
    %cst_5 = arith.constant dense<0.000000e+00> : vector<128xf32>
    %3 = vector.multi_reduction <add>, %2, %cst_5 [0, 1] : vector<4x128x128xf32> to vector<128xf32>
    %4 = vector.shape_cast %3 : vector<128xf32> to vector<1x1x128xf32>
    %5 = arith.mulf %2, %2 : vector<4x128x128xf32>
    %cst_6 = arith.constant dense<0.000000e+00> : vector<128xf32>
    %6 = vector.multi_reduction <add>, %5, %cst_6 [0, 1] : vector<4x128x128xf32> to vector<128xf32>
    %7 = vector.shape_cast %6 : vector<128xf32> to vector<1x1x128xf32>
    %cst_7 = arith.constant 0.001953125 : f32
    %8 = vector.broadcast %cst_7 : f32 to vector<1x1x128xf32>
    %9 = arith.mulf %4, %8 : vector<1x1x128xf32>
    %cst_8 = arith.constant 0.001953125 : f32
    %10 = vector.broadcast %cst_8 : f32 to vector<1x1x128xf32>
    %11 = arith.mulf %7, %10 : vector<1x1x128xf32>
    %12 = arith.mulf %9, %9 : vector<1x1x128xf32>
    %13 = arith.subf %11, %12 : vector<1x1x128xf32>
    %cst_9 = arith.constant 0.000000e+00 : f32
    %14 = vector.broadcast %cst_9 : f32 to vector<1x1x128xf32>
    %15 = arith.maximumf %13, %14 : vector<1x1x128xf32>
    %16 = vector.broadcast %9 : vector<1x1x128xf32> to vector<4x128x128xf32>
    %17 = arith.subf %2, %16 : vector<4x128x128xf32>
    %cst_10 = arith.constant 9.99999974E-6 : f32
    %18 = vector.broadcast %cst_10 : f32 to vector<1x1x128xf32>
    %19 = arith.addf %15, %18 : vector<1x1x128xf32>
    %20 = math.rsqrt %19 : vector<1x1x128xf32>
    %21 = vector.broadcast %20 : vector<1x1x128xf32> to vector<4x128x128xf32>
    %22 = arith.mulf %17, %21 : vector<4x128x128xf32>
    %cst_11 = arith.constant 0.000000e+00 : f32
    %23 = vector.broadcast %cst_11 : f32 to vector<4x128x128xf32>
    %24 = arith.maximumf %22, %23 : vector<4x128x128xf32>
    %25 = arith.truncf %24 : vector<4x128x128xf32> to vector<4x128x128xbf16>
    %c0_12 = arith.constant 0 : index
    %c0_13 = arith.constant 0 : index
    %c0_14 = arith.constant 0 : index
    %26 = vector.load %arg3[%c0_12, %c0_13, %c0_14] : memref<4x128x128xbf16, #tpu.memory_space<vmem>>, vector<4x128x128xbf16>
    tpu.vector_store %arg3[%c0_12, %c0_13, %c0_14], %25 {strides = array<i32>} : memref<4x128x128xbf16, #tpu.memory_space<vmem>>, vector<4x128x128xbf16>,
    return
  }
  func.func @transform_0(%arg0: i32) -> (i32, i32, i32) {
    %c0_i32 = arith.constant 0 : i32
    %c0_i32_0 = arith.constant 0 : i32
    %c0_i32_1 = arith.constant 0 : i32
    %c0_i32_2 = arith.constant 0 : i32
    return %c0_i32, %c0_i32_0, %c0_i32_1 : i32, i32, i32
  }
  func.func @transform_1(%arg0: i32) -> (i32, i32, i32) {
    %c0_i32 = arith.constant 0 : i32
    %c0_i32_0 = arith.constant 0 : i32
    %c0_i32_1 = arith.constant 0 : i32
    return %c0_i32, %c0_i32_0, %arg0 : i32, i32, i32
  }
  func.func @transform_2(%arg0: i32) -> (i32, i32, i32) {
    %c0_i32 = arith.constant 0 : i32
    %c0_i32_0 = arith.constant 0 : i32
    %c0_i32_1 = arith.constant 0 : i32
    return %c0_i32, %c0_i32_0, %arg0 : i32, i32, i32
  }
}

module attributes {stable_mosaic.version = 11 : i64} {
  func.func @kernel(%arg0: i32, %arg1: i32, %arg2: memref<1x256x128xbf16, #tpu.memory_space<vmem>>, %arg3: memref<1x128x128xbf16, #tpu.memory_space<vmem>>, %arg4: memref<1x256x128xf32, #tpu.memory_space<vmem>>) attributes {dimension_semantics = [#tpu.dimension_semantics<parallel>, #tpu.dimension_semantics<parallel>], iteration_bounds = array<i64: 4, 2>, scalar_prefetch = 0 : i64, scratch_operands = 0 : i64, tpu.core_type = #tpu.core_type<tc>, window_params = [{transform_indices = @transform_0, window_bounds = array<i64: 1, 256, 128>}, {transform_indices = @transform_1, window_bounds = array<i64: 1, 128, 128>}, {transform_indices = @transform_2, window_bounds = array<i64: 1, 256, 128>}]} {
    %c0 = arith.constant 0 : index
    %c0_0 = arith.constant 0 : index
    %c0_1 = arith.constant 0 : index
    %0 = vector.load %arg2[%c0, %c0_0, %c0_1] : memref<1x256x128xbf16, #tpu.memory_space<vmem>>, vector<1x256x128xbf16>
    %1 = vector.shape_cast %0 : vector<1x256x128xbf16> to vector<256x128xbf16>
    %c0_2 = arith.constant 0 : index
    %c0_3 = arith.constant 0 : index
    %c0_4 = arith.constant 0 : index
    %2 = vector.load %arg3[%c0_2, %c0_3, %c0_4] : memref<1x128x128xbf16, #tpu.memory_space<vmem>>, vector<1x128x128xbf16>
    %3 = vector.shape_cast %2 : vector<1x128x128xbf16> to vector<128x128xbf16>
    %cst = arith.constant dense<0.000000e+00> : vector<256x128xf32>
    %4 = tpu.matmul %1, %3, %cst {dimension_numbers = #tpu.dot_dimension_numbers<[1], [0], [0], [1], [0, 0, 1, 1], [], []>} : vector<256x128xbf16>, vector<128x128xbf16>, vector<256x128xf32> -> vector<256x128xf32>
    %5 = math.tanh %4 : vector<256x128xf32>
    %c0_5 = arith.constant 0 : index
    %c0_6 = arith.constant 0 : index
    %c0_7 = arith.constant 0 : index
    %6 = vector.load %arg4[%c0_5, %c0_6, %c0_7] : memref<1x256x128xf32, #tpu.memory_space<vmem>>, vector<1x256x128xf32>
    %7 = vector.shape_cast %6 : vector<1x256x128xf32> to vector<256x128xf32>
    %8 = vector.shape_cast %5 : vector<256x128xf32> to vector<1x256x128xf32>
    tpu.vector_store %arg4[%c0_5, %c0_6, %c0_7], %8 {strides = array<i32>} : memref<1x256x128xf32, #tpu.memory_space<vmem>>, vector<1x256x128xf32>,
    return
  }
  func.func @transform_0(%arg0: i32, %arg1: i32) -> (i32, i32, i32) {
    %c0_i32 = arith.constant 0 : i32
    %c0_i32_0 = arith.constant 0 : i32
    return %arg0, %arg1, %c0_i32 : i32, i32, i32
  }
  func.func @transform_1(%arg0: i32, %arg1: i32) -> (i32, i32, i32) {
    %c0_i32 = arith.constant 0 : i32
    %c0_i32_0 = arith.constant 0 : i32
    %c0_i32_1 = arith.constant 0 : i32
    return %arg0, %c0_i32, %c0_i32_0 : i32, i32, i32
  }
  func.func @transform_2(%arg0: i32, %arg1: i32) -> (i32, i32, i32) {
    %c0_i32 = arith.constant 0 : i32
    %c0_i32_0 = arith.constant 0 : i32
    return %arg0, %arg1, %c0_i32 : i32, i32, i32
  }
}

</mosaic_0001>

<llo_original>
// kernel: _lambda_.5
$region0: #{_lambda_.5}
  #allocation0 [shape = 'u32[]', space=smem, size = 0x4, offset = 0x4, fixed_abs, tag = 'smem constant byte address 0x4 - core index']
  #allocation1 [shape = 'u32[72,128]{1,0:T(1,128)}', space=vmem, size = 0x9000, scoped, tag = 'internal scratch']
  %s0 = inlined_call_operand.vmem [shape: bf16[4,32,128], index: 0, kind: input, shape index: {}]
  %s1 = inlined_call_operand.hbm [shape: bf16[4,128,128], index: 1, kind: input, shape index: {}]
  %s2 = inlined_call_operand.vmem [shape: bf16[4,32,128], index: 2, kind: output, shape index: {}]
  %s3 = sld [smem:[#allocation0]]
  $region22: #{_lambda_.5} parent=0
    _
  %s5 = ssub.s32 1, %s3
  %s6 = scalar_select 0, %s5, %s3
  $region1: #{_lambda_.5} parent=0
    #allocation2 [shape = 'u8[131072]{0}', space=vmem, size = 0x20000, scoped, tag = 'input window, operand 1, single buffered']
    #allocation3 [shape = 's32[1]{0}', space=sflag, size = 0x4, scoped, tag = 'scoped memory for _lambda_.5']
    %7 = vsyncpa [#allocation3], 0
    // Predicated region
    $region2: #{_lambda_.5} parent=1 // pred_check
      _
    $region3: #{_lambda_.5} parent=1 // pred_check_branch
      %9 = sbr.rel (0) target = $region5
    $region4: #{_lambda_.5} parent=1 // pred_region
      _
    $region5: #{_lambda_.5} parent=1 // pred_fallthru
      _
    // Predicated region
    $region6: #{_lambda_.5} parent=1 // pred_check
      _
    $region7: #{_lambda_.5} parent=1 // pred_check_branch
      %11 = sbr.rel (0) target = $region9
    $region8: #{_lambda_.5} parent=1 // pred_region
      %13 = vsyncadd [#allocation3], 0
      %s14 = sshll.u32 %s1, 4
      %s15 = int_to_ptr.hbm [resolvable:$true] %s14
      %s16 = sshll.u32 [#allocation2], 4
      %s17 = int_to_ptr.vmem [resolvable:$true] %s16
      %22 = dma.hbm_to_vmem [thread:$0]  %s15, 4096, %s17, [#allocation3], 64, 64, 4
    $region9: #{_lambda_.5} parent=1 // pred_fallthru
      _
    // Predicated region
    $region10: #{_lambda_.5} parent=1 // pred_check
      _
    $region11: #{_lambda_.5} parent=1 // pred_check_branch
      %24 = sbr.rel (0) target = $region13
    $region12: #{_lambda_.5} parent=1 // pred_region
      %26 = dma.done [#allocation3], 4096
    $region13: #{_lambda_.5} parent=1 // pred_fallthru
      _
    %v27 = vld [vmem:[%s0] sm:$0xf]
    %v28 = vld [vmem:[%s0 + $0x4] sm:$0xf]
    %v29 = vld [vmem:[%s0 + $0x8] sm:$0xf]
    %v30 = vld [vmem:[%s0 + $0xc] sm:$0xf]
    %v31 = vld [vmem:[%s0 + $0x10] sm:$0xf]
    %v32 = vld [vmem:[%s0 + $0x14] sm:$0xf]
    %v33 = vld [vmem:[%s0 + $0x18] sm:$0xf]
    %v34 = vld [vmem:[%s0 + $0x1c] sm:$0xf]
    %v35 = vld [vmem:[%s0 + $0x20] sm:$0xf]
    %v36 = vld [vmem:[%s0 + $0x24] sm:$0xf]
    %v37 = vld [vmem:[%s0 + $0x28] sm:$0xf]
    %v38 = vld [vmem:[%s0 + $0x2c] sm:$0xf]
    %v39 = vld [vmem:[%s0 + $0x30] sm:$0xf]
    %v40 = vld [vmem:[%s0 + $0x34] sm:$0xf]
    %v41 = vld [vmem:[%s0 + $0x38] sm:$0xf]
    %v42 = vld [vmem:[%s0 + $0x3c] sm:$0xf]
    %v43 = vld [vmem:[#allocation2] sm:$0xf]
    %v44 = vld [vmem:[#allocation2 + $0x4] sm:$0xf]
    %v45 = vld [vmem:[#allocation2 + $0x8] sm:$0xf]
    %v46 = vld [vmem:[#allocation2 + $0xc] sm:$0xf]
    %v47 = vld [vmem:[#allocation2 + $0x10] sm:$0xf]
    %v48 = vld [vmem:[#allocation2 + $0x14] sm:$0xf]
    %v49 = vld [vmem:[#allocation2 + $0x18] sm:$0xf]
    %v50 = vld [vmem:[#allocation2 + $0x1c] sm:$0xf]
    %v51 = vld [vmem:[#allocation2 + $0x20] sm:$0xf]
    %v52 = vld [vmem:[#allocation2 + $0x24] sm:$0xf]
    %v53 = vld [vmem:[#allocation2 + $0x28] sm:$0xf]
    %v54 = vld [vmem:[#allocation2 + $0x2c] sm:$0xf]
    %v55 = vld [vmem:[#allocation2 + $0x30] sm:$0xf]
    %v56 = vld [vmem:[#allocation2 + $0x34] sm:$0xf]
    %v57 = vld [vmem:[#allocation2 + $0x38] sm:$0xf]
    %v58 = vld [vmem:[#allocation2 + $0x3c] sm:$0xf]
    %v59 = vld [vmem:[#allocation2 + $0x40] sm:$0xf]
    %v60 = vld [vmem:[#allocation2 + $0x44] sm:$0xf]
    %v61 = vld [vmem:[#allocation2 + $0x48] sm:$0xf]
    %v62 = vld [vmem:[#allocation2 + $0x4c] sm:$0xf]
    %v63 = vld [vmem:[#allocation2 + $0x50] sm:$0xf]
    %v64 = vld [vmem:[#allocation2 + $0x54] sm:$0xf]
    %v65 = vld [vmem:[#allocation2 + $0x58] sm:$0xf]
    %v66 = vld [vmem:[#allocation2 + $0x5c] sm:$0xf]
    %v67 = vld [vmem:[#allocation2 + $0x60] sm:$0xf]
    %v68 = vld [vmem:[#allocation2 + $0x64] sm:$0xf]
    %v69 = vld [vmem:[#allocation2 + $0x68] sm:$0xf]
    %v70 = vld [vmem:[#allocation2 + $0x6c] sm:$0xf]
    %v71 = vld [vmem:[#allocation2 + $0x70] sm:$0xf]
    %v72 = vld [vmem:[#allocation2 + $0x74] sm:$0xf]
    %v73 = vld [vmem:[#allocation2 + $0x78] sm:$0xf]
    %v74 = vld [vmem:[#allocation2 + $0x7c] sm:$0xf]
    %v75 = vld [vmem:[#allocation2 + $0x80] sm:$0xf]
    %v76 = vld [vmem:[#allocation2 + $0x84] sm:$0xf]
    %v77 = vld [vmem:[#allocation2 + $0x88] sm:$0xf]
    %v78 = vld [vmem:[#allocation2 + $0x8c] sm:$0xf]
    %v79 = vld [vmem:[#allocation2 + $0x90] sm:$0xf]
    %v80 = vld [vmem:[#allocation2 + $0x94] sm:$0xf]
    %v81 = vld [vmem:[#allocation2 + $0x98] sm:$0xf]
    %v82 = vld [vmem:[#allocation2 + $0x9c] sm:$0xf]
    %v83 = vld [vmem:[#allocation2 + $0xa0] sm:$0xf]
    %v84 = vld [vmem:[#allocation2 + $0xa4] sm:$0xf]
    %v85 = vld [vmem:[#allocation2 + $0xa8] sm:$0xf]
    %v86 = vld [vmem:[#allocation2 + $0xac] sm:$0xf]
    %v87 = vld [vmem:[#allocation2 + $0xb0] sm:$0xf]
    %v88 = vld [vmem:[#allocation2 + $0xb4] sm:$0xf]
    %v89 = vld [vmem:[#allocation2 + $0xb8] sm:$0xf]
    %v90 = vld [vmem:[#allocation2 + $0xbc] sm:$0xf]
    %v91 = vld [vmem:[#allocation2 + $0xc0] sm:$0xf]
    %v92 = vld [vmem:[#allocation2 + $0xc4] sm:$0xf]
    %v93 = vld [vmem:[#allocation2 + $0xc8] sm:$0xf]
    %v94 = vld [vmem:[#allocation2 + $0xcc] sm:$0xf]
    %v95 = vld [vmem:[#allocation2 + $0xd0] sm:$0xf]
    %v96 = vld [vmem:[#allocation2 + $0xd4] sm:$0xf]
    %v97 = vld [vmem:[#allocation2 + $0xd8] sm:$0xf]
    %v98 = vld [vmem:[#allocation2 + $0xdc] sm:$0xf]
    %v99 = vld [vmem:[#allocation2 + $0xe0] sm:$0xf]
    %v100 = vld [vmem:[#allocation2 + $0xe4] sm:$0xf]
    %v101 = vld [vmem:[#allocation2 + $0xe8] sm:$0xf]
    %v102 = vld [vmem:[#allocation2 + $0xec] sm:$0xf]
    %v103 = vld [vmem:[#allocation2 + $0xf0] sm:$0xf]
    %v104 = vld [vmem:[#allocation2 + $0xf4] sm:$0xf]
    %v105 = vld [vmem:[#allocation2 + $0xf8] sm:$0xf]
    %v106 = vld [vmem:[#allocation2 + $0xfc] sm:$0xf]
    %v111 = vunpack.c.l.b16 %v27
    %v112 = vunpack.c.l.b16 %v28
    %v113 = vunpack.c.l.b16 %v29
    %v114 = vunpack.c.l.b16 %v30
    %v115 = vpack.c.b16 %v112, %v111
    %v116 = vpack.c.b16 %v114, %v113
    %v135 = vunpack.c.l.b16 %v43
    %v136 = vunpack.c.l.b16 %v44
    %v137 = vunpack.c.l.b16 %v45
    %v138 = vunpack.c.l.b16 %v46
    %v139 = vunpack.c.l.b16 %v47
    %v140 = vunpack.c.l.b16 %v48
    %v141 = vunpack.c.l.b16 %v49
    %v142 = vunpack.c.l.b16 %v50
    %v143 = vunpack.c.l.b16 %v51
    %v144 = vunpack.c.l.b16 %v52
    %v145 = vunpack.c.l.b16 %v53
    %v146 = vunpack.c.l.b16 %v54
    %v147 = vunpack.c.l.b16 %v55
    %v148 = vunpack.c.l.b16 %v56
    %v149 = vunpack.c.l.b16 %v57
    %v150 = vunpack.c.l.b16 %v58
    %v151 = vpack.c.b16 %v136, %v135
    %v152 = vpack.c.b16 %v138, %v137
    %v153 = vpack.c.b16 %v140, %v139
    %v154 = vpack.c.b16 %v142, %v141
    %v155 = vpack.c.b16 %v144, %v143
    %v156 = vpack.c.b16 %v146, %v145
    %v157 = vpack.c.b16 %v148, %v147
    %v158 = vpack.c.b16 %v150, %v149
    %167 = vmatpush.bf16.msra.mxu0 %v158
    %168 = vmatpush.bf16.msra.mxu0 %v157
    %169 = vmatpush.bf16.msra.mxu0 %v156
    %170 = vmatpush.bf16.msra.mxu0 %v155
    %171 = vmatpush.bf16.msra.mxu0 %v154
    %172 = vmatpush.bf16.msra.mxu0 %v153
    %173 = vmatpush.bf16.msra.mxu0 %v152
    %174 = vmatpush.bf16.msra.mxu0 %v151
    %175 = vmatmul.bf16.gmra.mxu0 %v115
    %v176 = vpop.f32.mrf.mxu0
    %v177 = vadd.f32 0.0, %v176
    %v178 = vpop.f32.mrf.mxu0
    %v179 = vadd.f32 0.0, %v178
    %180 = vmatmul.bf16.gmra.mxu0 %v116
    %v181 = vpop.f32.mrf.mxu0
    %v182 = vadd.f32 0.0, %v181
    %v183 = vpop.f32.mrf.mxu0
    %v184 = vadd.f32 0.0, %v183
    %185 = vdwg.mxu0
    %v190 = vunpack.c.l.b16 %v31
    %v191 = vunpack.c.l.b16 %v32
    %v192 = vunpack.c.l.b16 %v33
    %v193 = vunpack.c.l.b16 %v34
    %v194 = vpack.c.b16 %v191, %v190
    %v195 = vpack.c.b16 %v193, %v192
    %v214 = vunpack.c.l.b16 %v59
    %v215 = vunpack.c.l.b16 %v60
    %v216 = vunpack.c.l.b16 %v61
    %v217 = vunpack.c.l.b16 %v62
    %v218 = vunpack.c.l.b16 %v63
    %v219 = vunpack.c.l.b16 %v64
    %v220 = vunpack.c.l.b16 %v65
    %v221 = vunpack.c.l.b16 %v66
    %v222 = vunpack.c.l.b16 %v67
    %v223 = vunpack.c.l.b16 %v68
    %v224 = vunpack.c.l.b16 %v69
    %v225 = vunpack.c.l.b16 %v70
    %v226 = vunpack.c.l.b16 %v71
    %v227 = vunpack.c.l.b16 %v72
    %v228 = vunpack.c.l.b16 %v73
    %v229 = vunpack.c.l.b16 %v74
    %v230 = vpack.c.b16 %v215, %v214
    %v231 = vpack.c.b16 %v217, %v216
    %v232 = vpack.c.b16 %v219, %v218
    %v233 = vpack.c.b16 %v221, %v220
    %v234 = vpack.c.b16 %v223, %v222
    %v235 = vpack.c.b16 %v225, %v224
    %v236 = vpack.c.b16 %v227, %v226
    %v237 = vpack.c.b16 %v229, %v228
    %246 = vmatpush.bf16.msra.mxu0 %v237
    %247 = vmatpush.bf16.msra.mxu0 %v236
    %248 = vmatpush.bf16.msra.mxu0 %v235
    %249 = vmatpush.bf16.msra.mxu0 %v234
    %250 = vmatpush.bf16.msra.mxu0 %v233
    %251 = vmatpush.bf16.msra.mxu0 %v232
    %252 = vmatpush.bf16.msra.mxu0 %v231
    %253 = vmatpush.bf16.msra.mxu0 %v230
    %254 = vmatmul.bf16.gmra.mxu0 %v194
    %v255 = vpop.f32.mrf.mxu0
    %v256 = vadd.f32 0.0, %v255
    %v257 = vpop.f32.mrf.mxu0
    %v258 = vadd.f32 0.0, %v257
    %259 = vmatmul.bf16.gmra.mxu0 %v195
    %v260 = vpop.f32.mrf.mxu0
    %v261 = vadd.f32 0.0, %v260
    %v262 = vpop.f32.mrf.mxu0
    %v263 = vadd.f32 0.0, %v262
    %264 = vdwg.mxu0
    %v269 = vunpack.c.l.b16 %v35
    %v270 = vunpack.c.l.b16 %v36
    %v271 = vunpack.c.l.b16 %v37
    %v272 = vunpack.c.l.b16 %v38
    %v273 = vpack.c.b16 %v270, %v269
    %v274 = vpack.c.b16 %v272, %v271
    %v293 = vunpack.c.l.b16 %v75
    %v294 = vunpack.c.l.b16 %v76
    %v295 = vunpack.c.l.b16 %v77
    %v296 = vunpack.c.l.b16 %v78
    %v297 = vunpack.c.l.b16 %v79
    %v298 = vunpack.c.l.b16 %v80
    %v299 = vunpack.c.l.b16 %v81
    %v300 = vunpack.c.l.b16 %v82
    %v301 = vunpack.c.l.b16 %v83
    %v302 = vunpack.c.l.b16 %v84
    %v303 = vunpack.c.l.b16 %v85
    %v304 = vunpack.c.l.b16 %v86
    %v305 = vunpack.c.l.b16 %v87
    %v306 = vunpack.c.l.b16 %v88
    %v307 = vunpack.c.l.b16 %v89
    %v308 = vunpack.c.l.b16 %v90
    %v309 = vpack.c.b16 %v294, %v293
    %v310 = vpack.c.b16 %v296, %v295
    %v311 = vpack.c.b16 %v298, %v297
    %v312 = vpack.c.b16 %v300, %v299
    %v313 = vpack.c.b16 %v302, %v301
    %v314 = vpack.c.b16 %v304, %v303
    %v315 = vpack.c.b16 %v306, %v305
    %v316 = vpack.c.b16 %v308, %v307
    %325 = vmatpush.bf16.msra.mxu0 %v316
    %326 = vmatpush.bf16.msra.mxu0 %v315
    %327 = vmatpush.bf16.msra.mxu0 %v314
    %328 = vmatpush.bf16.msra.mxu0 %v313
    %329 = vmatpush.bf16.msra.mxu0 %v312
    %330 = vmatpush.bf16.msra.mxu0 %v311
    %331 = vmatpush.bf16.msra.mxu0 %v310
    %332 = vmatpush.bf16.msra.mxu0 %v309
    %333 = vmatmul.bf16.gmra.mxu0 %v273
    %v334 = vpop.f32.mrf.mxu0
    %v335 = vadd.f32 0.0, %v334
    %v336 = vpop.f32.mrf.mxu0
    %v337 = vadd.f32 0.0, %v336
    %338 = vmatmul.bf16.gmra.mxu0 %v274
    %v339 = vpop.f32.mrf.mxu0
    %v340 = vadd.f32 0.0, %v339
    %v341 = vpop.f32.mrf.mxu0
    %v342 = vadd.f32 0.0, %v341
    %343 = vdwg.mxu0
    %v348 = vunpack.c.l.b16 %v39
    %v349 = vunpack.c.l.b16 %v40
    %v350 = vunpack.c.l.b16 %v41
    %v351 = vunpack.c.l.b16 %v42
    %v352 = vpack.c.b16 %v349, %v348
    %v353 = vpack.c.b16 %v351, %v350
    %v372 = vunpack.c.l.b16 %v91
    %v373 = vunpack.c.l.b16 %v92
    %v374 = vunpack.c.l.b16 %v93
    %v375 = vunpack.c.l.b16 %v94
    %v376 = vunpack.c.l.b16 %v95
    %v377 = vunpack.c.l.b16 %v96
    %v378 = vunpack.c.l.b16 %v97
    %v379 = vunpack.c.l.b16 %v98
    %v380 = vunpack.c.l.b16 %v99
    %v381 = vunpack.c.l.b16 %v100
    %v382 = vunpack.c.l.b16 %v101
    %v383 = vunpack.c.l.b16 %v102
    %v384 = vunpack.c.l.b16 %v103
    %v385 = vunpack.c.l.b16 %v104
    %v386 = vunpack.c.l.b16 %v105
    %v387 = vunpack.c.l.b16 %v106
    %v388 = vpack.c.b16 %v373, %v372
    %v389 = vpack.c.b16 %v375, %v374
    %v390 = vpack.c.b16 %v377, %v376
    %v391 = vpack.c.b16 %v379, %v378
    %v392 = vpack.c.b16 %v381, %v380
    %v393 = vpack.c.b16 %v383, %v382
    %v394 = vpack.c.b16 %v385, %v384
    %v395 = vpack.c.b16 %v387, %v386
    %404 = vmatpush.bf16.msra.mxu0 %v395
    %405 = vmatpush.bf16.msra.mxu0 %v394
    %406 = vmatpush.bf16.msra.mxu0 %v393
    %407 = vmatpush.bf16.msra.mxu0 %v392
    %408 = vmatpush.bf16.msra.mxu0 %v391
    %409 = vmatpush.bf16.msra.mxu0 %v390
    %410 = vmatpush.bf16.msra.mxu0 %v389
    %411 = vmatpush.bf16.msra.mxu0 %v388
    %412 = vmatmul.bf16.gmra.mxu0 %v352
    %v413 = vpop.f32.mrf.mxu0
    %v414 = vadd.f32 0.0, %v413
    %v415 = vpop.f32.mrf.mxu0
    %v416 = vadd.f32 0.0, %v415
    %417 = vmatmul.bf16.gmra.mxu0 %v353
    %v418 = vpop.f32.mrf.mxu0
    %v419 = vadd.f32 0.0, %v418
    %v420 = vpop.f32.mrf.mxu0
    %v421 = vadd.f32 0.0, %v420
    %422 = vdwg.mxu0
    %v423 = vadd.f32 %v177, %v179
    %v424 = vadd.f32 %v423, %v182
    %v425 = vadd.f32 %v424, %v184
    %v426 = vadd.f32 %v425, %v256
    %v427 = vadd.f32 %v426, %v258
    %v428 = vadd.f32 %v427, %v261
    %v429 = vadd.f32 %v428, %v263
    %v430 = vadd.f32 %v429, %v335
    %v431 = vadd.f32 %v430, %v337
    %v432 = vadd.f32 %v431, %v340
    %v433 = vadd.f32 %v432, %v342
    %v434 = vadd.f32 %v433, %v414
    %v435 = vadd.f32 %v434, %v416
    %v436 = vadd.f32 %v435, %v419
    %v437 = vadd.f32 %v436, %v421
    %v438 = vrot.slane %v437, 4
    %v439 = vadd.f32 %v437, %v438
    %v440 = vrot.slane %v439, 2
    %v441 = vadd.f32 %v439, %v440
    %v442 = vrot.slane %v441, 1
    %v443 = vadd.f32 %v441, %v442
    %v444 = vmul.f32 %v177, %v177
    %v445 = vmul.f32 %v179, %v179
    %v446 = vmul.f32 %v182, %v182
    %v447 = vmul.f32 %v184, %v184
    %v448 = vmul.f32 %v256, %v256
    %v449 = vmul.f32 %v258, %v258
    %v450 = vmul.f32 %v261, %v261
    %v451 = vmul.f32 %v263, %v263
    %v452 = vmul.f32 %v335, %v335
    %v453 = vmul.f32 %v337, %v337
    %v454 = vmul.f32 %v340, %v340
    %v455 = vmul.f32 %v342, %v342
    %v456 = vmul.f32 %v414, %v414
    %v457 = vmul.f32 %v416, %v416
    %v458 = vmul.f32 %v419, %v419
    %v459 = vmul.f32 %v421, %v421
    %v460 = vadd.f32 %v444, %v445
    %v461 = vadd.f32 %v460, %v446
    %v462 = vadd.f32 %v461, %v447
    %v463 = vadd.f32 %v462, %v448
    %v464 = vadd.f32 %v463, %v449
    %v465 = vadd.f32 %v464, %v450
    %v466 = vadd.f32 %v465, %v451
    %v467 = vadd.f32 %v466, %v452
    %v468 = vadd.f32 %v467, %v453
    %v469 = vadd.f32 %v468, %v454
    %v470 = vadd.f32 %v469, %v455
    %v471 = vadd.f32 %v470, %v456
    %v472 = vadd.f32 %v471, %v457
    %v473 = vadd.f32 %v472, %v458
    %v474 = vadd.f32 %v473, %v459
    %v475 = vrot.slane %v474, 4
    %v476 = vadd.f32 %v474, %v475
    %v477 = vrot.slane %v476, 2
    %v478 = vadd.f32 %v476, %v477
    %v479 = vrot.slane %v478, 1
    %v480 = vadd.f32 %v478, %v479
    %v481 = vmul.f32 %v443, 0.0078125
    %v482 = vmul.f32 %v480, 0.0078125
    %v483 = vmul.f32 %v481, %v481
    %v484 = vsub.f32 %v482, %v483
    %v485 = vmax.f32 %v484, 0.0
    %v486 = vsub.f32 %v177, %v481
    %v487 = vsub.f32 %v179, %v481
    %v488 = vsub.f32 %v182, %v481
    %v489 = vsub.f32 %v184, %v481
    %v490 = vsub.f32 %v256, %v481
    %v491 = vsub.f32 %v258, %v481
    %v492 = vsub.f32 %v261, %v481
    %v493 = vsub.f32 %v263, %v481
    %v494 = vsub.f32 %v335, %v481
    %v495 = vsub.f32 %v337, %v481
    %v496 = vsub.f32 %v340, %v481
    %v497 = vsub.f32 %v342, %v481
    %v498 = vsub.f32 %v414, %v481
    %v499 = vsub.f32 %v416, %v481
    %v500 = vsub.f32 %v419, %v481
    %v501 = vsub.f32 %v421, %v481
    %v502 = vadd.f32 %v485, 1e-05
    %v503 = vrsqrt.pop %v502
    %v504 = vmul.f32 %v503, %v502
    %v505 = vmul.f32 %v504, %v503
    %v506 = vmul.f32 0.5, %v505
    %v507 = vsub.f32 1.5, %v506
    %v508 = vmul.f32 %v503, %v507
    %vm509 = vweird.f32 %v502
    %vm510 = vweird.f32 %v503
    %vm511 = vmor %vm509, %vm510
    %v512 = vsel %vm511, %v503, %v508
    %v513 = vmul.f32 %v486, %v512
    %v514 = vmul.f32 %v487, %v512
    %v515 = vmul.f32 %v488, %v512
    %v516 = vmul.f32 %v489, %v512
    %v517 = vmul.f32 %v490, %v512
    %v518 = vmul.f32 %v491, %v512
    %v519 = vmul.f32 %v492, %v512
    %v520 = vmul.f32 %v493, %v512
    %v521 = vmul.f32 %v494, %v512
    %v522 = vmul.f32 %v495, %v512
    %v523 = vmul.f32 %v496, %v512
    %v524 = vmul.f32 %v497, %v512
    %v525 = vmul.f32 %v498, %v512
    %v526 = vmul.f32 %v499, %v512
    %v527 = vmul.f32 %v500, %v512
    %v528 = vmul.f32 %v501, %v512
    %v529 = vmax.f32 %v513, 0.0
    %v530 = vmax.f32 %v514, 0.0
    %v531 = vmax.f32 %v515, 0.0
    %v532 = vmax.f32 %v516, 0.0
    %v533 = vmax.f32 %v517, 0.0
    %v534 = vmax.f32 %v518, 0.0
    %v535 = vmax.f32 %v519, 0.0
    %v536 = vmax.f32 %v520, 0.0
    %v537 = vmax.f32 %v521, 0.0
    %v538 = vmax.f32 %v522, 0.0
    %v539 = vmax.f32 %v523, 0.0
    %v540 = vmax.f32 %v524, 0.0
    %v541 = vmax.f32 %v525, 0.0
    %v542 = vmax.f32 %v526, 0.0
    %v543 = vmax.f32 %v527, 0.0
    %v544 = vmax.f32 %v528, 0.0
    %v545 = vpack.c.bf16 %v529, %v529
    %v546 = vpack.c.bf16 %v530, %v530
    %v547 = vpack.c.bf16 %v531, %v531
    %v548 = vpack.c.bf16 %v532, %v532
    %v549 = vpack.c.bf16 %v533, %v533
    %v550 = vpack.c.bf16 %v534, %v534
    %v551 = vpack.c.bf16 %v535, %v535
    %v552 = vpack.c.bf16 %v536, %v536
    %v553 = vpack.c.bf16 %v537, %v537
    %v554 = vpack.c.bf16 %v538, %v538
    %v555 = vpack.c.bf16 %v539, %v539
    %v556 = vpack.c.bf16 %v540, %v540
    %v557 = vpack.c.bf16 %v541, %v541
    %v558 = vpack.c.bf16 %v542, %v542
    %v559 = vpack.c.bf16 %v543, %v543
    %v560 = vpack.c.bf16 %v544, %v544
    %561 = vst [vmem:[%s2] sm:$0xf] %v545
    %562 = vst [vmem:[%s2 + $0x4] sm:$0xf] %v546
    %563 = vst [vmem:[%s2 + $0x8] sm:$0xf] %v547
    %564 = vst [vmem:[%s2 + $0xc] sm:$0xf] %v548
    %565 = vst [vmem:[%s2 + $0x10] sm:$0xf] %v549
    %566 = vst [vmem:[%s2 + $0x14] sm:$0xf] %v550
    %567 = vst [vmem:[%s2 + $0x18] sm:$0xf] %v551
    %568 = vst [vmem:[%s2 + $0x1c] sm:$0xf] %v552
    %569 = vst [vmem:[%s2 + $0x20] sm:$0xf] %v553
    %570 = vst [vmem:[%s2 + $0x24] sm:$0xf] %v554
    %571 = vst [vmem:[%s2 + $0x28] sm:$0xf] %v555
    %572 = vst [vmem:[%s2 + $0x2c] sm:$0xf] %v556
    %573 = vst [vmem:[%s2 + $0x30] sm:$0xf] %v557
    %574 = vst [vmem:[%s2 + $0x34] sm:$0xf] %v558
    %575 = vst [vmem:[%s2 + $0x38] sm:$0xf] %v559
    %576 = vst [vmem:[%s2 + $0x3c] sm:$0xf] %v560
    // Predicated region
    $region14: #{_lambda_.5} parent=1 // pred_check
      _
    $region15: #{_lambda_.5} parent=1 // pred_check_branch
      %578 = sbr.rel (0) target = $region17
    $region16: #{_lambda_.5} parent=1 // pred_region
      _
    $region17: #{_lambda_.5} parent=1 // pred_fallthru
      _
    // Predicated region
    $region18: #{_lambda_.5} parent=1 // pred_check
      _
    $region19: #{_lambda_.5} parent=1 // pred_check_branch
      %580 = sbr.rel (0) target = $region21
    $region20: #{_lambda_.5} parent=1 // pred_region
      _
    $region21: #{_lambda_.5} parent=1 // pred_fallthru
      _
    %581 = vsyncpa [#allocation3], 1

// kernel: _lambda_.4
$region0: #{_lambda_.4}
  #allocation0 [shape = 'u32[]', space=smem, size = 0x4, offset = 0x4, fixed_abs, tag = 'smem constant byte address 0x4 - core index']
  #allocation1 [shape = 'u32[72,128]{1,0:T(1,128)}', space=vmem, size = 0x9000, scoped, tag = 'internal scratch']
  %s0 = inlined_call_operand.vmem [shape: bf16[16,128], index: 0, kind: input, shape index: {}]
  %s1 = inlined_call_operand.hbm [shape: bf16[16,128,128], index: 1, kind: input, shape index: {}]
  %s2 = inlined_call_operand.vmem [shape: bf16[16,16,128], index: 2, kind: output, shape index: {}]
  %s3 = sld [smem:[#allocation0]]
  $region22: #{_lambda_.4} parent=0
    _
  %s5 = ssub.s32 1, %s3
  %s6 = scalar_select 0, %s5, %s3
  $region1: #{_lambda_.4} parent=0
    #allocation2 [shape = 'u8[524288]{0}', space=vmem, size = 0x80000, scoped, tag = 'input window, operand 1, single buffered']
    #allocation3 [shape = 's32[1]{0}', space=sflag, size = 0x4, scoped, tag = 'scoped memory for _lambda_.4']
    %7 = vsyncpa [#allocation3], 0
    // Predicated region
    $region2: #{_lambda_.4} parent=1 // pred_check
      _
    $region3: #{_lambda_.4} parent=1 // pred_check_branch
      %9 = sbr.rel (0) target = $region5
    $region4: #{_lambda_.4} parent=1 // pred_region
      _
    $region5: #{_lambda_.4} parent=1 // pred_fallthru
      _
    // Predicated region
    $region6: #{_lambda_.4} parent=1 // pred_check
      _
    $region7: #{_lambda_.4} parent=1 // pred_check_branch
      %11 = sbr.rel (0) target = $region9
    $region8: #{_lambda_.4} parent=1 // pred_region
      %13 = vsyncadd [#allocation3], 0
      %s14 = sshll.u32 %s1, 4
      %s15 = int_to_ptr.hbm [resolvable:$true] %s14
      %s16 = sshll.u32 [#allocation2], 4
      %s17 = int_to_ptr.vmem [resolvable:$true] %s16
      %22 = dma.hbm_to_vmem [thread:$0]  %s15, 16384, %s17, [#allocation3], 64, 64, 4
    $region9: #{_lambda_.4} parent=1 // pred_fallthru
      _
    // Predicated region
    $region10: #{_lambda_.4} parent=1 // pred_check
      _
    $region11: #{_lambda_.4} parent=1 // pred_check_branch
      %24 = sbr.rel (0) target = $region13
    $region12: #{_lambda_.4} parent=1 // pred_region
      %26 = dma.done [#allocation3], 16384
    $region13: #{_lambda_.4} parent=1 // pred_fallthru
      _
    %v27 = vld [vmem:[%s0] sm:$0xf]
    %v28 = vld [vmem:[%s0 + $0x4] sm:$0xf]
    %v29 = vld [vmem:[#allocation2] sm:$0xf]
    %v30 = vld [vmem:[#allocation2 + $0x4] sm:$0xf]
    %v31 = vld [vmem:[#allocation2 + $0x8] sm:$0xf]
    %v32 = vld [vmem:[#allocation2 + $0xc] sm:$0xf]
    %v33 = vld [vmem:[#allocation2 + $0x10] sm:$0xf]
    %v34 = vld [vmem:[#allocation2 + $0x14] sm:$0xf]
    %v35 = vld [vmem:[#allocation2 + $0x18] sm:$0xf]
    %v36 = vld [vmem:[#allocation2 + $0x1c] sm:$0xf]
    %v37 = vld [vmem:[#allocation2 + $0x20] sm:$0xf]
    %v38 = vld [vmem:[#allocation2 + $0x24] sm:$0xf]
    %v39 = vld [vmem:[#allocation2 + $0x28] sm:$0xf]
    %v40 = vld [vmem:[#allocation2 + $0x2c] sm:$0xf]
    %v41 = vld [vmem:[#allocation2 + $0x30] sm:$0xf]
    %v42 = vld [vmem:[#allocation2 + $0x34] sm:$0xf]
    %v43 = vld [vmem:[#allocation2 + $0x38] sm:$0xf]
    %v44 = vld [vmem:[#allocation2 + $0x3c] sm:$0xf]
    %v45 = vld [vmem:[#allocation2 + $0x40] sm:$0xf]
    %v46 = vld [vmem:[#allocation2 + $0x44] sm:$0xf]
    %v47 = vld [vmem:[#allocation2 + $0x48] sm:$0xf]
    %v48 = vld [vmem:[#allocation2 + $0x4c] sm:$0xf]
    %v49 = vld [vmem:[#allocation2 + $0x50] sm:$0xf]
    %v50 = vld [vmem:[#allocation2 + $0x54] sm:$0xf]
    %v51 = vld [vmem:[#allocation2 + $0x58] sm:$0xf]
    %v52 = vld [vmem:[#allocation2 + $0x5c] sm:$0xf]
    %v53 = vld [vmem:[#allocation2 + $0x60] sm:$0xf]
    %v54 = vld [vmem:[#allocation2 + $0x64] sm:$0xf]
    %v55 = vld [vmem:[#allocation2 + $0x68] sm:$0xf]
    %v56 = vld [vmem:[#allocation2 + $0x6c] sm:$0xf]
    %v57 = vld [vmem:[#allocation2 + $0x70] sm:$0xf]
    %v58 = vld [vmem:[#allocation2 + $0x74] sm:$0xf]
    %v59 = vld [vmem:[#allocation2 + $0x78] sm:$0xf]
    %v60 = vld [vmem:[#allocation2 + $0x7c] sm:$0xf]
    %v61 = vld [vmem:[#allocation2 + $0x80] sm:$0xf]
    %v62 = vld [vmem:[#allocation2 + $0x84] sm:$0xf]
    %v63 = vld [vmem:[#allocation2 + $0x88] sm:$0xf]
    %v64 = vld [vmem:[#allocation2 + $0x8c] sm:$0xf]
    %v65 = vld [vmem:[#allocation2 + $0x90] sm:$0xf]
    %v66 = vld [vmem:[#allocation2 + $0x94] sm:$0xf]
    %v67 = vld [vmem:[#allocation2 + $0x98] sm:$0xf]
    %v68 = vld [vmem:[#allocation2 + $0x9c] sm:$0xf]
    %v69 = vld [vmem:[#allocation2 + $0xa0] sm:$0xf]
    %v70 = vld [vmem:[#allocation2 + $0xa4] sm:$0xf]
    %v71 = vld [vmem:[#allocation2 + $0xa8] sm:$0xf]
    %v72 = vld [vmem:[#allocation2 + $0xac] sm:$0xf]
    %v73 = vld [vmem:[#allocation2 + $0xb0] sm:$0xf]
    %v74 = vld [vmem:[#allocation2 + $0xb4] sm:$0xf]
    %v75 = vld [vmem:[#allocation2 + $0xb8] sm:$0xf]
    %v76 = vld [vmem:[#allocation2 + $0xbc] sm:$0xf]
    %v77 = vld [vmem:[#allocation2 + $0xc0] sm:$0xf]
    %v78 = vld [vmem:[#allocation2 + $0xc4] sm:$0xf]
    %v79 = vld [vmem:[#allocation2 + $0xc8] sm:$0xf]
    %v80 = vld [vmem:[#allocation2 + $0xcc] sm:$0xf]
    %v81 = vld [vmem:[#allocation2 + $0xd0] sm:$0xf]
    %v82 = vld [vmem:[#allocation2 + $0xd4] sm:$0xf]
    %v83 = vld [vmem:[#allocation2 + $0xd8] sm:$0xf]
    %v84 = vld [vmem:[#allocation2 + $0xdc] sm:$0xf]
    %v85 = vld [vmem:[#allocation2 + $0xe0] sm:$0xf]
    %v86 = vld [vmem:[#allocation2 + $0xe4] sm:$0xf]
    %v87 = vld [vmem:[#allocation2 + $0xe8] sm:$0xf]
    %v88 = vld [vmem:[#allocation2 + $0xec] sm:$0xf]
    %v89 = vld [vmem:[#allocation2 + $0xf0] sm:$0xf]
    %v90 = vld [vmem:[#allocation2 + $0xf4] sm:$0xf]
    %v91 = vld [vmem:[#allocation2 + $0xf8] sm:$0xf]
    %v92 = vld [vmem:[#allocation2 + $0xfc] sm:$0xf]
    %v93 = vld [vmem:[#allocation2 + $0x100] sm:$0xf]
    %v94 = vld [vmem:[#allocation2 + $0x104] sm:$0xf]
    %v95 = vld [vmem:[#allocation2 + $0x108] sm:$0xf]
    %v96 = vld [vmem:[#allocation2 + $0x10c] sm:$0xf]
    %v97 = vld [vmem:[#allocation2 + $0x110] sm:$0xf]
    %v98 = vld [vmem:[#allocation2 + $0x114] sm:$0xf]
    %v99 = vld [vmem:[#allocation2 + $0x118] sm:$0xf]
    %v100 = vld [vmem:[#allocation2 + $0x11c] sm:$0xf]
    %v101 = vld [vmem:[#allocation2 + $0x120] sm:$0xf]
    %v102 = vld [vmem:[#allocation2 + $0x124] sm:$0xf]
    %v103 = vld [vmem:[#allocation2 + $0x128] sm:$0xf]
    %v104 = vld [vmem:[#allocation2 + $0x12c] sm:$0xf]
    %v105 = vld [vmem:[#allocation2 + $0x130] sm:$0xf]
    %v106 = vld [vmem:[#allocation2 + $0x134] sm:$0xf]
    %v107 = vld [vmem:[#allocation2 + $0x138] sm:$0xf]
    %v108 = vld [vmem:[#allocation2 + $0x13c] sm:$0xf]
    %v109 = vld [vmem:[#allocation2 + $0x140] sm:$0xf]
    %v110 = vld [vmem:[#allocation2 + $0x144] sm:$0xf]
    %v111 = vld [vmem:[#allocation2 + $0x148] sm:$0xf]
    %v112 = vld [vmem:[#allocation2 + $0x14c] sm:$0xf]
    %v113 = vld [vmem:[#allocation2 + $0x150] sm:$0xf]
    %v114 = vld [vmem:[#allocation2 + $0x154] sm:$0xf]
    %v115 = vld [vmem:[#allocation2 + $0x158] sm:$0xf]
    %v116 = vld [vmem:[#allocation2 + $0x15c] sm:$0xf]
    %v117 = vld [vmem:[#allocation2 + $0x160] sm:$0xf]
    %v118 = vld [vmem:[#allocation2 + $0x164] sm:$0xf]
    %v119 = vld [vmem:[#allocation2 + $0x168] sm:$0xf]
    %v120 = vld [vmem:[#allocation2 + $0x16c] sm:$0xf]
    %v121 = vld [vmem:[#allocation2 + $0x170] sm:$0xf]
    %v122 = vld [vmem:[#allocation2 + $0x174] sm:$0xf]
    %v123 = vld [vmem:[#allocation2 + $0x178] sm:$0xf]
    %v124 = vld [vmem:[#allocation2 + $0x17c] sm:$0xf]
    %v125 = vld [vmem:[#allocation2 + $0x180] sm:$0xf]
    %v126 = vld [vmem:[#allocation2 + $0x184] sm:$0xf]
    %v127 = vld [vmem:[#allocation2 + $0x188] sm:$0xf]
    %v128 = vld [vmem:[#allocation2 + $0x18c] sm:$0xf]
    %v129 = vld [vmem:[#allocation2 + $0x190] sm:$0xf]
    %v130 = vld [vmem:[#allocation2 + $0x194] sm:$0xf]
    %v131 = vld [vmem:[#allocation2 + $0x198] sm:$0xf]
    %v132 = vld [vmem:[#allocation2 + $0x19c] sm:$0xf]
    %v133 = vld [vmem:[#allocation2 + $0x1a0] sm:$0xf]
    %v134 = vld [vmem:[#allocation2 + $0x1a4] sm:$0xf]
    %v135 = vld [vmem:[#allocation2 + $0x1a8] sm:$0xf]
    %v136 = vld [vmem:[#allocation2 + $0x1ac] sm:$0xf]
    %v137 = vld [vmem:[#allocation2 + $0x1b0] sm:$0xf]
    %v138 = vld [vmem:[#allocation2 + $0x1b4] sm:$0xf]
    %v139 = vld [vmem:[#allocation2 + $0x1b8] sm:$0xf]
    %v140 = vld [vmem:[#allocation2 + $0x1bc] sm:$0xf]
    %v141 = vld [vmem:[#allocation2 + $0x1c0] sm:$0xf]
    %v142 = vld [vmem:[#allocation2 + $0x1c4] sm:$0xf]
    %v143 = vld [vmem:[#allocation2 + $0x1c8] sm:$0xf]
    %v144 = vld [vmem:[#allocation2 + $0x1cc] sm:$0xf]
    %v145 = vld [vmem:[#allocation2 + $0x1d0] sm:$0xf]
    %v146 = vld [vmem:[#allocation2 + $0x1d4] sm:$0xf]
    %v147 = vld [vmem:[#allocation2 + $0x1d8] sm:$0xf]
    %v148 = vld [vmem:[#allocation2 + $0x1dc] sm:$0xf]
    %v149 = vld [vmem:[#allocation2 + $0x1e0] sm:$0xf]
    %v150 = vld [vmem:[#allocation2 + $0x1e4] sm:$0xf]
    %v151 = vld [vmem:[#allocation2 + $0x1e8] sm:$0xf]
    %v152 = vld [vmem:[#allocation2 + $0x1ec] sm:$0xf]
    %v153 = vld [vmem:[#allocation2 + $0x1f0] sm:$0xf]
    %v154 = vld [vmem:[#allocation2 + $0x1f4] sm:$0xf]
    %v155 = vld [vmem:[#allocation2 + $0x1f8] sm:$0xf]
    %v156 = vld [vmem:[#allocation2 + $0x1fc] sm:$0xf]
    %v157 = vld [vmem:[#allocation2 + $0x200] sm:$0xf]
    %v158 = vld [vmem:[#allocation2 + $0x204] sm:$0xf]
    %v159 = vld [vmem:[#allocation2 + $0x208] sm:$0xf]
    %v160 = vld [vmem:[#allocation2 + $0x20c] sm:$0xf]
    %v161 = vld [vmem:[#allocation2 + $0x210] sm:$0xf]
    %v162 = vld [vmem:[#allocation2 + $0x214] sm:$0xf]
    %v163 = vld [vmem:[#allocation2 + $0x218] sm:$0xf]
    %v164 = vld [vmem:[#allocation2 + $0x21c] sm:$0xf]
    %v165 = vld [vmem:[#allocation2 + $0x220] sm:$0xf]
    %v166 = vld [vmem:[#allocation2 + $0x224] sm:$0xf]
    %v167 = vld [vmem:[#allocation2 + $0x228] sm:$0xf]
    %v168 = vld [vmem:[#allocation2 + $0x22c] sm:$0xf]
    %v169 = vld [vmem:[#allocation2 + $0x230] sm:$0xf]
    %v170 = vld [vmem:[#allocation2 + $0x234] sm:$0xf]
    %v171 = vld [vmem:[#allocation2 + $0x238] sm:$0xf]
    %v172 = vld [vmem:[#allocation2 + $0x23c] sm:$0xf]
    %v173 = vld [vmem:[#allocation2 + $0x240] sm:$0xf]
    %v174 = vld [vmem:[#allocation2 + $0x244] sm:$0xf]
    %v175 = vld [vmem:[#allocation2 + $0x248] sm:$0xf]
    %v176 = vld [vmem:[#allocation2 + $0x24c] sm:$0xf]
    %v177 = vld [vmem:[#allocation2 + $0x250] sm:$0xf]
    %v178 = vld [vmem:[#allocation2 + $0x254] sm:$0xf]
    %v179 = vld [vmem:[#allocation2 + $0x258] sm:$0xf]
    %v180 = vld [vmem:[#allocation2 + $0x25c] sm:$0xf]
    %v181 = vld [vmem:[#allocation2 + $0x260] sm:$0xf]
    %v182 = vld [vmem:[#allocation2 + $0x264] sm:$0xf]
    %v183 = vld [vmem:[#allocation2 + $0x268] sm:$0xf]
    %v184 = vld [vmem:[#allocation2 + $0x26c] sm:$0xf]
    %v185 = vld [vmem:[#allocation2 + $0x270] sm:$0xf]
    %v186 = vld [vmem:[#allocation2 + $0x274] sm:$0xf]
    %v187 = vld [vmem:[#allocation2 + $0x278] sm:$0xf]
    %v188 = vld [vmem:[#allocation2 + $0x27c] sm:$0xf]
    %v189 = vld [vmem:[#allocation2 + $0x280] sm:$0xf]
    %v190 = vld [vmem:[#allocation2 + $0x284] sm:$0xf]
    %v191 = vld [vmem:[#allocation2 + $0x288] sm:$0xf]
    %v192 = vld [vmem:[#allocation2 + $0x28c] sm:$0xf]
    %v193 = vld [vmem:[#allocation2 + $0x290] sm:$0xf]
    %v194 = vld [vmem:[#allocation2 + $0x294] sm:$0xf]
    %v195 = vld [vmem:[#allocation2 + $0x298] sm:$0xf]
    %v196 = vld [vmem:[#allocation2 + $0x29c] sm:$0xf]
    %v197 = vld [vmem:[#allocation2 + $0x2a0] sm:$0xf]
    %v198 = vld [vmem:[#allocation2 + $0x2a4] sm:$0xf]
    %v199 = vld [vmem:[#allocation2 + $0x2a8] sm:$0xf]
    %v200 = vld [vmem:[#allocation2 + $0x2ac] sm:$0xf]
    %v201 = vld [vmem:[#allocation2 + $0x2b0] sm:$0xf]
    %v202 = vld [vmem:[#allocation2 + $0x2b4] sm:$0xf]
    %v203 = vld [vmem:[#allocation2 + $0x2b8] sm:$0xf]
    %v204 = vld [vmem:[#allocation2 + $0x2bc] sm:$0xf]
    %v205 = vld [vmem:[#allocation2 + $0x2c0] sm:$0xf]
    %v206 = vld [vmem:[#allocation2 + $0x2c4] sm:$0xf]
    %v207 = vld [vmem:[#allocation2 + $0x2c8] sm:$0xf]
    %v208 = vld [vmem:[#allocation2 + $0x2cc] sm:$0xf]
    %v209 = vld [vmem:[#allocation2 + $0x2d0] sm:$0xf]
    %v210 = vld [vmem:[#allocation2 + $0x2d4] sm:$0xf]
    %v211 = vld [vmem:[#allocation2 + $0x2d8] sm:$0xf]
    %v212 = vld [vmem:[#allocation2 + $0x2dc] sm:$0xf]
    %v213 = vld [vmem:[#allocation2 + $0x2e0] sm:$0xf]
    %v214 = vld [vmem:[#allocation2 + $0x2e4] sm:$0xf]
    %v215 = vld [vmem:[#allocation2 + $0x2e8] sm:$0xf]
    %v216 = vld [vmem:[#allocation2 + $0x2ec] sm:$0xf]
    %v217 = vld [vmem:[#allocation2 + $0x2f0] sm:$0xf]
    %v218 = vld [vmem:[#allocation2 + $0x2f4] sm:$0xf]
    %v219 = vld [vmem:[#allocation2 + $0x2f8] sm:$0xf]
    %v220 = vld [vmem:[#allocation2 + $0x2fc] sm:$0xf]
    %v221 = vld [vmem:[#allocation2 + $0x300] sm:$0xf]
    %v222 = vld [vmem:[#allocation2 + $0x304] sm:$0xf]
    %v223 = vld [vmem:[#allocation2 + $0x308] sm:$0xf]
    %v224 = vld [vmem:[#allocation2 + $0x30c] sm:$0xf]
    %v225 = vld [vmem:[#allocation2 + $0x310] sm:$0xf]
    %v226 = vld [vmem:[#allocation2 + $0x314] sm:$0xf]
    %v227 = vld [vmem:[#allocation2 + $0x318] sm:$0xf]
    %v228 = vld [vmem:[#allocation2 + $0x31c] sm:$0xf]
    %v229 = vld [vmem:[#allocation2 + $0x320] sm:$0xf]
    %v230 = vld [vmem:[#allocation2 + $0x324] sm:$0xf]
    %v231 = vld [vmem:[#allocation2 + $0x328] sm:$0xf]
    %v232 = vld [vmem:[#allocation2 + $0x32c] sm:$0xf]
    %v233 = vld [vmem:[#allocation2 + $0x330] sm:$0xf]
    %v234 = vld [vmem:[#allocation2 + $0x334] sm:$0xf]
    %v235 = vld [vmem:[#allocation2 + $0x338] sm:$0xf]
    %v236 = vld [vmem:[#allocation2 + $0x33c] sm:$0xf]
    %v237 = vld [vmem:[#allocation2 + $0x340] sm:$0xf]
    %v238 = vld [vmem:[#allocation2 + $0x344] sm:$0xf]
    %v239 = vld [vmem:[#allocation2 + $0x348] sm:$0xf]
    %v240 = vld [vmem:[#allocation2 + $0x34c] sm:$0xf]
    %v241 = vld [vmem:[#allocation2 + $0x350] sm:$0xf]
    %v242 = vld [vmem:[#allocation2 + $0x354] sm:$0xf]
    %v243 = vld [vmem:[#allocation2 + $0x358] sm:$0xf]
    %v244 = vld [vmem:[#allocation2 + $0x35c] sm:$0xf]
    %v245 = vld [vmem:[#allocation2 + $0x360] sm:$0xf]
    %v246 = vld [vmem:[#allocation2 + $0x364] sm:$0xf]
    %v247 = vld [vmem:[#allocation2 + $0x368] sm:$0xf]
    %v248 = vld [vmem:[#allocation2 + $0x36c] sm:$0xf]
    %v249 = vld [vmem:[#allocation2 + $0x370] sm:$0xf]
    %v250 = vld [vmem:[#allocation2 + $0x374] sm:$0xf]
    %v251 = vld [vmem:[#allocation2 + $0x378] sm:$0xf]
    %v252 = vld [vmem:[#allocation2 + $0x37c] sm:$0xf]
    %v253 = vld [vmem:[#allocation2 + $0x380] sm:$0xf]
    %v254 = vld [vmem:[#allocation2 + $0x384] sm:$0xf]
    %v255 = vld [vmem:[#allocation2 + $0x388] sm:$0xf]
    %v256 = vld [vmem:[#allocation2 + $0x38c] sm:$0xf]
    %v257 = vld [vmem:[#allocation2 + $0x390] sm:$0xf]
    %v258 = vld [vmem:[#allocation2 + $0x394] sm:$0xf]
    %v259 = vld [vmem:[#allocation2 + $0x398] sm:$0xf]
    %v260 = vld [vmem:[#allocation2 + $0x39c] sm:$0xf]
    %v261 = vld [vmem:[#allocation2 + $0x3a0] sm:$0xf]
    %v262 = vld [vmem:[#allocation2 + $0x3a4] sm:$0xf]
    %v263 = vld [vmem:[#allocation2 + $0x3a8] sm:$0xf]
    %v264 = vld [vmem:[#allocation2 + $0x3ac] sm:$0xf]
    %v265 = vld [vmem:[#allocation2 + $0x3b0] sm:$0xf]
    %v266 = vld [vmem:[#allocation2 + $0x3b4] sm:$0xf]
    %v267 = vld [vmem:[#allocation2 + $0x3b8] sm:$0xf]
    %v268 = vld [vmem:[#allocation2 + $0x3bc] sm:$0xf]
    %v269 = vld [vmem:[#allocation2 + $0x3c0] sm:$0xf]
    %v270 = vld [vmem:[#allocation2 + $0x3c4] sm:$0xf]
    %v271 = vld [vmem:[#allocation2 + $0x3c8] sm:$0xf]
    %v272 = vld [vmem:[#allocation2 + $0x3cc] sm:$0xf]
    %v273 = vld [vmem:[#allocation2 + $0x3d0] sm:$0xf]
    %v274 = vld [vmem:[#allocation2 + $0x3d4] sm:$0xf]
    %v275 = vld [vmem:[#allocation2 + $0x3d8] sm:$0xf]
    %v276 = vld [vmem:[#allocation2 + $0x3dc] sm:$0xf]
    %v277 = vld [vmem:[#allocation2 + $0x3e0] sm:$0xf]
    %v278 = vld [vmem:[#allocation2 + $0x3e4] sm:$0xf]
    %v279 = vld [vmem:[#allocation2 + $0x3e8] sm:$0xf]
    %v280 = vld [vmem:[#allocation2 + $0x3ec] sm:$0xf]
    %v281 = vld [vmem:[#allocation2 + $0x3f0] sm:$0xf]
    %v282 = vld [vmem:[#allocation2 + $0x3f4] sm:$0xf]
    %v283 = vld [vmem:[#allocation2 + $0x3f8] sm:$0xf]
    %v284 = vld [vmem:[#allocation2 + $0x3fc] sm:$0xf]
    %v287 = vunpack.c.l.b16 %v27
    %v288 = vunpack.c.l.b16 %v28
    %v289 = vpack.c.b16 %v288, %v287
    %v307 = vunpack.c.l.b16 %v29
    %v308 = vunpack.c.l.b16 %v30
    %v309 = vunpack.c.l.b16 %v31
    %v310 = vunpack.c.l.b16 %v32
    %v311 = vunpack.c.l.b16 %v33
    %v312 = vunpack.c.l.b16 %v34
    %v313 = vunpack.c.l.b16 %v35
    %v314 = vunpack.c.l.b16 %v36
    %v315 = vunpack.c.l.b16 %v37
    %v316 = vunpack.c.l.b16 %v38
    %v317 = vunpack.c.l.b16 %v39
    %v318 = vunpack.c.l.b16 %v40
    %v319 = vunpack.c.l.b16 %v41
    %v320 = vunpack.c.l.b16 %v42
    %v321 = vunpack.c.l.b16 %v43
    %v322 = vunpack.c.l.b16 %v44
    %v323 = vpack.c.b16 %v308, %v307
    %v324 = vpack.c.b16 %v310, %v309
    %v325 = vpack.c.b16 %v312, %v311
    %v326 = vpack.c.b16 %v314, %v313
    %v327 = vpack.c.b16 %v316, %v315
    %v328 = vpack.c.b16 %v318, %v317
    %v329 = vpack.c.b16 %v320, %v319
    %v330 = vpack.c.b16 %v322, %v321
    %339 = vmatpush.bf16.msra.mxu0 %v330
    %340 = vmatpush.bf16.msra.mxu0 %v329
    %341 = vmatpush.bf16.msra.mxu0 %v328
    %342 = vmatpush.bf16.msra.mxu0 %v327
    %343 = vmatpush.bf16.msra.mxu0 %v326
    %344 = vmatpush.bf16.msra.mxu0 %v325
    %345 = vmatpush.bf16.msra.mxu0 %v324
    %346 = vmatpush.bf16.msra.mxu0 %v323
    %347 = vmatmul.bf16.gmra.mxu0 %v289
    %v348 = vpop.f32.mrf.mxu0
    %v349 = vadd.f32 0.0, %v348
    %v350 = vpop.f32.mrf.mxu0
    %v351 = vadd.f32 0.0, %v350
    %352 = vdwg.mxu0
    %v369 = vunpack.c.l.b16 %v45
    %v370 = vunpack.c.l.b16 %v46
    %v371 = vunpack.c.l.b16 %v47
    %v372 = vunpack.c.l.b16 %v48
    %v373 = vunpack.c.l.b16 %v49
    %v374 = vunpack.c.l.b16 %v50
    %v375 = vunpack.c.l.b16 %v51
    %v376 = vunpack.c.l.b16 %v52
    %v377 = vunpack.c.l.b16 %v53
    %v378 = vunpack.c.l.b16 %v54
    %v379 = vunpack.c.l.b16 %v55
    %v380 = vunpack.c.l.b16 %v56
    %v381 = vunpack.c.l.b16 %v57
    %v382 = vunpack.c.l.b16 %v58
    %v383 = vunpack.c.l.b16 %v59
    %v384 = vunpack.c.l.b16 %v60
    %v385 = vpack.c.b16 %v370, %v369
    %v386 = vpack.c.b16 %v372, %v371
    %v387 = vpack.c.b16 %v374, %v373
    %v388 = vpack.c.b16 %v376, %v375
    %v389 = vpack.c.b16 %v378, %v377
    %v390 = vpack.c.b16 %v380, %v379
    %v391 = vpack.c.b16 %v382, %v381
    %v392 = vpack.c.b16 %v384, %v383
    %401 = vmatpush.bf16.msra.mxu0 %v392
    %402 = vmatpush.bf16.msra.mxu0 %v391
    %403 = vmatpush.bf16.msra.mxu0 %v390
    %404 = vmatpush.bf16.msra.mxu0 %v389
    %405 = vmatpush.bf16.msra.mxu0 %v388
    %406 = vmatpush.bf16.msra.mxu0 %v387
    %407 = vmatpush.bf16.msra.mxu0 %v386
    %408 = vmatpush.bf16.msra.mxu0 %v385
    %409 = vmatmul.bf16.gmra.mxu0 %v289
    %v410 = vpop.f32.mrf.mxu0
    %v411 = vadd.f32 0.0, %v410
    %v412 = vpop.f32.mrf.mxu0
    %v413 = vadd.f32 0.0, %v412
    %414 = vdwg.mxu0
    %v431 = vunpack.c.l.b16 %v61
    %v432 = vunpack.c.l.b16 %v62
    %v433 = vunpack.c.l.b16 %v63
    %v434 = vunpack.c.l.b16 %v64
    %v435 = vunpack.c.l.b16 %v65
    %v436 = vunpack.c.l.b16 %v66
    %v437 = vunpack.c.l.b16 %v67
    %v438 = vunpack.c.l.b16 %v68
    %v439 = vunpack.c.l.b16 %v69
    %v440 = vunpack.c.l.b16 %v70
    %v441 = vunpack.c.l.b16 %v71
    %v442 = vunpack.c.l.b16 %v72
    %v443 = vunpack.c.l.b16 %v73
    %v444 = vunpack.c.l.b16 %v74
    %v445 = vunpack.c.l.b16 %v75
    %v446 = vunpack.c.l.b16 %v76
    %v447 = vpack.c.b16 %v432, %v431
    %v448 = vpack.c.b16 %v434, %v433
    %v449 = vpack.c.b16 %v436, %v435
    %v450 = vpack.c.b16 %v438, %v437
    %v451 = vpack.c.b16 %v440, %v439
    %v452 = vpack.c.b16 %v442, %v441
    %v453 = vpack.c.b16 %v444, %v443
    %v454 = vpack.c.b16 %v446, %v445
    %463 = vmatpush.bf16.msra.mxu0 %v454
    %464 = vmatpush.bf16.msra.mxu0 %v453
    %465 = vmatpush.bf16.msra.mxu0 %v452
    %466 = vmatpush.bf16.msra.mxu0 %v451
    %467 = vmatpush.bf16.msra.mxu0 %v450
    %468 = vmatpush.bf16.msra.mxu0 %v449
    %469 = vmatpush.bf16.msra.mxu0 %v448
    %470 = vmatpush.bf16.msra.mxu0 %v447
    %471 = vmatmul.bf16.gmra.mxu0 %v289
    %v472 = vpop.f32.mrf.mxu0
    %v473 = vadd.f32 0.0, %v472
    %v474 = vpop.f32.mrf.mxu0
    %v475 = vadd.f32 0.0, %v474
    %476 = vdwg.mxu0
    %v493 = vunpack.c.l.b16 %v77
    %v494 = vunpack.c.l.b16 %v78
    %v495 = vunpack.c.l.b16 %v79
    %v496 = vunpack.c.l.b16 %v80
    %v497 = vunpack.c.l.b16 %v81
    %v498 = vunpack.c.l.b16 %v82
    %v499 = vunpack.c.l.b16 %v83
    %v500 = vunpack.c.l.b16 %v84
    %v501 = vunpack.c.l.b16 %v85
    %v502 = vunpack.c.l.b16 %v86
    %v503 = vunpack.c.l.b16 %v87
    %v504 = vunpack.c.l.b16 %v88
    %v505 = vunpack.c.l.b16 %v89
    %v506 = vunpack.c.l.b16 %v90
    %v507 = vunpack.c.l.b16 %v91
    %v508 = vunpack.c.l.b16 %v92
    %v509 = vpack.c.b16 %v494, %v493
    %v510 = vpack.c.b16 %v496, %v495
    %v511 = vpack.c.b16 %v498, %v497
    %v512 = vpack.c.b16 %v500, %v499
    %v513 = vpack.c.b16 %v502, %v501
    %v514 = vpack.c.b16 %v504, %v503
    %v515 = vpack.c.b16 %v506, %v505
    %v516 = vpack.c.b16 %v508, %v507
    %525 = vmatpush.bf16.msra.mxu0 %v516
    %526 = vmatpush.bf16.msra.mxu0 %v515
    %527 = vmatpush.bf16.msra.mxu0 %v514
    %528 = vmatpush.bf16.msra.mxu0 %v513
    %529 = vmatpush.bf16.msra.mxu0 %v512
    %530 = vmatpush.bf16.msra.mxu0 %v511
    %531 = vmatpush.bf16.msra.mxu0 %v510
    %532 = vmatpush.bf16.msra.mxu0 %v509
    %533 = vmatmul.bf16.gmra.mxu0 %v289
    %v534 = vpop.f32.mrf.mxu0
    %v535 = vadd.f32 0.0, %v534
    %v536 = vpop.f32.mrf.mxu0
    %v537 = vadd.f32 0.0, %v536
    %538 = vdwg.mxu0
    %v555 = vunpack.c.l.b16 %v93
    %v556 = vunpack.c.l.b16 %v94
    %v557 = vunpack.c.l.b16 %v95
    %v558 = vunpack.c.l.b16 %v96
    %v559 = vunpack.c.l.b16 %v97
    %v560 = vunpack.c.l.b16 %v98
    %v561 = vunpack.c.l.b16 %v99
    %v562 = vunpack.c.l.b16 %v100
    %v563 = vunpack.c.l.b16 %v101
    %v564 = vunpack.c.l.b16 %v102
    %v565 = vunpack.c.l.b16 %v103
    %v566 = vunpack.c.l.b16 %v104
    %v567 = vunpack.c.l.b16 %v105
    %v568 = vunpack.c.l.b16 %v106
    %v569 = vunpack.c.l.b16 %v107
    %v570 = vunpack.c.l.b16 %v108
    %v571 = vpack.c.b16 %v556, %v555
    %v572 = vpack.c.b16 %v558, %v557
    %v573 = vpack.c.b16 %v560, %v559
    %v574 = vpack.c.b16 %v562, %v561
    %v575 = vpack.c.b16 %v564, %v563
    %v576 = vpack.c.b16 %v566, %v565
    %v577 = vpack.c.b16 %v568, %v567
    %v578 = vpack.c.b16 %v570, %v569
    %587 = vmatpush.bf16.msra.mxu0 %v578
    %588 = vmatpush.bf16.msra.mxu0 %v577
    %589 = vmatpush.bf16.msra.mxu0 %v576
    %590 = vmatpush.bf16.msra.mxu0 %v575
    %591 = vmatpush.bf16.msra.mxu0 %v574
    %592 = vmatpush.bf16.msra.mxu0 %v573
    %593 = vmatpush.bf16.msra.mxu0 %v572
    %594 = vmatpush.bf16.msra.mxu0 %v571
    %595 = vmatmul.bf16.gmra.mxu0 %v289
    %v596 = vpop.f32.mrf.mxu0
    %v597 = vadd.f32 0.0, %v596
    %v598 = vpop.f32.mrf.mxu0
    %v599 = vadd.f32 0.0, %v598
    %600 = vdwg.mxu0
    %v617 = vunpack.c.l.b16 %v109
    %v618 = vunpack.c.l.b16 %v110
    %v619 = vunpack.c.l.b16 %v111
    %v620 = vunpack.c.l.b16 %v112
    %v621 = vunpack.c.l.b16 %v113
    %v622 = vunpack.c.l.b16 %v114
    %v623 = vunpack.c.l.b16 %v115
    %v624 = vunpack.c.l.b16 %v116
    %v625 = vunpack.c.l.b16 %v117
    %v626 = vunpack.c.l.b16 %v118
    %v627 = vunpack.c.l.b16 %v119
    %v628 = vunpack.c.l.b16 %v120
    %v629 = vunpack.c.l.b16 %v121
    %v630 = vunpack.c.l.b16 %v122
    %v631 = vunpack.c.l.b16 %v123
    %v632 = vunpack.c.l.b16 %v124
    %v633 = vpack.c.b16 %v618, %v617
    %v634 = vpack.c.b16 %v620, %v619
    %v635 = vpack.c.b16 %v622, %v621
    %v636 = vpack.c.b16 %v624, %v623
    %v637 = vpack.c.b16 %v626, %v625
    %v638 = vpack.c.b16 %v628, %v627
    %v639 = vpack.c.b16 %v630, %v629
    %v640 = vpack.c.b16 %v632, %v631
    %649 = vmatpush.bf16.msra.mxu0 %v640
    %650 = vmatpush.bf16.msra.mxu0 %v639
    %651 = vmatpush.bf16.msra.mxu0 %v638
    %652 = vmatpush.bf16.msra.mxu0 %v637
    %653 = vmatpush.bf16.msra.mxu0 %v636
    %654 = vmatpush.bf16.msra.mxu0 %v635
    %655 = vmatpush.bf16.msra.mxu0 %v634
    %656 = vmatpush.bf16.msra.mxu0 %v633
    %657 = vmatmul.bf16.gmra.mxu0 %v289
    %v658 = vpop.f32.mrf.mxu0
    %v659 = vadd.f32 0.0, %v658
    %v660 = vpop.f32.mrf.mxu0
    %v661 = vadd.f32 0.0, %v660
    %662 = vdwg.mxu0
    %v679 = vunpack.c.l.b16 %v125
    %v680 = vunpack.c.l.b16 %v126
    %v681 = vunpack.c.l.b16 %v127
    %v682 = vunpack.c.l.b16 %v128
    %v683 = vunpack.c.l.b16 %v129
    %v684 = vunpack.c.l.b16 %v130
    %v685 = vunpack.c.l.b16 %v131
    %v686 = vunpack.c.l.b16 %v132
    %v687 = vunpack.c.l.b16 %v133
    %v688 = vunpack.c.l.b16 %v134
    %v689 = vunpack.c.l.b16 %v135
    %v690 = vunpack.c.l.b16 %v136
    %v691 = vunpack.c.l.b16 %v137
    %v692 = vunpack.c.l.b16 %v138
    %v693 = vunpack.c.l.b16 %v139
    %v694 = vunpack.c.l.b16 %v140
    %v695 = vpack.c.b16 %v680, %v679
    %v696 = vpack.c.b16 %v682, %v681
    %v697 = vpack.c.b16 %v684, %v683
    %v698 = vpack.c.b16 %v686, %v685
    %v699 = vpack.c.b16 %v688, %v687
    %v700 = vpack.c.b16 %v690, %v689
    %v701 = vpack.c.b16 %v692, %v691
    %v702 = vpack.c.b16 %v694, %v693
    %711 = vmatpush.bf16.msra.mxu0 %v702
    %712 = vmatpush.bf16.msra.mxu0 %v701
    %713 = vmatpush.bf16.msra.mxu0 %v700
    %714 = vmatpush.bf16.msra.mxu0 %v699
    %715 = vmatpush.bf16.msra.mxu0 %v698
    %716 = vmatpush.bf16.msra.mxu0 %v697
    %717 = vmatpush.bf16.msra.mxu0 %v696
    %718 = vmatpush.bf16.msra.mxu0 %v695
    %719 = vmatmul.bf16.gmra.mxu0 %v289
    %v720 = vpop.f32.mrf.mxu0
    %v721 = vadd.f32 0.0, %v720
    %v722 = vpop.f32.mrf.mxu0
    %v723 = vadd.f32 0.0, %v722
    %724 = vdwg.mxu0
    %v741 = vunpack.c.l.b16 %v141
    %v742 = vunpack.c.l.b16 %v142
    %v743 = vunpack.c.l.b16 %v143
    %v744 = vunpack.c.l.b16 %v144
    %v745 = vunpack.c.l.b16 %v145
    %v746 = vunpack.c.l.b16 %v146
    %v747 = vunpack.c.l.b16 %v147
    %v748 = vunpack.c.l.b16 %v148
    %v749 = vunpack.c.l.b16 %v149
    %v750 = vunpack.c.l.b16 %v150
    %v751 = vunpack.c.l.b16 %v151
    %v752 = vunpack.c.l.b16 %v152
    %v753 = vunpack.c.l.b16 %v153
    %v754 = vunpack.c.l.b16 %v154
    %v755 = vunpack.c.l.b16 %v155
    %v756 = vunpack.c.l.b16 %v156
    %v757 = vpack.c.b16 %v742, %v741
    %v758 = vpack.c.b16 %v744, %v743
    %v759 = vpack.c.b16 %v746, %v745
    %v760 = vpack.c.b16 %v748, %v747
    %v761 = vpack.c.b16 %v750, %v749
    %v762 = vpack.c.b16 %v752, %v751
    %v763 = vpack.c.b16 %v754, %v753
    %v764 = vpack.c.b16 %v756, %v755
    %773 = vmatpush.bf16.msra.mxu0 %v764
    %774 = vmatpush.bf16.msra.mxu0 %v763
    %775 = vmatpush.bf16.msra.mxu0 %v762
    %776 = vmatpush.bf16.msra.mxu0 %v761
    %777 = vmatpush.bf16.msra.mxu0 %v760
    %778 = vmatpush.bf16.msra.mxu0 %v759
    %779 = vmatpush.bf16.msra.mxu0 %v758
    %780 = vmatpush.bf16.msra.mxu0 %v757
    %781 = vmatmul.bf16.gmra.mxu0 %v289
    %v782 = vpop.f32.mrf.mxu0
    %v783 = vadd.f32 0.0, %v782
    %v784 = vpop.f32.mrf.mxu0
    %v785 = vadd.f32 0.0, %v784
    %786 = vdwg.mxu0
    %v803 = vunpack.c.l.b16 %v157
    %v804 = vunpack.c.l.b16 %v158
    %v805 = vunpack.c.l.b16 %v159
    %v806 = vunpack.c.l.b16 %v160
    %v807 = vunpack.c.l.b16 %v161
    %v808 = vunpack.c.l.b16 %v162
    %v809 = vunpack.c.l.b16 %v163
    %v810 = vunpack.c.l.b16 %v164
    %v811 = vunpack.c.l.b16 %v165
    %v812 = vunpack.c.l.b16 %v166
    %v813 = vunpack.c.l.b16 %v167
    %v814 = vunpack.c.l.b16 %v168
    %v815 = vunpack.c.l.b16 %v169
    %v816 = vunpack.c.l.b16 %v170
    %v817 = vunpack.c.l.b16 %v171
    %v818 = vunpack.c.l.b16 %v172
    %v819 = vpack.c.b16 %v804, %v803
    %v820 = vpack.c.b16 %v806, %v805
    %v821 = vpack.c.b16 %v808, %v807
    %v822 = vpack.c.b16 %v810, %v809
    %v823 = vpack.c.b16 %v812, %v811
    %v824 = vpack.c.b16 %v814, %v813
    %v825 = vpack.c.b16 %v816, %v815
    %v826 = vpack.c.b16 %v818, %v817
    %835 = vmatpush.bf16.msra.mxu0 %v826
    %836 = vmatpush.bf16.msra.mxu0 %v825
    %837 = vmatpush.bf16.msra.mxu0 %v824
    %838 = vmatpush.bf16.msra.mxu0 %v823
    %839 = vmatpush.bf16.msra.mxu0 %v822
    %840 = vmatpush.bf16.msra.mxu0 %v821
    %841 = vmatpush.bf16.msra.mxu0 %v820
    %842 = vmatpush.bf16.msra.mxu0 %v819
    %843 = vmatmul.bf16.gmra.mxu0 %v289
    %v844 = vpop.f32.mrf.mxu0
    %v845 = vadd.f32 0.0, %v844
    %v846 = vpop.f32.mrf.mxu0
    %v847 = vadd.f32 0.0, %v846
    %848 = vdwg.mxu0
    %v865 = vunpack.c.l.b16 %v173
    %v866 = vunpack.c.l.b16 %v174
    %v867 = vunpack.c.l.b16 %v175
    %v868 = vunpack.c.l.b16 %v176
    %v869 = vunpack.c.l.b16 %v177
    %v870 = vunpack.c.l.b16 %v178
    %v871 = vunpack.c.l.b16 %v179
    %v872 = vunpack.c.l.b16 %v180
    %v873 = vunpack.c.l.b16 %v181
    %v874 = vunpack.c.l.b16 %v182
    %v875 = vunpack.c.l.b16 %v183
    %v876 = vunpack.c.l.b16 %v184
    %v877 = vunpack.c.l.b16 %v185
    %v878 = vunpack.c.l.b16 %v186
    %v879 = vunpack.c.l.b16 %v187
    %v880 = vunpack.c.l.b16 %v188
    %v881 = vpack.c.b16 %v866, %v865
    %v882 = vpack.c.b16 %v868, %v867
    %v883 = vpack.c.b16 %v870, %v869
    %v884 = vpack.c.b16 %v872, %v871
    %v885 = vpack.c.b16 %v874, %v873
    %v886 = vpack.c.b16 %v876, %v875
    %v887 = vpack.c.b16 %v878, %v877
    %v888 = vpack.c.b16 %v880, %v879
    %897 = vmatpush.bf16.msra.mxu0 %v888
    %898 = vmatpush.bf16.msra.mxu0 %v887
    %899 = vmatpush.bf16.msra.mxu0 %v886
    %900 = vmatpush.bf16.msra.mxu0 %v885
    %901 = vmatpush.bf16.msra.mxu0 %v884
    %902 = vmatpush.bf16.msra.mxu0 %v883
    %903 = vmatpush.bf16.msra.mxu0 %v882
    %904 = vmatpush.bf16.msra.mxu0 %v881
    %905 = vmatmul.bf16.gmra.mxu0 %v289
    %v906 = vpop.f32.mrf.mxu0
    %v907 = vadd.f32 0.0, %v906
    %v908 = vpop.f32.mrf.mxu0
    %v909 = vadd.f32 0.0, %v908
    %910 = vdwg.mxu0
    %v927 = vunpack.c.l.b16 %v189
    %v928 = vunpack.c.l.b16 %v190
    %v929 = vunpack.c.l.b16 %v191
    %v930 = vunpack.c.l.b16 %v192
    %v931 = vunpack.c.l.b16 %v193
    %v932 = vunpack.c.l.b16 %v194
    %v933 = vunpack.c.l.b16 %v195
    %v934 = vunpack.c.l.b16 %v196
    %v935 = vunpack.c.l.b16 %v197
    %v936 = vunpack.c.l.b16 %v198
    %v937 = vunpack.c.l.b16 %v199
    %v938 = vunpack.c.l.b16 %v200
    %v939 = vunpack.c.l.b16 %v201
    %v940 = vunpack.c.l.b16 %v202
    %v941 = vunpack.c.l.b16 %v203
    %v942 = vunpack.c.l.b16 %v204
    %v943 = vpack.c.b16 %v928, %v927
    %v944 = vpack.c.b16 %v930, %v929
    %v945 = vpack.c.b16 %v932, %v931
    %v946 = vpack.c.b16 %v934, %v933
    %v947 = vpack.c.b16 %v936, %v935
    %v948 = vpack.c.b16 %v938, %v937
    %v949 = vpack.c.b16 %v940, %v939
    %v950 = vpack.c.b16 %v942, %v941
    %959 = vmatpush.bf16.msra.mxu0 %v950
    %960 = vmatpush.bf16.msra.mxu0 %v949
    %961 = vmatpush.bf16.msra.mxu0 %v948
    %962 = vmatpush.bf16.msra.mxu0 %v947
    %963 = vmatpush.bf16.msra.mxu0 %v946
    %964 = vmatpush.bf16.msra.mxu0 %v945
    %965 = vmatpush.bf16.msra.mxu0 %v944
    %966 = vmatpush.bf16.msra.mxu0 %v943
    %967 = vmatmul.bf16.gmra.mxu0 %v289
    %v968 = vpop.f32.mrf.mxu0
    %v969 = vadd.f32 0.0, %v968
    %v970 = vpop.f32.mrf.mxu0
    %v971 = vadd.f32 0.0, %v970
    %972 = vdwg.mxu0
    %v989 = vunpack.c.l.b16 %v205
    %v990 = vunpack.c.l.b16 %v206
    %v991 = vunpack.c.l.b16 %v207
    %v992 = vunpack.c.l.b16 %v208
    %v993 = vunpack.c.l.b16 %v209
    %v994 = vunpack.c.l.b16 %v210
    %v995 = vunpack.c.l.b16 %v211
    %v996 = vunpack.c.l.b16 %v212
    %v997 = vunpack.c.l.b16 %v213
    %v998 = vunpack.c.l.b16 %v214
    %v999 = vunpack.c.l.b16 %v215
    %v1000 = vunpack.c.l.b16 %v216
    %v1001 = vunpack.c.l.b16 %v217
    %v1002 = vunpack.c.l.b16 %v218
    %v1003 = vunpack.c.l.b16 %v219
    %v1004 = vunpack.c.l.b16 %v220
    %v1005 = vpack.c.b16 %v990, %v989
    %v1006 = vpack.c.b16 %v992, %v991
    %v1007 = vpack.c.b16 %v994, %v993
    %v1008 = vpack.c.b16 %v996, %v995
    %v1009 = vpack.c.b16 %v998, %v997
    %v1010 = vpack.c.b16 %v1000, %v999
    %v1011 = vpack.c.b16 %v1002, %v1001
    %v1012 = vpack.c.b16 %v1004, %v1003
    %1021 = vmatpush.bf16.msra.mxu0 %v1012
    %1022 = vmatpush.bf16.msra.mxu0 %v1011
    %1023 = vmatpush.bf16.msra.mxu0 %v1010
    %1024 = vmatpush.bf16.msra.mxu0 %v1009
    %1025 = vmatpush.bf16.msra.mxu0 %v1008
    %1026 = vmatpush.bf16.msra.mxu0 %v1007
    %1027 = vmatpush.bf16.msra.mxu0 %v1006
    %1028 = vmatpush.bf16.msra.mxu0 %v1005
    %1029 = vmatmul.bf16.gmra.mxu0 %v289
    %v1030 = vpop.f32.mrf.mxu0
    %v1031 = vadd.f32 0.0, %v1030
    %v1032 = vpop.f32.mrf.mxu0
    %v1033 = vadd.f32 0.0, %v1032
    %1034 = vdwg.mxu0
    %v1051 = vunpack.c.l.b16 %v221
    %v1052 = vunpack.c.l.b16 %v222
    %v1053 = vunpack.c.l.b16 %v223
    %v1054 = vunpack.c.l.b16 %v224
    %v1055 = vunpack.c.l.b16 %v225
    %v1056 = vunpack.c.l.b16 %v226
    %v1057 = vunpack.c.l.b16 %v227
    %v1058 = vunpack.c.l.b16 %v228
    %v1059 = vunpack.c.l.b16 %v229
    %v1060 = vunpack.c.l.b16 %v230
    %v1061 = vunpack.c.l.b16 %v231
    %v1062 = vunpack.c.l.b16 %v232
    %v1063 = vunpack.c.l.b16 %v233
    %v1064 = vunpack.c.l.b16 %v234
    %v1065 = vunpack.c.l.b16 %v235
    %v1066 = vunpack.c.l.b16 %v236
    %v1067 = vpack.c.b16 %v1052, %v1051
    %v1068 = vpack.c.b16 %v1054, %v1053
    %v1069 = vpack.c.b16 %v1056, %v1055
    %v1070 = vpack.c.b16 %v1058, %v1057
    %v1071 = vpack.c.b16 %v1060, %v1059
    %v1072 = vpack.c.b16 %v1062, %v1061
    %v1073 = vpack.c.b16 %v1064, %v1063
    %v1074 = vpack.c.b16 %v1066, %v1065
    %1083 = vmatpush.bf16.msra.mxu0 %v1074
    %1084 = vmatpush.bf16.msra.mxu0 %v1073
    %1085 = vmatpush.bf16.msra.mxu0 %v1072
    %1086 = vmatpush.bf16.msra.mxu0 %v1071
    %1087 = vmatpush.bf16.msra.mxu0 %v1070
    %1088 = vmatpush.bf16.msra.mxu0 %v1069
    %1089 = vmatpush.bf16.msra.mxu0 %v1068
    %1090 = vmatpush.bf16.msra.mxu0 %v1067
    %1091 = vmatmul.bf16.gmra.mxu0 %v289
    %v1092 = vpop.f32.mrf.mxu0
    %v1093 = vadd.f32 0.0, %v1092
    %v1094 = vpop.f32.mrf.mxu0
    %v1095 = vadd.f32 0.0, %v1094
    %1096 = vdwg.mxu0
    %v1113 = vunpack.c.l.b16 %v237
    %v1114 = vunpack.c.l.b16 %v238
    %v1115 = vunpack.c.l.b16 %v239
    %v1116 = vunpack.c.l.b16 %v240
    %v1117 = vunpack.c.l.b16 %v241
    %v1118 = vunpack.c.l.b16 %v242
    %v1119 = vunpack.c.l.b16 %v243
    %v1120 = vunpack.c.l.b16 %v244
    %v1121 = vunpack.c.l.b16 %v245
    %v1122 = vunpack.c.l.b16 %v246
    %v1123 = vunpack.c.l.b16 %v247
    %v1124 = vunpack.c.l.b16 %v248
    %v1125 = vunpack.c.l.b16 %v249
    %v1126 = vunpack.c.l.b16 %v250
    %v1127 = vunpack.c.l.b16 %v251
    %v1128 = vunpack.c.l.b16 %v252
    %v1129 = vpack.c.b16 %v1114, %v1113
    %v1130 = vpack.c.b16 %v1116, %v1115
    %v1131 = vpack.c.b16 %v1118, %v1117
    %v1132 = vpack.c.b16 %v1120, %v1119
    %v1133 = vpack.c.b16 %v1122, %v1121
    %v1134 = vpack.c.b16 %v1124, %v1123
    %v1135 = vpack.c.b16 %v1126, %v1125
    %v1136 = vpack.c.b16 %v1128, %v1127
    %1145 = vmatpush.bf16.msra.mxu0 %v1136
    %1146 = vmatpush.bf16.msra.mxu0 %v1135
    %1147 = vmatpush.bf16.msra.mxu0 %v1134
    %1148 = vmatpush.bf16.msra.mxu0 %v1133
    %1149 = vmatpush.bf16.msra.mxu0 %v1132
    %1150 = vmatpush.bf16.msra.mxu0 %v1131
    %1151 = vmatpush.bf16.msra.mxu0 %v1130
    %1152 = vmatpush.bf16.msra.mxu0 %v1129
    %1153 = vmatmul.bf16.gmra.mxu0 %v289
    %v1154 = vpop.f32.mrf.mxu0
    %v1155 = vadd.f32 0.0, %v1154
    %v1156 = vpop.f32.mrf.mxu0
    %v1157 = vadd.f32 0.0, %v1156
    %1158 = vdwg.mxu0
    %v1175 = vunpack.c.l.b16 %v253
    %v1176 = vunpack.c.l.b16 %v254
    %v1177 = vunpack.c.l.b16 %v255
    %v1178 = vunpack.c.l.b16 %v256
    %v1179 = vunpack.c.l.b16 %v257
    %v1180 = vunpack.c.l.b16 %v258
    %v1181 = vunpack.c.l.b16 %v259
    %v1182 = vunpack.c.l.b16 %v260
    %v1183 = vunpack.c.l.b16 %v261
    %v1184 = vunpack.c.l.b16 %v262
    %v1185 = vunpack.c.l.b16 %v263
    %v1186 = vunpack.c.l.b16 %v264
    %v1187 = vunpack.c.l.b16 %v265
    %v1188 = vunpack.c.l.b16 %v266
    %v1189 = vunpack.c.l.b16 %v267
    %v1190 = vunpack.c.l.b16 %v268
    %v1191 = vpack.c.b16 %v1176, %v1175
    %v1192 = vpack.c.b16 %v1178, %v1177
    %v1193 = vpack.c.b16 %v1180, %v1179
    %v1194 = vpack.c.b16 %v1182, %v1181
    %v1195 = vpack.c.b16 %v1184, %v1183
    %v1196 = vpack.c.b16 %v1186, %v1185
    %v1197 = vpack.c.b16 %v1188, %v1187
    %v1198 = vpack.c.b16 %v1190, %v1189
    %1207 = vmatpush.bf16.msra.mxu0 %v1198
    %1208 = vmatpush.bf16.msra.mxu0 %v1197
    %1209 = vmatpush.bf16.msra.mxu0 %v1196
    %1210 = vmatpush.bf16.msra.mxu0 %v1195
    %1211 = vmatpush.bf16.msra.mxu0 %v1194
    %1212 = vmatpush.bf16.msra.mxu0 %v1193
    %1213 = vmatpush.bf16.msra.mxu0 %v1192
    %1214 = vmatpush.bf16.msra.mxu0 %v1191
    %1215 = vmatmul.bf16.gmra.mxu0 %v289
    %v1216 = vpop.f32.mrf.mxu0
    %v1217 = vadd.f32 0.0, %v1216
    %v1218 = vpop.f32.mrf.mxu0
    %v1219 = vadd.f32 0.0, %v1218
    %1220 = vdwg.mxu0
    %v1237 = vunpack.c.l.b16 %v269
    %v1238 = vunpack.c.l.b16 %v270
    %v1239 = vunpack.c.l.b16 %v271
    %v1240 = vunpack.c.l.b16 %v272
    %v1241 = vunpack.c.l.b16 %v273
    %v1242 = vunpack.c.l.b16 %v274
    %v1243 = vunpack.c.l.b16 %v275
    %v1244 = vunpack.c.l.b16 %v276
    %v1245 = vunpack.c.l.b16 %v277
    %v1246 = vunpack.c.l.b16 %v278
    %v1247 = vunpack.c.l.b16 %v279
    %v1248 = vunpack.c.l.b16 %v280
    %v1249 = vunpack.c.l.b16 %v281
    %v1250 = vunpack.c.l.b16 %v282
    %v1251 = vunpack.c.l.b16 %v283
    %v1252 = vunpack.c.l.b16 %v284
    %v1253 = vpack.c.b16 %v1238, %v1237
    %v1254 = vpack.c.b16 %v1240, %v1239
    %v1255 = vpack.c.b16 %v1242, %v1241
    %v1256 = vpack.c.b16 %v1244, %v1243
    %v1257 = vpack.c.b16 %v1246, %v1245
    %v1258 = vpack.c.b16 %v1248, %v1247
    %v1259 = vpack.c.b16 %v1250, %v1249
    %v1260 = vpack.c.b16 %v1252, %v1251
    %1269 = vmatpush.bf16.msra.mxu0 %v1260
    %1270 = vmatpush.bf16.msra.mxu0 %v1259
    %1271 = vmatpush.bf16.msra.mxu0 %v1258
    %1272 = vmatpush.bf16.msra.mxu0 %v1257
    %1273 = vmatpush.bf16.msra.mxu0 %v1256
    %1274 = vmatpush.bf16.msra.mxu0 %v1255
    %1275 = vmatpush.bf16.msra.mxu0 %v1254
    %1276 = vmatpush.bf16.msra.mxu0 %v1253
    %1277 = vmatmul.bf16.gmra.mxu0 %v289
    %v1278 = vpop.f32.mrf.mxu0
    %v1279 = vadd.f32 0.0, %v1278
    %v1280 = vpop.f32.mrf.mxu0
    %v1281 = vadd.f32 0.0, %v1280
    %1282 = vdwg.mxu0
    %v1283 = vadd.f32 %v349, %v351
    %v1284 = vadd.f32 %v1283, %v411
    %v1285 = vadd.f32 %v1284, %v413
    %v1286 = vadd.f32 %v1285, %v473
    %v1287 = vadd.f32 %v1286, %v475
    %v1288 = vadd.f32 %v1287, %v535
    %v1289 = vadd.f32 %v1288, %v537
    %v1290 = vadd.f32 %v1289, %v597
    %v1291 = vadd.f32 %v1290, %v599
    %v1292 = vadd.f32 %v1291, %v659
    %v1293 = vadd.f32 %v1292, %v661
    %v1294 = vadd.f32 %v1293, %v721
    %v1295 = vadd.f32 %v1294, %v723
    %v1296 = vadd.f32 %v1295, %v783
    %v1297 = vadd.f32 %v1296, %v785
    %v1298 = vadd.f32 %v1297, %v845
    %v1299 = vadd.f32 %v1298, %v847
    %v1300 = vadd.f32 %v1299, %v907
    %v1301 = vadd.f32 %v1300, %v909
    %v1302 = vadd.f32 %v1301, %v969
    %v1303 = vadd.f32 %v1302, %v971
    %v1304 = vadd.f32 %v1303, %v1031
    %v1305 = vadd.f32 %v1304, %v1033
    %v1306 = vadd.f32 %v1305, %v1093
    %v1307 = vadd.f32 %v1306, %v1095
    %v1308 = vadd.f32 %v1307, %v1155
    %v1309 = vadd.f32 %v1308, %v1157
    %v1310 = vadd.f32 %v1309, %v1217
    %v1311 = vadd.f32 %v1310, %v1219
    %v1312 = vadd.f32 %v1311, %v1279
    %v1313 = vadd.f32 %v1312, %v1281
    %v1314 = vrot.slane %v1313, 4
    %v1315 = vadd.f32 %v1313, %v1314
    %v1316 = vrot.slane %v1315, 2
    %v1317 = vadd.f32 %v1315, %v1316
    %v1318 = vrot.slane %v1317, 1
    %v1319 = vadd.f32 %v1317, %v1318
    %v1320 = vmul.f32 %v349, %v349
    %v1321 = vmul.f32 %v351, %v351
    %v1322 = vmul.f32 %v411, %v411
    %v1323 = vmul.f32 %v413, %v413
    %v1324 = vmul.f32 %v473, %v473
    %v1325 = vmul.f32 %v475, %v475
    %v1326 = vmul.f32 %v535, %v535
    %v1327 = vmul.f32 %v537, %v537
    %v1328 = vmul.f32 %v597, %v597
    %v1329 = vmul.f32 %v599, %v599
    %v1330 = vmul.f32 %v659, %v659
    %v1331 = vmul.f32 %v661, %v661
    %v1332 = vmul.f32 %v721, %v721
    %v1333 = vmul.f32 %v723, %v723
    %v1334 = vmul.f32 %v783, %v783
    %v1335 = vmul.f32 %v785, %v785
    %v1336 = vmul.f32 %v845, %v845
    %v1337 = vmul.f32 %v847, %v847
    %v1338 = vmul.f32 %v907, %v907
    %v1339 = vmul.f32 %v909, %v909
    %v1340 = vmul.f32 %v969, %v969
    %v1341 = vmul.f32 %v971, %v971
    %v1342 = vmul.f32 %v1031, %v1031
    %v1343 = vmul.f32 %v1033, %v1033
    %v1344 = vmul.f32 %v1093, %v1093
    %v1345 = vmul.f32 %v1095, %v1095
    %v1346 = vmul.f32 %v1155, %v1155
    %v1347 = vmul.f32 %v1157, %v1157
    %v1348 = vmul.f32 %v1217, %v1217
    %v1349 = vmul.f32 %v1219, %v1219
    %v1350 = vmul.f32 %v1279, %v1279
    %v1351 = vmul.f32 %v1281, %v1281
    %v1352 = vadd.f32 %v1320, %v1321
    %v1353 = vadd.f32 %v1352, %v1322
    %v1354 = vadd.f32 %v1353, %v1323
    %v1355 = vadd.f32 %v1354, %v1324
    %v1356 = vadd.f32 %v1355, %v1325
    %v1357 = vadd.f32 %v1356, %v1326
    %v1358 = vadd.f32 %v1357, %v1327
    %v1359 = vadd.f32 %v1358, %v1328
    %v1360 = vadd.f32 %v1359, %v1329
    %v1361 = vadd.f32 %v1360, %v1330
    %v1362 = vadd.f32 %v1361, %v1331
    %v1363 = vadd.f32 %v1362, %v1332
    %v1364 = vadd.f32 %v1363, %v1333
    %v1365 = vadd.f32 %v1364, %v1334
    %v1366 = vadd.f32 %v1365, %v1335
    %v1367 = vadd.f32 %v1366, %v1336
    %v1368 = vadd.f32 %v1367, %v1337
    %v1369 = vadd.f32 %v1368, %v1338
    %v1370 = vadd.f32 %v1369, %v1339
    %v1371 = vadd.f32 %v1370, %v1340
    %v1372 = vadd.f32 %v1371, %v1341
    %v1373 = vadd.f32 %v1372, %v1342
    %v1374 = vadd.f32 %v1373, %v1343
    %v1375 = vadd.f32 %v1374, %v1344
    %v1376 = vadd.f32 %v1375, %v1345
    %v1377 = vadd.f32 %v1376, %v1346
    %v1378 = vadd.f32 %v1377, %v1347
    %v1379 = vadd.f32 %v1378, %v1348
    %v1380 = vadd.f32 %v1379, %v1349
    %v1381 = vadd.f32 %v1380, %v1350
    %v1382 = vadd.f32 %v1381, %v1351
    %v1383 = vrot.slane %v1382, 4
    %v1384 = vadd.f32 %v1382, %v1383
    %v1385 = vrot.slane %v1384, 2
    %v1386 = vadd.f32 %v1384, %v1385
    %v1387 = vrot.slane %v1386, 1
    %v1388 = vadd.f32 %v1386, %v1387
    %v1389 = vmul.f32 %v1319, 0.03125
    %v1390 = vmul.f32 %v1388, 0.03125
    %v1391 = vmul.f32 %v1389, %v1389
    %v1392 = vsub.f32 %v1390, %v1391
    %v1393 = vmax.f32 %v1392, 0.0
    %v1394 = vsub.f32 %v349, %v1389
    %v1395 = vsub.f32 %v351, %v1389
    %v1396 = vsub.f32 %v411, %v1389
    %v1397 = vsub.f32 %v413, %v1389
    %v1398 = vsub.f32 %v473, %v1389
    %v1399 = vsub.f32 %v475, %v1389
    %v1400 = vsub.f32 %v535, %v1389
    %v1401 = vsub.f32 %v537, %v1389
    %v1402 = vsub.f32 %v597, %v1389
    %v1403 = vsub.f32 %v599, %v1389
    %v1404 = vsub.f32 %v659, %v1389
    %v1405 = vsub.f32 %v661, %v1389
    %v1406 = vsub.f32 %v721, %v1389
    %v1407 = vsub.f32 %v723, %v1389
    %v1408 = vsub.f32 %v783, %v1389
    %v1409 = vsub.f32 %v785, %v1389
    %v1410 = vsub.f32 %v845, %v1389
    %v1411 = vsub.f32 %v847, %v1389
    %v1412 = vsub.f32 %v907, %v1389
    %v1413 = vsub.f32 %v909, %v1389
    %v1414 = vsub.f32 %v969, %v1389
    %v1415 = vsub.f32 %v971, %v1389
    %v1416 = vsub.f32 %v1031, %v1389
    %v1417 = vsub.f32 %v1033, %v1389
    %v1418 = vsub.f32 %v1093, %v1389
    %v1419 = vsub.f32 %v1095, %v1389
    %v1420 = vsub.f32 %v1155, %v1389
    %v1421 = vsub.f32 %v1157, %v1389
    %v1422 = vsub.f32 %v1217, %v1389
    %v1423 = vsub.f32 %v1219, %v1389
    %v1424 = vsub.f32 %v1279, %v1389
    %v1425 = vsub.f32 %v1281, %v1389
    %v1426 = vadd.f32 %v1393, 1e-05
    %v1427 = vrsqrt.pop %v1426
    %v1428 = vmul.f32 %v1427, %v1426
    %v1429 = vmul.f32 %v1428, %v1427
    %v1430 = vmul.f32 0.5, %v1429
    %v1431 = vsub.f32 1.5, %v1430
    %v1432 = vmul.f32 %v1427, %v1431
    %vm1433 = vweird.f32 %v1426
    %vm1434 = vweird.f32 %v1427
    %vm1435 = vmor %vm1433, %vm1434
    %v1436 = vsel %vm1435, %v1427, %v1432
    %v1437 = vmul.f32 %v1394, %v1436
    %v1438 = vmul.f32 %v1395, %v1436
    %v1439 = vmul.f32 %v1396, %v1436
    %v1440 = vmul.f32 %v1397, %v1436
    %v1441 = vmul.f32 %v1398, %v1436
    %v1442 = vmul.f32 %v1399, %v1436
    %v1443 = vmul.f32 %v1400, %v1436
    %v1444 = vmul.f32 %v1401, %v1436
    %v1445 = vmul.f32 %v1402, %v1436
    %v1446 = vmul.f32 %v1403, %v1436
    %v1447 = vmul.f32 %v1404, %v1436
    %v1448 = vmul.f32 %v1405, %v1436
    %v1449 = vmul.f32 %v1406, %v1436
    %v1450 = vmul.f32 %v1407, %v1436
    %v1451 = vmul.f32 %v1408, %v1436
    %v1452 = vmul.f32 %v1409, %v1436
    %v1453 = vmul.f32 %v1410, %v1436
    %v1454 = vmul.f32 %v1411, %v1436
    %v1455 = vmul.f32 %v1412, %v1436
    %v1456 = vmul.f32 %v1413, %v1436
    %v1457 = vmul.f32 %v1414, %v1436
    %v1458 = vmul.f32 %v1415, %v1436
    %v1459 = vmul.f32 %v1416, %v1436
    %v1460 = vmul.f32 %v1417, %v1436
    %v1461 = vmul.f32 %v1418, %v1436
    %v1462 = vmul.f32 %v1419, %v1436
    %v1463 = vmul.f32 %v1420, %v1436
    %v1464 = vmul.f32 %v1421, %v1436
    %v1465 = vmul.f32 %v1422, %v1436
    %v1466 = vmul.f32 %v1423, %v1436
    %v1467 = vmul.f32 %v1424, %v1436
    %v1468 = vmul.f32 %v1425, %v1436
    %v1469 = vmax.f32 %v1437, 0.0
    %v1470 = vmax.f32 %v1438, 0.0
    %v1471 = vmax.f32 %v1439, 0.0
    %v1472 = vmax.f32 %v1440, 0.0
    %v1473 = vmax.f32 %v1441, 0.0
    %v1474 = vmax.f32 %v1442, 0.0
    %v1475 = vmax.f32 %v1443, 0.0
    %v1476 = vmax.f32 %v1444, 0.0
    %v1477 = vmax.f32 %v1445, 0.0
    %v1478 = vmax.f32 %v1446, 0.0
    %v1479 = vmax.f32 %v1447, 0.0
    %v1480 = vmax.f32 %v1448, 0.0
    %v1481 = vmax.f32 %v1449, 0.0
    %v1482 = vmax.f32 %v1450, 0.0
    %v1483 = vmax.f32 %v1451, 0.0
    %v1484 = vmax.f32 %v1452, 0.0
    %v1485 = vmax.f32 %v1453, 0.0
    %v1486 = vmax.f32 %v1454, 0.0
    %v1487 = vmax.f32 %v1455, 0.0
    %v1488 = vmax.f32 %v1456, 0.0
    %v1489 = vmax.f32 %v1457, 0.0
    %v1490 = vmax.f32 %v1458, 0.0
    %v1491 = vmax.f32 %v1459, 0.0
    %v1492 = vmax.f32 %v1460, 0.0
    %v1493 = vmax.f32 %v1461, 0.0
    %v1494 = vmax.f32 %v1462, 0.0
    %v1495 = vmax.f32 %v1463, 0.0
    %v1496 = vmax.f32 %v1464, 0.0
    %v1497 = vmax.f32 %v1465, 0.0
    %v1498 = vmax.f32 %v1466, 0.0
    %v1499 = vmax.f32 %v1467, 0.0
    %v1500 = vmax.f32 %v1468, 0.0
    %v1501 = vpack.c.bf16 %v1469, %v1469
    %v1502 = vpack.c.bf16 %v1470, %v1470
    %v1503 = vpack.c.bf16 %v1471, %v1471
    %v1504 = vpack.c.bf16 %v1472, %v1472
    %v1505 = vpack.c.bf16 %v1473, %v1473
    %v1506 = vpack.c.bf16 %v1474, %v1474
    %v1507 = vpack.c.bf16 %v1475, %v1475
    %v1508 = vpack.c.bf16 %v1476, %v1476
    %v1509 = vpack.c.bf16 %v1477, %v1477
    %v1510 = vpack.c.bf16 %v1478, %v1478
    %v1511 = vpack.c.bf16 %v1479, %v1479
    %v1512 = vpack.c.bf16 %v1480, %v1480
    %v1513 = vpack.c.bf16 %v1481, %v1481
    %v1514 = vpack.c.bf16 %v1482, %v1482
    %v1515 = vpack.c.bf16 %v1483, %v1483
    %v1516 = vpack.c.bf16 %v1484, %v1484
    %v1517 = vpack.c.bf16 %v1485, %v1485
    %v1518 = vpack.c.bf16 %v1486, %v1486
    %v1519 = vpack.c.bf16 %v1487, %v1487
    %v1520 = vpack.c.bf16 %v1488, %v1488
    %v1521 = vpack.c.bf16 %v1489, %v1489
    %v1522 = vpack.c.bf16 %v1490, %v1490
    %v1523 = vpack.c.bf16 %v1491, %v1491
    %v1524 = vpack.c.bf16 %v1492, %v1492
    %v1525 = vpack.c.bf16 %v1493, %v1493
    %v1526 = vpack.c.bf16 %v1494, %v1494
    %v1527 = vpack.c.bf16 %v1495, %v1495
    %v1528 = vpack.c.bf16 %v1496, %v1496
    %v1529 = vpack.c.bf16 %v1497, %v1497
    %v1530 = vpack.c.bf16 %v1498, %v1498
    %v1531 = vpack.c.bf16 %v1499, %v1499
    %v1532 = vpack.c.bf16 %v1500, %v1500
    %1533 = vst [vmem:[%s2] sm:$0xf] %v1501
    %1534 = vst [vmem:[%s2 + $0x4] sm:$0xf] %v1502
    %1535 = vst [vmem:[%s2 + $0x8] sm:$0xf] %v1503
    %1536 = vst [vmem:[%s2 + $0xc] sm:$0xf] %v1504
    %1537 = vst [vmem:[%s2 + $0x10] sm:$0xf] %v1505
    %1538 = vst [vmem:[%s2 + $0x14] sm:$0xf] %v1506
    %1539 = vst [vmem:[%s2 + $0x18] sm:$0xf] %v1507
    %1540 = vst [vmem:[%s2 + $0x1c] sm:$0xf] %v1508
    %1541 = vst [vmem:[%s2 + $0x20] sm:$0xf] %v1509
    %1542 = vst [vmem:[%s2 + $0x24] sm:$0xf] %v1510
    %1543 = vst [vmem:[%s2 + $0x28] sm:$0xf] %v1511
    %1544 = vst [vmem:[%s2 + $0x2c] sm:$0xf] %v1512
    %1545 = vst [vmem:[%s2 + $0x30] sm:$0xf] %v1513
    %1546 = vst [vmem:[%s2 + $0x34] sm:$0xf] %v1514
    %1547 = vst [vmem:[%s2 + $0x38] sm:$0xf] %v1515
    %1548 = vst [vmem:[%s2 + $0x3c] sm:$0xf] %v1516
    %1549 = vst [vmem:[%s2 + $0x40] sm:$0xf] %v1517
    %1550 = vst [vmem:[%s2 + $0x44] sm:$0xf] %v1518
    %1551 = vst [vmem:[%s2 + $0x48] sm:$0xf] %v1519
    %1552 = vst [vmem:[%s2 + $0x4c] sm:$0xf] %v1520
    %1553 = vst [vmem:[%s2 + $0x50] sm:$0xf] %v1521
    %1554 = vst [vmem:[%s2 + $0x54] sm:$0xf] %v1522
    %1555 = vst [vmem:[%s2 + $0x58] sm:$0xf] %v1523
    %1556 = vst [vmem:[%s2 + $0x5c] sm:$0xf] %v1524
    %1557 = vst [vmem:[%s2 + $0x60] sm:$0xf] %v1525
    %1558 = vst [vmem:[%s2 + $0x64] sm:$0xf] %v1526
    %1559 = vst [vmem:[%s2 + $0x68] sm:$0xf] %v1527
    %1560 = vst [vmem:[%s2 + $0x6c] sm:$0xf] %v1528
    %1561 = vst [vmem:[%s2 + $0x70] sm:$0xf] %v1529
    %1562 = vst [vmem:[%s2 + $0x74] sm:$0xf] %v1530
    %1563 = vst [vmem:[%s2 + $0x78] sm:$0xf] %v1531
    %1564 = vst [vmem:[%s2 + $0x7c] sm:$0xf] %v1532
    // Predicated region
    $region14: #{_lambda_.4} parent=1 // pred_check
      _
    $region15: #{_lambda_.4} parent=1 // pred_check_branch
      %1566 = sbr.rel (0) target = $region17
    $region16: #{_lambda_.4} parent=1 // pred_region
      _
    $region17: #{_lambda_.4} parent=1 // pred_fallthru
      _
    // Predicated region
    $region18: #{_lambda_.4} parent=1 // pred_check
      _
    $region19: #{_lambda_.4} parent=1 // pred_check_branch
      %1568 = sbr.rel (0) target = $region21
    $region20: #{_lambda_.4} parent=1 // pred_region
      _
    $region21: #{_lambda_.4} parent=1 // pred_fallthru
      _
    %1569 = vsyncpa [#allocation3], 1

// kernel: _lambda_.6
$region0: #{_lambda_.6}
  #allocation0 [shape = 'u32[]', space=smem, size = 0x4, offset = 0x4, fixed_abs, tag = 'smem constant byte address 0x4 - core index']
  #allocation1 [shape = 'u32[72,128]{1,0:T(1,128)}', space=vmem, size = 0x9000, scoped, tag = 'internal scratch']
  %s0 = inlined_call_operand.vmem [shape: bf16[4,128,128], index: 0, kind: input, shape index: {}]
  %s1 = inlined_call_operand.vmem [shape: bf16[4,128,128], index: 1, kind: input, shape index: {}]
  %s2 = inlined_call_operand.vmem [shape: bf16[4,128,128], index: 2, kind: output, shape index: {}]
  %s3 = sld [smem:[#allocation0]]
  $region18: #{_lambda_.6} parent=0
    _
  %s5 = ssub.s32 1, %s3
  %s6 = scalar_select 0, %s5, %s3
  // Predicated region
  $region2: #{_lambda_.6} parent=0 // pred_check
    _
  $region3: #{_lambda_.6} parent=0 // pred_check_branch
    %8 = sbr.rel (0) target = $region5
  $region4: #{_lambda_.6} parent=0 // pred_region
    _
  $region5: #{_lambda_.6} parent=0 // pred_fallthru
    _
  // Predicated region
  $region6: #{_lambda_.6} parent=0 // pred_check
    _
  $region7: #{_lambda_.6} parent=0 // pred_check_branch
    %10 = sbr.rel (0) target = $region9
  $region8: #{_lambda_.6} parent=0 // pred_region
    _
  $region9: #{_lambda_.6} parent=0 // pred_fallthru
    _
  %v11 = vld [vmem:[%s0] sm:$0xf]
  %v12 = vld [vmem:[%s0 + $0x4] sm:$0xf]
  %v13 = vld [vmem:[%s0 + $0x8] sm:$0xf]
  %v14 = vld [vmem:[%s0 + $0xc] sm:$0xf]
  %v15 = vld [vmem:[%s0 + $0x10] sm:$0xf]
  %v16 = vld [vmem:[%s0 + $0x14] sm:$0xf]
  %v17 = vld [vmem:[%s0 + $0x18] sm:$0xf]
  %v18 = vld [vmem:[%s0 + $0x1c] sm:$0xf]
  %v19 = vld [vmem:[%s0 + $0x20] sm:$0xf]
  %v20 = vld [vmem:[%s0 + $0x24] sm:$0xf]
  %v21 = vld [vmem:[%s0 + $0x28] sm:$0xf]
  %v22 = vld [vmem:[%s0 + $0x2c] sm:$0xf]
  %v23 = vld [vmem:[%s0 + $0x30] sm:$0xf]
  %v24 = vld [vmem:[%s0 + $0x34] sm:$0xf]
  %v25 = vld [vmem:[%s0 + $0x38] sm:$0xf]
  %v26 = vld [vmem:[%s0 + $0x3c] sm:$0xf]
  %v27 = vld [vmem:[%s0 + $0x40] sm:$0xf]
  %v28 = vld [vmem:[%s0 + $0x44] sm:$0xf]
  %v29 = vld [vmem:[%s0 + $0x48] sm:$0xf]
  %v30 = vld [vmem:[%s0 + $0x4c] sm:$0xf]
  %v31 = vld [vmem:[%s0 + $0x50] sm:$0xf]
  %v32 = vld [vmem:[%s0 + $0x54] sm:$0xf]
  %v33 = vld [vmem:[%s0 + $0x58] sm:$0xf]
  %v34 = vld [vmem:[%s0 + $0x5c] sm:$0xf]
  %v35 = vld [vmem:[%s0 + $0x60] sm:$0xf]
  %v36 = vld [vmem:[%s0 + $0x64] sm:$0xf]
  %v37 = vld [vmem:[%s0 + $0x68] sm:$0xf]
  %v38 = vld [vmem:[%s0 + $0x6c] sm:$0xf]
  %v39 = vld [vmem:[%s0 + $0x70] sm:$0xf]
  %v40 = vld [vmem:[%s0 + $0x74] sm:$0xf]
  %v41 = vld [vmem:[%s0 + $0x78] sm:$0xf]
  %v42 = vld [vmem:[%s0 + $0x7c] sm:$0xf]
  %v43 = vld [vmem:[%s0 + $0x80] sm:$0xf]
  %v44 = vld [vmem:[%s0 + $0x84] sm:$0xf]
  %v45 = vld [vmem:[%s0 + $0x88] sm:$0xf]
  %v46 = vld [vmem:[%s0 + $0x8c] sm:$0xf]
  %v47 = vld [vmem:[%s0 + $0x90] sm:$0xf]
  %v48 = vld [vmem:[%s0 + $0x94] sm:$0xf]
  %v49 = vld [vmem:[%s0 + $0x98] sm:$0xf]
  %v50 = vld [vmem:[%s0 + $0x9c] sm:$0xf]
  %v51 = vld [vmem:[%s0 + $0xa0] sm:$0xf]
  %v52 = vld [vmem:[%s0 + $0xa4] sm:$0xf]
  %v53 = vld [vmem:[%s0 + $0xa8] sm:$0xf]
  %v54 = vld [vmem:[%s0 + $0xac] sm:$0xf]
  %v55 = vld [vmem:[%s0 + $0xb0] sm:$0xf]
  %v56 = vld [vmem:[%s0 + $0xb4] sm:$0xf]
  %v57 = vld [vmem:[%s0 + $0xb8] sm:$0xf]
  %v58 = vld [vmem:[%s0 + $0xbc] sm:$0xf]
  %v59 = vld [vmem:[%s0 + $0xc0] sm:$0xf]
  %v60 = vld [vmem:[%s0 + $0xc4] sm:$0xf]
  %v61 = vld [vmem:[%s0 + $0xc8] sm:$0xf]
  %v62 = vld [vmem:[%s0 + $0xcc] sm:$0xf]
  %v63 = vld [vmem:[%s0 + $0xd0] sm:$0xf]
  %v64 = vld [vmem:[%s0 + $0xd4] sm:$0xf]
  %v65 = vld [vmem:[%s0 + $0xd8] sm:$0xf]
  %v66 = vld [vmem:[%s0 + $0xdc] sm:$0xf]
  %v67 = vld [vmem:[%s0 + $0xe0] sm:$0xf]
  %v68 = vld [vmem:[%s0 + $0xe4] sm:$0xf]
  %v69 = vld [vmem:[%s0 + $0xe8] sm:$0xf]
  %v70 = vld [vmem:[%s0 + $0xec] sm:$0xf]
  %v71 = vld [vmem:[%s0 + $0xf0] sm:$0xf]
  %v72 = vld [vmem:[%s0 + $0xf4] sm:$0xf]
  %v73 = vld [vmem:[%s0 + $0xf8] sm:$0xf]
  %v74 = vld [vmem:[%s0 + $0xfc] sm:$0xf]
  %v75 = vld [vmem:[%s1] sm:$0xf]
  %v76 = vld [vmem:[%s1 + $0x4] sm:$0xf]
  %v77 = vld [vmem:[%s1 + $0x8] sm:$0xf]
  %v78 = vld [vmem:[%s1 + $0xc] sm:$0xf]
  %v79 = vld [vmem:[%s1 + $0x10] sm:$0xf]
  %v80 = vld [vmem:[%s1 + $0x14] sm:$0xf]
  %v81 = vld [vmem:[%s1 + $0x18] sm:$0xf]
  %v82 = vld [vmem:[%s1 + $0x1c] sm:$0xf]
  %v83 = vld [vmem:[%s1 + $0x20] sm:$0xf]
  %v84 = vld [vmem:[%s1 + $0x24] sm:$0xf]
  %v85 = vld [vmem:[%s1 + $0x28] sm:$0xf]
  %v86 = vld [vmem:[%s1 + $0x2c] sm:$0xf]
  %v87 = vld [vmem:[%s1 + $0x30] sm:$0xf]
  %v88 = vld [vmem:[%s1 + $0x34] sm:$0xf]
  %v89 = vld [vmem:[%s1 + $0x38] sm:$0xf]
  %v90 = vld [vmem:[%s1 + $0x3c] sm:$0xf]
  %v91 = vld [vmem:[%s1 + $0x40] sm:$0xf]
  %v92 = vld [vmem:[%s1 + $0x44] sm:$0xf]
  %v93 = vld [vmem:[%s1 + $0x48] sm:$0xf]
  %v94 = vld [vmem:[%s1 + $0x4c] sm:$0xf]
  %v95 = vld [vmem:[%s1 + $0x50] sm:$0xf]
  %v96 = vld [vmem:[%s1 + $0x54] sm:$0xf]
  %v97 = vld [vmem:[%s1 + $0x58] sm:$0xf]
  %v98 = vld [vmem:[%s1 + $0x5c] sm:$0xf]
  %v99 = vld [vmem:[%s1 + $0x60] sm:$0xf]
  %v100 = vld [vmem:[%s1 + $0x64] sm:$0xf]
  %v101 = vld [vmem:[%s1 + $0x68] sm:$0xf]
  %v102 = vld [vmem:[%s1 + $0x6c] sm:$0xf]
  %v103 = vld [vmem:[%s1 + $0x70] sm:$0xf]
  %v104 = vld [vmem:[%s1 + $0x74] sm:$0xf]
  %v105 = vld [vmem:[%s1 + $0x78] sm:$0xf]
  %v106 = vld [vmem:[%s1 + $0x7c] sm:$0xf]
  %v107 = vld [vmem:[%s1 + $0x80] sm:$0xf]
  %v108 = vld [vmem:[%s1 + $0x84] sm:$0xf]
  %v109 = vld [vmem:[%s1 + $0x88] sm:$0xf]
  %v110 = vld [vmem:[%s1 + $0x8c] sm:$0xf]
  %v111 = vld [vmem:[%s1 + $0x90] sm:$0xf]
  %v112 = vld [vmem:[%s1 + $0x94] sm:$0xf]
  %v113 = vld [vmem:[%s1 + $0x98] sm:$0xf]
  %v114 = vld [vmem:[%s1 + $0x9c] sm:$0xf]
  %v115 = vld [vmem:[%s1 + $0xa0] sm:$0xf]
  %v116 = vld [vmem:[%s1 + $0xa4] sm:$0xf]
  %v117 = vld [vmem:[%s1 + $0xa8] sm:$0xf]
  %v118 = vld [vmem:[%s1 + $0xac] sm:$0xf]
  %v119 = vld [vmem:[%s1 + $0xb0] sm:$0xf]
  %v120 = vld [vmem:[%s1 + $0xb4] sm:$0xf]
  %v121 = vld [vmem:[%s1 + $0xb8] sm:$0xf]
  %v122 = vld [vmem:[%s1 + $0xbc] sm:$0xf]
  %v123 = vld [vmem:[%s1 + $0xc0] sm:$0xf]
  %v124 = vld [vmem:[%s1 + $0xc4] sm:$0xf]
  %v125 = vld [vmem:[%s1 + $0xc8] sm:$0xf]
  %v126 = vld [vmem:[%s1 + $0xcc] sm:$0xf]
  %v127 = vld [vmem:[%s1 + $0xd0] sm:$0xf]
  %v128 = vld [vmem:[%s1 + $0xd4] sm:$0xf]
  %v129 = vld [vmem:[%s1 + $0xd8] sm:$0xf]
  %v130 = vld [vmem:[%s1 + $0xdc] sm:$0xf]
  %v131 = vld [vmem:[%s1 + $0xe0] sm:$0xf]
  %v132 = vld [vmem:[%s1 + $0xe4] sm:$0xf]
  %v133 = vld [vmem:[%s1 + $0xe8] sm:$0xf]
  %v134 = vld [vmem:[%s1 + $0xec] sm:$0xf]
  %v135 = vld [vmem:[%s1 + $0xf0] sm:$0xf]
  %v136 = vld [vmem:[%s1 + $0xf4] sm:$0xf]
  %v137 = vld [vmem:[%s1 + $0xf8] sm:$0xf]
  %v138 = vld [vmem:[%s1 + $0xfc] sm:$0xf]
  %v155 = vunpack.c.l.b16 %v11
  %v156 = vunpack.c.l.b16 %v12
  %v157 = vunpack.c.l.b16 %v13
  %v158 = vunpack.c.l.b16 %v14
  %v159 = vunpack.c.l.b16 %v15
  %v160 = vunpack.c.l.b16 %v16
  %v161 = vunpack.c.l.b16 %v17
  %v162 = vunpack.c.l.b16 %v18
  %v163 = vunpack.c.l.b16 %v19
  %v164 = vunpack.c.l.b16 %v20
  %v165 = vunpack.c.l.b16 %v21
  %v166 = vunpack.c.l.b16 %v22
  %v167 = vunpack.c.l.b16 %v23
  %v168 = vunpack.c.l.b16 %v24
  %v169 = vunpack.c.l.b16 %v25
  %v170 = vunpack.c.l.b16 %v26
  %v171 = vpack.c.b16 %v156, %v155
  %v172 = vpack.c.b16 %v158, %v157
  %v173 = vpack.c.b16 %v160, %v159
  %v174 = vpack.c.b16 %v162, %v161
  %v175 = vpack.c.b16 %v164, %v163
  %v176 = vpack.c.b16 %v166, %v165
  %v177 = vpack.c.b16 %v168, %v167
  %v178 = vpack.c.b16 %v170, %v169
  %v203 = vunpack.c.l.b16 %v75
  %v204 = vunpack.c.l.b16 %v76
  %v205 = vunpack.c.l.b16 %v77
  %v206 = vunpack.c.l.b16 %v78
  %v207 = vunpack.c.l.b16 %v79
  %v208 = vunpack.c.l.b16 %v80
  %v209 = vunpack.c.l.b16 %v81
  %v210 = vunpack.c.l.b16 %v82
  %v211 = vunpack.c.l.b16 %v83
  %v212 = vunpack.c.l.b16 %v84
  %v213 = vunpack.c.l.b16 %v85
  %v214 = vunpack.c.l.b16 %v86
  %v215 = vunpack.c.l.b16 %v87
  %v216 = vunpack.c.l.b16 %v88
  %v217 = vunpack.c.l.b16 %v89
  %v218 = vunpack.c.l.b16 %v90
  %v219 = vpack.c.b16 %v204, %v203
  %v220 = vpack.c.b16 %v206, %v205
  %v221 = vpack.c.b16 %v208, %v207
  %v222 = vpack.c.b16 %v210, %v209
  %v223 = vpack.c.b16 %v212, %v211
  %v224 = vpack.c.b16 %v214, %v213
  %v225 = vpack.c.b16 %v216, %v215
  %v226 = vpack.c.b16 %v218, %v217
  %235 = vmatpush.bf16.msra.mxu0 %v226
  %236 = vmatpush.bf16.msra.mxu0 %v225
  %237 = vmatpush.bf16.msra.mxu0 %v224
  %238 = vmatpush.bf16.msra.mxu0 %v223
  %239 = vmatpush.bf16.msra.mxu0 %v222
  %240 = vmatpush.bf16.msra.mxu0 %v221
  %241 = vmatpush.bf16.msra.mxu0 %v220
  %242 = vmatpush.bf16.msra.mxu0 %v219
  %243 = vmatmul.bf16.gmra.mxu0 %v171
  %v244 = vpop.f32.mrf.mxu0
  %v245 = vadd.f32 0.0, %v244
  %v246 = vpop.f32.mrf.mxu0
  %v247 = vadd.f32 0.0, %v246
  %248 = vmatmul.bf16.gmra.mxu0 %v172
  %v249 = vpop.f32.mrf.mxu0
  %v250 = vadd.f32 0.0, %v249
  %v251 = vpop.f32.mrf.mxu0
  %v252 = vadd.f32 0.0, %v251
  %253 = vmatmul.bf16.gmra.mxu0 %v173
  %v254 = vpop.f32.mrf.mxu0
  %v255 = vadd.f32 0.0, %v254
  %v256 = vpop.f32.mrf.mxu0
  %v257 = vadd.f32 0.0, %v256
  %258 = vmatmul.bf16.gmra.mxu0 %v174
  %v259 = vpop.f32.mrf.mxu0
  %v260 = vadd.f32 0.0, %v259
  %v261 = vpop.f32.mrf.mxu0
  %v262 = vadd.f32 0.0, %v261
  %263 = vmatmul.bf16.gmra.mxu0 %v175
  %v264 = vpop.f32.mrf.mxu0
  %v265 = vadd.f32 0.0, %v264
  %v266 = vpop.f32.mrf.mxu0
  %v267 = vadd.f32 0.0, %v266
  %268 = vmatmul.bf16.gmra.mxu0 %v176
  %v269 = vpop.f32.mrf.mxu0
  %v270 = vadd.f32 0.0, %v269
  %v271 = vpop.f32.mrf.mxu0
  %v272 = vadd.f32 0.0, %v271
  %273 = vmatmul.bf16.gmra.mxu0 %v177
  %v274 = vpop.f32.mrf.mxu0
  %v275 = vadd.f32 0.0, %v274
  %v276 = vpop.f32.mrf.mxu0
  %v277 = vadd.f32 0.0, %v276
  %278 = vmatmul.bf16.gmra.mxu0 %v178
  %v279 = vpop.f32.mrf.mxu0
  %v280 = vadd.f32 0.0, %v279
  %v281 = vpop.f32.mrf.mxu0
  %v282 = vadd.f32 0.0, %v281
  %283 = vdwg.mxu0
  %v300 = vunpack.c.l.b16 %v27
  %v301 = vunpack.c.l.b16 %v28
  %v302 = vunpack.c.l.b16 %v29
  %v303 = vunpack.c.l.b16 %v30
  %v304 = vunpack.c.l.b16 %v31
  %v305 = vunpack.c.l.b16 %v32
  %v306 = vunpack.c.l.b16 %v33
  %v307 = vunpack.c.l.b16 %v34
  %v308 = vunpack.c.l.b16 %v35
  %v309 = vunpack.c.l.b16 %v36
  %v310 = vunpack.c.l.b16 %v37
  %v311 = vunpack.c.l.b16 %v38
  %v312 = vunpack.c.l.b16 %v39
  %v313 = vunpack.c.l.b16 %v40
  %v314 = vunpack.c.l.b16 %v41
  %v315 = vunpack.c.l.b16 %v42
  %v316 = vpack.c.b16 %v301, %v300
  %v317 = vpack.c.b16 %v303, %v302
  %v318 = vpack.c.b16 %v305, %v304
  %v319 = vpack.c.b16 %v307, %v306
  %v320 = vpack.c.b16 %v309, %v308
  %v321 = vpack.c.b16 %v311, %v310
  %v322 = vpack.c.b16 %v313, %v312
  %v323 = vpack.c.b16 %v315, %v314
  %v348 = vunpack.c.l.b16 %v91
  %v349 = vunpack.c.l.b16 %v92
  %v350 = vunpack.c.l.b16 %v93
  %v351 = vunpack.c.l.b16 %v94
  %v352 = vunpack.c.l.b16 %v95
  %v353 = vunpack.c.l.b16 %v96
  %v354 = vunpack.c.l.b16 %v97
  %v355 = vunpack.c.l.b16 %v98
  %v356 = vunpack.c.l.b16 %v99
  %v357 = vunpack.c.l.b16 %v100
  %v358 = vunpack.c.l.b16 %v101
  %v359 = vunpack.c.l.b16 %v102
  %v360 = vunpack.c.l.b16 %v103
  %v361 = vunpack.c.l.b16 %v104
  %v362 = vunpack.c.l.b16 %v105
  %v363 = vunpack.c.l.b16 %v106
  %v364 = vpack.c.b16 %v349, %v348
  %v365 = vpack.c.b16 %v351, %v350
  %v366 = vpack.c.b16 %v353, %v352
  %v367 = vpack.c.b16 %v355, %v354
  %v368 = vpack.c.b16 %v357, %v356
  %v369 = vpack.c.b16 %v359, %v358
  %v370 = vpack.c.b16 %v361, %v360
  %v371 = vpack.c.b16 %v363, %v362
  %380 = vmatpush.bf16.msra.mxu0 %v371
  %381 = vmatpush.bf16.msra.mxu0 %v370
  %382 = vmatpush.bf16.msra.mxu0 %v369
  %383 = vmatpush.bf16.msra.mxu0 %v368
  %384 = vmatpush.bf16.msra.mxu0 %v367
  %385 = vmatpush.bf16.msra.mxu0 %v366
  %386 = vmatpush.bf16.msra.mxu0 %v365
  %387 = vmatpush.bf16.msra.mxu0 %v364
  %388 = vmatmul.bf16.gmra.mxu0 %v316
  %v389 = vpop.f32.mrf.mxu0
  %v390 = vadd.f32 0.0, %v389
  %v391 = vpop.f32.mrf.mxu0
  %v392 = vadd.f32 0.0, %v391
  %393 = vmatmul.bf16.gmra.mxu0 %v317
  %v394 = vpop.f32.mrf.mxu0
  %v395 = vadd.f32 0.0, %v394
  %v396 = vpop.f32.mrf.mxu0
  %v397 = vadd.f32 0.0, %v396
  %398 = vmatmul.bf16.gmra.mxu0 %v318
  %v399 = vpop.f32.mrf.mxu0
  %v400 = vadd.f32 0.0, %v399
  %v401 = vpop.f32.mrf.mxu0
  %v402 = vadd.f32 0.0, %v401
  %403 = vmatmul.bf16.gmra.mxu0 %v319
  %v404 = vpop.f32.mrf.mxu0
  %v405 = vadd.f32 0.0, %v404
  %v406 = vpop.f32.mrf.mxu0
  %v407 = vadd.f32 0.0, %v406
  %408 = vmatmul.bf16.gmra.mxu0 %v320
  %v409 = vpop.f32.mrf.mxu0
  %v410 = vadd.f32 0.0, %v409
  %v411 = vpop.f32.mrf.mxu0
  %v412 = vadd.f32 0.0, %v411
  %413 = vmatmul.bf16.gmra.mxu0 %v321
  %v414 = vpop.f32.mrf.mxu0
  %v415 = vadd.f32 0.0, %v414
  %v416 = vpop.f32.mrf.mxu0
  %v417 = vadd.f32 0.0, %v416
  %418 = vmatmul.bf16.gmra.mxu0 %v322
  %v419 = vpop.f32.mrf.mxu0
  %v420 = vadd.f32 0.0, %v419
  %v421 = vpop.f32.mrf.mxu0
  %v422 = vadd.f32 0.0, %v421
  %423 = vmatmul.bf16.gmra.mxu0 %v323
  %v424 = vpop.f32.mrf.mxu0
  %v425 = vadd.f32 0.0, %v424
  %v426 = vpop.f32.mrf.mxu0
  %v427 = vadd.f32 0.0, %v426
  %428 = vdwg.mxu0
  %v445 = vunpack.c.l.b16 %v43
  %v446 = vunpack.c.l.b16 %v44
  %v447 = vunpack.c.l.b16 %v45
  %v448 = vunpack.c.l.b16 %v46
  %v449 = vunpack.c.l.b16 %v47
  %v450 = vunpack.c.l.b16 %v48
  %v451 = vunpack.c.l.b16 %v49
  %v452 = vunpack.c.l.b16 %v50
  %v453 = vunpack.c.l.b16 %v51
  %v454 = vunpack.c.l.b16 %v52
  %v455 = vunpack.c.l.b16 %v53
  %v456 = vunpack.c.l.b16 %v54
  %v457 = vunpack.c.l.b16 %v55
  %v458 = vunpack.c.l.b16 %v56
  %v459 = vunpack.c.l.b16 %v57
  %v460 = vunpack.c.l.b16 %v58
  %v461 = vpack.c.b16 %v446, %v445
  %v462 = vpack.c.b16 %v448, %v447
  %v463 = vpack.c.b16 %v450, %v449
  %v464 = vpack.c.b16 %v452, %v451
  %v465 = vpack.c.b16 %v454, %v453
  %v466 = vpack.c.b16 %v456, %v455
  %v467 = vpack.c.b16 %v458, %v457
  %v468 = vpack.c.b16 %v460, %v459
  %v493 = vunpack.c.l.b16 %v107
  %v494 = vunpack.c.l.b16 %v108
  %v495 = vunpack.c.l.b16 %v109
  %v496 = vunpack.c.l.b16 %v110
  %v497 = vunpack.c.l.b16 %v111
  %v498 = vunpack.c.l.b16 %v112
  %v499 = vunpack.c.l.b16 %v113
  %v500 = vunpack.c.l.b16 %v114
  %v501 = vunpack.c.l.b16 %v115
  %v502 = vunpack.c.l.b16 %v116
  %v503 = vunpack.c.l.b16 %v117
  %v504 = vunpack.c.l.b16 %v118
  %v505 = vunpack.c.l.b16 %v119
  %v506 = vunpack.c.l.b16 %v120
  %v507 = vunpack.c.l.b16 %v121
  %v508 = vunpack.c.l.b16 %v122
  %v509 = vpack.c.b16 %v494, %v493
  %v510 = vpack.c.b16 %v496, %v495
  %v511 = vpack.c.b16 %v498, %v497
  %v512 = vpack.c.b16 %v500, %v499
  %v513 = vpack.c.b16 %v502, %v501
  %v514 = vpack.c.b16 %v504, %v503
  %v515 = vpack.c.b16 %v506, %v505
  %v516 = vpack.c.b16 %v508, %v507
  %525 = vmatpush.bf16.msra.mxu0 %v516
  %526 = vmatpush.bf16.msra.mxu0 %v515
  %527 = vmatpush.bf16.msra.mxu0 %v514
  %528 = vmatpush.bf16.msra.mxu0 %v513
  %529 = vmatpush.bf16.msra.mxu0 %v512
  %530 = vmatpush.bf16.msra.mxu0 %v511
  %531 = vmatpush.bf16.msra.mxu0 %v510
  %532 = vmatpush.bf16.msra.mxu0 %v509
  %533 = vmatmul.bf16.gmra.mxu0 %v461
  %v534 = vpop.f32.mrf.mxu0
  %v535 = vadd.f32 0.0, %v534
  %v536 = vpop.f32.mrf.mxu0
  %v537 = vadd.f32 0.0, %v536
  %538 = vmatmul.bf16.gmra.mxu0 %v462
  %v539 = vpop.f32.mrf.mxu0
  %v540 = vadd.f32 0.0, %v539
  %v541 = vpop.f32.mrf.mxu0
  %v542 = vadd.f32 0.0, %v541
  %543 = vmatmul.bf16.gmra.mxu0 %v463
  %v544 = vpop.f32.mrf.mxu0
  %v545 = vadd.f32 0.0, %v544
  %v546 = vpop.f32.mrf.mxu0
  %v547 = vadd.f32 0.0, %v546
  %548 = vmatmul.bf16.gmra.mxu0 %v464
  %v549 = vpop.f32.mrf.mxu0
  %v550 = vadd.f32 0.0, %v549
  %v551 = vpop.f32.mrf.mxu0
  %v552 = vadd.f32 0.0, %v551
  %553 = vmatmul.bf16.gmra.mxu0 %v465
  %v554 = vpop.f32.mrf.mxu0
  %v555 = vadd.f32 0.0, %v554
  %v556 = vpop.f32.mrf.mxu0
  %v557 = vadd.f32 0.0, %v556
  %558 = vmatmul.bf16.gmra.mxu0 %v466
  %v559 = vpop.f32.mrf.mxu0
  %v560 = vadd.f32 0.0, %v559
  %v561 = vpop.f32.mrf.mxu0
  %v562 = vadd.f32 0.0, %v561
  %563 = vmatmul.bf16.gmra.mxu0 %v467
  %v564 = vpop.f32.mrf.mxu0
  %v565 = vadd.f32 0.0, %v564
  %v566 = vpop.f32.mrf.mxu0
  %v567 = vadd.f32 0.0, %v566
  %568 = vmatmul.bf16.gmra.mxu0 %v468
  %v569 = vpop.f32.mrf.mxu0
  %v570 = vadd.f32 0.0, %v569
  %v571 = vpop.f32.mrf.mxu0
  %v572 = vadd.f32 0.0, %v571
  %573 = vdwg.mxu0
  %v590 = vunpack.c.l.b16 %v59
  %v591 = vunpack.c.l.b16 %v60
  %v592 = vunpack.c.l.b16 %v61
  %v593 = vunpack.c.l.b16 %v62
  %v594 = vunpack.c.l.b16 %v63
  %v595 = vunpack.c.l.b16 %v64
  %v596 = vunpack.c.l.b16 %v65
  %v597 = vunpack.c.l.b16 %v66
  %v598 = vunpack.c.l.b16 %v67
  %v599 = vunpack.c.l.b16 %v68
  %v600 = vunpack.c.l.b16 %v69
  %v601 = vunpack.c.l.b16 %v70
  %v602 = vunpack.c.l.b16 %v71
  %v603 = vunpack.c.l.b16 %v72
  %v604 = vunpack.c.l.b16 %v73
  %v605 = vunpack.c.l.b16 %v74
  %v606 = vpack.c.b16 %v591, %v590
  %v607 = vpack.c.b16 %v593, %v592
  %v608 = vpack.c.b16 %v595, %v594
  %v609 = vpack.c.b16 %v597, %v596
  %v610 = vpack.c.b16 %v599, %v598
  %v611 = vpack.c.b16 %v601, %v600
  %v612 = vpack.c.b16 %v603, %v602
  %v613 = vpack.c.b16 %v605, %v604
  %v638 = vunpack.c.l.b16 %v123
  %v639 = vunpack.c.l.b16 %v124
  %v640 = vunpack.c.l.b16 %v125
  %v641 = vunpack.c.l.b16 %v126
  %v642 = vunpack.c.l.b16 %v127
  %v643 = vunpack.c.l.b16 %v128
  %v644 = vunpack.c.l.b16 %v129
  %v645 = vunpack.c.l.b16 %v130
  %v646 = vunpack.c.l.b16 %v131
  %v647 = vunpack.c.l.b16 %v132
  %v648 = vunpack.c.l.b16 %v133
  %v649 = vunpack.c.l.b16 %v134
  %v650 = vunpack.c.l.b16 %v135
  %v651 = vunpack.c.l.b16 %v136
  %v652 = vunpack.c.l.b16 %v137
  %v653 = vunpack.c.l.b16 %v138
  %v654 = vpack.c.b16 %v639, %v638
  %v655 = vpack.c.b16 %v641, %v640
  %v656 = vpack.c.b16 %v643, %v642
  %v657 = vpack.c.b16 %v645, %v644
  %v658 = vpack.c.b16 %v647, %v646
  %v659 = vpack.c.b16 %v649, %v648
  %v660 = vpack.c.b16 %v651, %v650
  %v661 = vpack.c.b16 %v653, %v652
  %670 = vmatpush.bf16.msra.mxu0 %v661
  %671 = vmatpush.bf16.msra.mxu0 %v660
  %672 = vmatpush.bf16.msra.mxu0 %v659
  %673 = vmatpush.bf16.msra.mxu0 %v658
  %674 = vmatpush.bf16.msra.mxu0 %v657
  %675 = vmatpush.bf16.msra.mxu0 %v656
  %676 = vmatpush.bf16.msra.mxu0 %v655
  %677 = vmatpush.bf16.msra.mxu0 %v654
  %678 = vmatmul.bf16.gmra.mxu0 %v606
  %v679 = vpop.f32.mrf.mxu0
  %v680 = vadd.f32 0.0, %v679
  %v681 = vpop.f32.mrf.mxu0
  %v682 = vadd.f32 0.0, %v681
  %683 = vmatmul.bf16.gmra.mxu0 %v607
  %v684 = vpop.f32.mrf.mxu0
  %v685 = vadd.f32 0.0, %v684
  %v686 = vpop.f32.mrf.mxu0
  %v687 = vadd.f32 0.0, %v686
  %688 = vmatmul.bf16.gmra.mxu0 %v608
  %v689 = vpop.f32.mrf.mxu0
  %v690 = vadd.f32 0.0, %v689
  %v691 = vpop.f32.mrf.mxu0
  %v692 = vadd.f32 0.0, %v691
  %693 = vmatmul.bf16.gmra.mxu0 %v609
  %v694 = vpop.f32.mrf.mxu0
  %v695 = vadd.f32 0.0, %v694
  %v696 = vpop.f32.mrf.mxu0
  %v697 = vadd.f32 0.0, %v696
  %698 = vmatmul.bf16.gmra.mxu0 %v610
  %v699 = vpop.f32.mrf.mxu0
  %v700 = vadd.f32 0.0, %v699
  %v701 = vpop.f32.mrf.mxu0
  %v702 = vadd.f32 0.0, %v701
  %703 = vmatmul.bf16.gmra.mxu0 %v611
  %v704 = vpop.f32.mrf.mxu0
  %v705 = vadd.f32 0.0, %v704
  %v706 = vpop.f32.mrf.mxu0
  %v707 = vadd.f32 0.0, %v706
  %708 = vmatmul.bf16.gmra.mxu0 %v612
  %v709 = vpop.f32.mrf.mxu0
  %v710 = vadd.f32 0.0, %v709
  %v711 = vpop.f32.mrf.mxu0
  %v712 = vadd.f32 0.0, %v711
  %713 = vmatmul.bf16.gmra.mxu0 %v613
  %v714 = vpop.f32.mrf.mxu0
  %v715 = vadd.f32 0.0, %v714
  %v716 = vpop.f32.mrf.mxu0
  %v717 = vadd.f32 0.0, %v716
  %718 = vdwg.mxu0
  %v719 = vadd.f32 %v245, %v247
  %v720 = vadd.f32 %v719, %v250
  %v721 = vadd.f32 %v720, %v252
  %v722 = vadd.f32 %v721, %v255
  %v723 = vadd.f32 %v722, %v257
  %v724 = vadd.f32 %v723, %v260
  %v725 = vadd.f32 %v724, %v262
  %v726 = vadd.f32 %v725, %v265
  %v727 = vadd.f32 %v726, %v267
  %v728 = vadd.f32 %v727, %v270
  %v729 = vadd.f32 %v728, %v272
  %v730 = vadd.f32 %v729, %v275
  %v731 = vadd.f32 %v730, %v277
  %v732 = vadd.f32 %v731, %v280
  %v733 = vadd.f32 %v732, %v282
  %v734 = vadd.f32 %v733, %v390
  %v735 = vadd.f32 %v734, %v392
  %v736 = vadd.f32 %v735, %v395
  %v737 = vadd.f32 %v736, %v397
  %v738 = vadd.f32 %v737, %v400
  %v739 = vadd.f32 %v738, %v402
  %v740 = vadd.f32 %v739, %v405
  %v741 = vadd.f32 %v740, %v407
  %v742 = vadd.f32 %v741, %v410
  %v743 = vadd.f32 %v742, %v412
  %v744 = vadd.f32 %v743, %v415
  %v745 = vadd.f32 %v744, %v417
  %v746 = vadd.f32 %v745, %v420
  %v747 = vadd.f32 %v746, %v422
  %v748 = vadd.f32 %v747, %v425
  %v749 = vadd.f32 %v748, %v427
  %v750 = vadd.f32 %v749, %v535
  %v751 = vadd.f32 %v750, %v537
  %v752 = vadd.f32 %v751, %v540
  %v753 = vadd.f32 %v752, %v542
  %v754 = vadd.f32 %v753, %v545
  %v755 = vadd.f32 %v754, %v547
  %v756 = vadd.f32 %v755, %v550
  %v757 = vadd.f32 %v756, %v552
  %v758 = vadd.f32 %v757, %v555
  %v759 = vadd.f32 %v758, %v557
  %v760 = vadd.f32 %v759, %v560
  %v761 = vadd.f32 %v760, %v562
  %v762 = vadd.f32 %v761, %v565
  %v763 = vadd.f32 %v762, %v567
  %v764 = vadd.f32 %v763, %v570
  %v765 = vadd.f32 %v764, %v572
  %v766 = vadd.f32 %v765, %v680
  %v767 = vadd.f32 %v766, %v682
  %v768 = vadd.f32 %v767, %v685
  %v769 = vadd.f32 %v768, %v687
  %v770 = vadd.f32 %v769, %v690
  %v771 = vadd.f32 %v770, %v692
  %v772 = vadd.f32 %v771, %v695
  %v773 = vadd.f32 %v772, %v697
  %v774 = vadd.f32 %v773, %v700
  %v775 = vadd.f32 %v774, %v702
  %v776 = vadd.f32 %v775, %v705
  %v777 = vadd.f32 %v776, %v707
  %v778 = vadd.f32 %v777, %v710
  %v779 = vadd.f32 %v778, %v712
  %v780 = vadd.f32 %v779, %v715
  %v781 = vadd.f32 %v780, %v717
  %v782 = vrot.slane %v781, 4
  %v783 = vadd.f32 %v781, %v782
  %v784 = vrot.slane %v783, 2
  %v785 = vadd.f32 %v783, %v784
  %v786 = vrot.slane %v785, 1
  %v787 = vadd.f32 %v785, %v786
  %v788 = vmul.f32 %v245, %v245
  %v789 = vmul.f32 %v247, %v247
  %v790 = vmul.f32 %v250, %v250
  %v791 = vmul.f32 %v252, %v252
  %v792 = vmul.f32 %v255, %v255
  %v793 = vmul.f32 %v257, %v257
  %v794 = vmul.f32 %v260, %v260
  %v795 = vmul.f32 %v262, %v262
  %v796 = vmul.f32 %v265, %v265
  %v797 = vmul.f32 %v267, %v267
  %v798 = vmul.f32 %v270, %v270
  %v799 = vmul.f32 %v272, %v272
  %v800 = vmul.f32 %v275, %v275
  %v801 = vmul.f32 %v277, %v277
  %v802 = vmul.f32 %v280, %v280
  %v803 = vmul.f32 %v282, %v282
  %v804 = vmul.f32 %v390, %v390
  %v805 = vmul.f32 %v392, %v392
  %v806 = vmul.f32 %v395, %v395
  %v807 = vmul.f32 %v397, %v397
  %v808 = vmul.f32 %v400, %v400
  %v809 = vmul.f32 %v402, %v402
  %v810 = vmul.f32 %v405, %v405
  %v811 = vmul.f32 %v407, %v407
  %v812 = vmul.f32 %v410, %v410
  %v813 = vmul.f32 %v412, %v412
  %v814 = vmul.f32 %v415, %v415
  %v815 = vmul.f32 %v417, %v417
  %v816 = vmul.f32 %v420, %v420
  %v817 = vmul.f32 %v422, %v422
  %v818 = vmul.f32 %v425, %v425
  %v819 = vmul.f32 %v427, %v427
  %v820 = vmul.f32 %v535, %v535
  %v821 = vmul.f32 %v537, %v537
  %v822 = vmul.f32 %v540, %v540
  %v823 = vmul.f32 %v542, %v542
  %v824 = vmul.f32 %v545, %v545
  %v825 = vmul.f32 %v547, %v547
  %v826 = vmul.f32 %v550, %v550
  %v827 = vmul.f32 %v552, %v552
  %v828 = vmul.f32 %v555, %v555
  %v829 = vmul.f32 %v557, %v557
  %v830 = vmul.f32 %v560, %v560
  %v831 = vmul.f32 %v562, %v562
  %v832 = vmul.f32 %v565, %v565
  %v833 = vmul.f32 %v567, %v567
  %v834 = vmul.f32 %v570, %v570
  %v835 = vmul.f32 %v572, %v572
  %v836 = vmul.f32 %v680, %v680
  %v837 = vmul.f32 %v682, %v682
  %v838 = vmul.f32 %v685, %v685
  %v839 = vmul.f32 %v687, %v687
  %v840 = vmul.f32 %v690, %v690
  %v841 = vmul.f32 %v692, %v692
  %v842 = vmul.f32 %v695, %v695
  %v843 = vmul.f32 %v697, %v697
  %v844 = vmul.f32 %v700, %v700
  %v845 = vmul.f32 %v702, %v702
  %v846 = vmul.f32 %v705, %v705
  %v847 = vmul.f32 %v707, %v707
  %v848 = vmul.f32 %v710, %v710
  %v849 = vmul.f32 %v712, %v712
  %v850 = vmul.f32 %v715, %v715
  %v851 = vmul.f32 %v717, %v717
  %v852 = vadd.f32 %v788, %v789
  %v853 = vadd.f32 %v852, %v790
  %v854 = vadd.f32 %v853, %v791
  %v855 = vadd.f32 %v854, %v792
  %v856 = vadd.f32 %v855, %v793
  %v857 = vadd.f32 %v856, %v794
  %v858 = vadd.f32 %v857, %v795
  %v859 = vadd.f32 %v858, %v796
  %v860 = vadd.f32 %v859, %v797
  %v861 = vadd.f32 %v860, %v798
  %v862 = vadd.f32 %v861, %v799
  %v863 = vadd.f32 %v862, %v800
  %v864 = vadd.f32 %v863, %v801
  %v865 = vadd.f32 %v864, %v802
  %v866 = vadd.f32 %v865, %v803
  %v867 = vadd.f32 %v866, %v804
  %v868 = vadd.f32 %v867, %v805
  %v869 = vadd.f32 %v868, %v806
  %v870 = vadd.f32 %v869, %v807
  %v871 = vadd.f32 %v870, %v808
  %v872 = vadd.f32 %v871, %v809
  %v873 = vadd.f32 %v872, %v810
  %v874 = vadd.f32 %v873, %v811
  %v875 = vadd.f32 %v874, %v812
  %v876 = vadd.f32 %v875, %v813
  %v877 = vadd.f32 %v876, %v814
  %v878 = vadd.f32 %v877, %v815
  %v879 = vadd.f32 %v878, %v816
  %v880 = vadd.f32 %v879, %v817
  %v881 = vadd.f32 %v880, %v818
  %v882 = vadd.f32 %v881, %v819
  %v883 = vadd.f32 %v882, %v820
  %v884 = vadd.f32 %v883, %v821
  %v885 = vadd.f32 %v884, %v822
  %v886 = vadd.f32 %v885, %v823
  %v887 = vadd.f32 %v886, %v824
  %v888 = vadd.f32 %v887, %v825
  %v889 = vadd.f32 %v888, %v826
  %v890 = vadd.f32 %v889, %v827
  %v891 = vadd.f32 %v890, %v828
  %v892 = vadd.f32 %v891, %v829
  %v893 = vadd.f32 %v892, %v830
  %v894 = vadd.f32 %v893, %v831
  %v895 = vadd.f32 %v894, %v832
  %v896 = vadd.f32 %v895, %v833
  %v897 = vadd.f32 %v896, %v834
  %v898 = vadd.f32 %v897, %v835
  %v899 = vadd.f32 %v898, %v836
  %v900 = vadd.f32 %v899, %v837
  %v901 = vadd.f32 %v900, %v838
  %v902 = vadd.f32 %v901, %v839
  %v903 = vadd.f32 %v902, %v840
  %v904 = vadd.f32 %v903, %v841
  %v905 = vadd.f32 %v904, %v842
  %v906 = vadd.f32 %v905, %v843
  %v907 = vadd.f32 %v906, %v844
  %v908 = vadd.f32 %v907, %v845
  %v909 = vadd.f32 %v908, %v846
  %v910 = vadd.f32 %v909, %v847
  %v911 = vadd.f32 %v910, %v848
  %v912 = vadd.f32 %v911, %v849
  %v913 = vadd.f32 %v912, %v850
  %v914 = vadd.f32 %v913, %v851
  %v915 = vrot.slane %v914, 4
  %v916 = vadd.f32 %v914, %v915
  %v917 = vrot.slane %v916, 2
  %v918 = vadd.f32 %v916, %v917
  %v919 = vrot.slane %v918, 1
  %v920 = vadd.f32 %v918, %v919
  %v921 = vmul.f32 %v787, 0.001953125
  %v922 = vmul.f32 %v920, 0.001953125
  %v923 = vmul.f32 %v921, %v921
  %v924 = vsub.f32 %v922, %v923
  %v925 = vmax.f32 %v924, 0.0
  %v926 = vsub.f32 %v245, %v921
  %v927 = vsub.f32 %v247, %v921
  %v928 = vsub.f32 %v250, %v921
  %v929 = vsub.f32 %v252, %v921
  %v930 = vsub.f32 %v255, %v921
  %v931 = vsub.f32 %v257, %v921
  %v932 = vsub.f32 %v260, %v921
  %v933 = vsub.f32 %v262, %v921
  %v934 = vsub.f32 %v265, %v921
  %v935 = vsub.f32 %v267, %v921
  %v936 = vsub.f32 %v270, %v921
  %v937 = vsub.f32 %v272, %v921
  %v938 = vsub.f32 %v275, %v921
  %v939 = vsub.f32 %v277, %v921
  %v940 = vsub.f32 %v280, %v921
  %v941 = vsub.f32 %v282, %v921
  %v942 = vsub.f32 %v390, %v921
  %v943 = vsub.f32 %v392, %v921
  %v944 = vsub.f32 %v395, %v921
  %v945 = vsub.f32 %v397, %v921
  %v946 = vsub.f32 %v400, %v921
  %v947 = vsub.f32 %v402, %v921
  %v948 = vsub.f32 %v405, %v921
  %v949 = vsub.f32 %v407, %v921
  %v950 = vsub.f32 %v410, %v921
  %v951 = vsub.f32 %v412, %v921
  %v952 = vsub.f32 %v415, %v921
  %v953 = vsub.f32 %v417, %v921
  %v954 = vsub.f32 %v420, %v921
  %v955 = vsub.f32 %v422, %v921
  %v956 = vsub.f32 %v425, %v921
  %v957 = vsub.f32 %v427, %v921
  %v958 = vsub.f32 %v535, %v921
  %v959 = vsub.f32 %v537, %v921
  %v960 = vsub.f32 %v540, %v921
  %v961 = vsub.f32 %v542, %v921
  %v962 = vsub.f32 %v545, %v921
  %v963 = vsub.f32 %v547, %v921
  %v964 = vsub.f32 %v550, %v921
  %v965 = vsub.f32 %v552, %v921
  %v966 = vsub.f32 %v555, %v921
  %v967 = vsub.f32 %v557, %v921
  %v968 = vsub.f32 %v560, %v921
  %v969 = vsub.f32 %v562, %v921
  %v970 = vsub.f32 %v565, %v921
  %v971 = vsub.f32 %v567, %v921
  %v972 = vsub.f32 %v570, %v921
  %v973 = vsub.f32 %v572, %v921
  %v974 = vsub.f32 %v680, %v921
  %v975 = vsub.f32 %v682, %v921
  %v976 = vsub.f32 %v685, %v921
  %v977 = vsub.f32 %v687, %v921
  %v978 = vsub.f32 %v690, %v921
  %v979 = vsub.f32 %v692, %v921
  %v980 = vsub.f32 %v695, %v921
  %v981 = vsub.f32 %v697, %v921
  %v982 = vsub.f32 %v700, %v921
  %v983 = vsub.f32 %v702, %v921
  %v984 = vsub.f32 %v705, %v921
  %v985 = vsub.f32 %v707, %v921
  %v986 = vsub.f32 %v710, %v921
  %v987 = vsub.f32 %v712, %v921
  %v988 = vsub.f32 %v715, %v921
  %v989 = vsub.f32 %v717, %v921
  %v990 = vadd.f32 %v925, 1e-05
  %v991 = vrsqrt.pop %v990
  %v992 = vmul.f32 %v991, %v990
  %v993 = vmul.f32 %v992, %v991
  %v994 = vmul.f32 0.5, %v993
  %v995 = vsub.f32 1.5, %v994
  %v996 = vmul.f32 %v991, %v995
  %vm997 = vweird.f32 %v990
  %vm998 = vweird.f32 %v991
  %vm999 = vmor %vm997, %vm998
  %v1000 = vsel %vm999, %v991, %v996
  %v1001 = vmul.f32 %v926, %v1000
  %v1002 = vmul.f32 %v927, %v1000
  %v1003 = vmul.f32 %v928, %v1000
  %v1004 = vmul.f32 %v929, %v1000
  %v1005 = vmul.f32 %v930, %v1000
  %v1006 = vmul.f32 %v931, %v1000
  %v1007 = vmul.f32 %v932, %v1000
  %v1008 = vmul.f32 %v933, %v1000
  %v1009 = vmul.f32 %v934, %v1000
  %v1010 = vmul.f32 %v935, %v1000
  %v1011 = vmul.f32 %v936, %v1000
  %v1012 = vmul.f32 %v937, %v1000
  %v1013 = vmul.f32 %v938, %v1000
  %v1014 = vmul.f32 %v939, %v1000
  %v1015 = vmul.f32 %v940, %v1000
  %v1016 = vmul.f32 %v941, %v1000
  %v1017 = vmul.f32 %v942, %v1000
  %v1018 = vmul.f32 %v943, %v1000
  %v1019 = vmul.f32 %v944, %v1000
  %v1020 = vmul.f32 %v945, %v1000
  %v1021 = vmul.f32 %v946, %v1000
  %v1022 = vmul.f32 %v947, %v1000
  %v1023 = vmul.f32 %v948, %v1000
  %v1024 = vmul.f32 %v949, %v1000
  %v1025 = vmul.f32 %v950, %v1000
  %v1026 = vmul.f32 %v951, %v1000
  %v1027 = vmul.f32 %v952, %v1000
  %v1028 = vmul.f32 %v953, %v1000
  %v1029 = vmul.f32 %v954, %v1000
  %v1030 = vmul.f32 %v955, %v1000
  %v1031 = vmul.f32 %v956, %v1000
  %v1032 = vmul.f32 %v957, %v1000
  %v1033 = vmul.f32 %v958, %v1000
  %v1034 = vmul.f32 %v959, %v1000
  %v1035 = vmul.f32 %v960, %v1000
  %v1036 = vmul.f32 %v961, %v1000
  %v1037 = vmul.f32 %v962, %v1000
  %v1038 = vmul.f32 %v963, %v1000
  %v1039 = vmul.f32 %v964, %v1000
  %v1040 = vmul.f32 %v965, %v1000
  %v1041 = vmul.f32 %v966, %v1000
  %v1042 = vmul.f32 %v967, %v1000
  %v1043 = vmul.f32 %v968, %v1000
  %v1044 = vmul.f32 %v969, %v1000
  %v1045 = vmul.f32 %v970, %v1000
  %v1046 = vmul.f32 %v971, %v1000
  %v1047 = vmul.f32 %v972, %v1000
  %v1048 = vmul.f32 %v973, %v1000
  %v1049 = vmul.f32 %v974, %v1000
  %v1050 = vmul.f32 %v975, %v1000
  %v1051 = vmul.f32 %v976, %v1000
  %v1052 = vmul.f32 %v977, %v1000
  %v1053 = vmul.f32 %v978, %v1000
  %v1054 = vmul.f32 %v979, %v1000
  %v1055 = vmul.f32 %v980, %v1000
  %v1056 = vmul.f32 %v981, %v1000
  %v1057 = vmul.f32 %v982, %v1000
  %v1058 = vmul.f32 %v983, %v1000
  %v1059 = vmul.f32 %v984, %v1000
  %v1060 = vmul.f32 %v985, %v1000
  %v1061 = vmul.f32 %v986, %v1000
  %v1062 = vmul.f32 %v987, %v1000
  %v1063 = vmul.f32 %v988, %v1000
  %v1064 = vmul.f32 %v989, %v1000
  %v1065 = vmax.f32 %v1001, 0.0
  %v1066 = vmax.f32 %v1002, 0.0
  %v1067 = vmax.f32 %v1003, 0.0
  %v1068 = vmax.f32 %v1004, 0.0
  %v1069 = vmax.f32 %v1005, 0.0
  %v1070 = vmax.f32 %v1006, 0.0
  %v1071 = vmax.f32 %v1007, 0.0
  %v1072 = vmax.f32 %v1008, 0.0
  %v1073 = vmax.f32 %v1009, 0.0
  %v1074 = vmax.f32 %v1010, 0.0
  %v1075 = vmax.f32 %v1011, 0.0
  %v1076 = vmax.f32 %v1012, 0.0
  %v1077 = vmax.f32 %v1013, 0.0
  %v1078 = vmax.f32 %v1014, 0.0
  %v1079 = vmax.f32 %v1015, 0.0
  %v1080 = vmax.f32 %v1016, 0.0
  %v1081 = vmax.f32 %v1017, 0.0
  %v1082 = vmax.f32 %v1018, 0.0
  %v1083 = vmax.f32 %v1019, 0.0
  %v1084 = vmax.f32 %v1020, 0.0
  %v1085 = vmax.f32 %v1021, 0.0
  %v1086 = vmax.f32 %v1022, 0.0
  %v1087 = vmax.f32 %v1023, 0.0
  %v1088 = vmax.f32 %v1024, 0.0
  %v1089 = vmax.f32 %v1025, 0.0
  %v1090 = vmax.f32 %v1026, 0.0
  %v1091 = vmax.f32 %v1027, 0.0
  %v1092 = vmax.f32 %v1028, 0.0
  %v1093 = vmax.f32 %v1029, 0.0
  %v1094 = vmax.f32 %v1030, 0.0
  %v1095 = vmax.f32 %v1031, 0.0
  %v1096 = vmax.f32 %v1032, 0.0
  %v1097 = vmax.f32 %v1033, 0.0
  %v1098 = vmax.f32 %v1034, 0.0
  %v1099 = vmax.f32 %v1035, 0.0
  %v1100 = vmax.f32 %v1036, 0.0
  %v1101 = vmax.f32 %v1037, 0.0
  %v1102 = vmax.f32 %v1038, 0.0
  %v1103 = vmax.f32 %v1039, 0.0
  %v1104 = vmax.f32 %v1040, 0.0
  %v1105 = vmax.f32 %v1041, 0.0
  %v1106 = vmax.f32 %v1042, 0.0
  %v1107 = vmax.f32 %v1043, 0.0
  %v1108 = vmax.f32 %v1044, 0.0
  %v1109 = vmax.f32 %v1045, 0.0
  %v1110 = vmax.f32 %v1046, 0.0
  %v1111 = vmax.f32 %v1047, 0.0
  %v1112 = vmax.f32 %v1048, 0.0
  %v1113 = vmax.f32 %v1049, 0.0
  %v1114 = vmax.f32 %v1050, 0.0
  %v1115 = vmax.f32 %v1051, 0.0
  %v1116 = vmax.f32 %v1052, 0.0
  %v1117 = vmax.f32 %v1053, 0.0
  %v1118 = vmax.f32 %v1054, 0.0
  %v1119 = vmax.f32 %v1055, 0.0
  %v1120 = vmax.f32 %v1056, 0.0
  %v1121 = vmax.f32 %v1057, 0.0
  %v1122 = vmax.f32 %v1058, 0.0
  %v1123 = vmax.f32 %v1059, 0.0
  %v1124 = vmax.f32 %v1060, 0.0
  %v1125 = vmax.f32 %v1061, 0.0
  %v1126 = vmax.f32 %v1062, 0.0
  %v1127 = vmax.f32 %v1063, 0.0
  %v1128 = vmax.f32 %v1064, 0.0
  %v1129 = vpack.c.bf16 %v1065, %v1065
  %v1130 = vpack.c.bf16 %v1066, %v1066
  %v1131 = vpack.c.bf16 %v1067, %v1067
  %v1132 = vpack.c.bf16 %v1068, %v1068
  %v1133 = vpack.c.bf16 %v1069, %v1069
  %v1134 = vpack.c.bf16 %v1070, %v1070
  %v1135 = vpack.c.bf16 %v1071, %v1071
  %v1136 = vpack.c.bf16 %v1072, %v1072
  %v1137 = vpack.c.bf16 %v1073, %v1073
  %v1138 = vpack.c.bf16 %v1074, %v1074
  %v1139 = vpack.c.bf16 %v1075, %v1075
  %v1140 = vpack.c.bf16 %v1076, %v1076
  %v1141 = vpack.c.bf16 %v1077, %v1077
  %v1142 = vpack.c.bf16 %v1078, %v1078
  %v1143 = vpack.c.bf16 %v1079, %v1079
  %v1144 = vpack.c.bf16 %v1080, %v1080
  %v1145 = vpack.c.bf16 %v1081, %v1081
  %v1146 = vpack.c.bf16 %v1082, %v1082
  %v1147 = vpack.c.bf16 %v1083, %v1083
  %v1148 = vpack.c.bf16 %v1084, %v1084
  %v1149 = vpack.c.bf16 %v1085, %v1085
  %v1150 = vpack.c.bf16 %v1086, %v1086
  %v1151 = vpack.c.bf16 %v1087, %v1087
  %v1152 = vpack.c.bf16 %v1088, %v1088
  %v1153 = vpack.c.bf16 %v1089, %v1089
  %v1154 = vpack.c.bf16 %v1090, %v1090
  %v1155 = vpack.c.bf16 %v1091, %v1091
  %v1156 = vpack.c.bf16 %v1092, %v1092
  %v1157 = vpack.c.bf16 %v1093, %v1093
  %v1158 = vpack.c.bf16 %v1094, %v1094
  %v1159 = vpack.c.bf16 %v1095, %v1095
  %v1160 = vpack.c.bf16 %v1096, %v1096
  %v1161 = vpack.c.bf16 %v1097, %v1097
  %v1162 = vpack.c.bf16 %v1098, %v1098
  %v1163 = vpack.c.bf16 %v1099, %v1099
  %v1164 = vpack.c.bf16 %v1100, %v1100
  %v1165 = vpack.c.bf16 %v1101, %v1101
  %v1166 = vpack.c.bf16 %v1102, %v1102
  %v1167 = vpack.c.bf16 %v1103, %v1103
  %v1168 = vpack.c.bf16 %v1104, %v1104
  %v1169 = vpack.c.bf16 %v1105, %v1105
  %v1170 = vpack.c.bf16 %v1106, %v1106
  %v1171 = vpack.c.bf16 %v1107, %v1107
  %v1172 = vpack.c.bf16 %v1108, %v1108
  %v1173 = vpack.c.bf16 %v1109, %v1109
  %v1174 = vpack.c.bf16 %v1110, %v1110
  %v1175 = vpack.c.bf16 %v1111, %v1111
  %v1176 = vpack.c.bf16 %v1112, %v1112
  %v1177 = vpack.c.bf16 %v1113, %v1113
  %v1178 = vpack.c.bf16 %v1114, %v1114
  %v1179 = vpack.c.bf16 %v1115, %v1115
  %v1180 = vpack.c.bf16 %v1116, %v1116
  %v1181 = vpack.c.bf16 %v1117, %v1117
  %v1182 = vpack.c.bf16 %v1118, %v1118
  %v1183 = vpack.c.bf16 %v1119, %v1119
  %v1184 = vpack.c.bf16 %v1120, %v1120
  %v1185 = vpack.c.bf16 %v1121, %v1121
  %v1186 = vpack.c.bf16 %v1122, %v1122
  %v1187 = vpack.c.bf16 %v1123, %v1123
  %v1188 = vpack.c.bf16 %v1124, %v1124
  %v1189 = vpack.c.bf16 %v1125, %v1125
  %v1190 = vpack.c.bf16 %v1126, %v1126
  %v1191 = vpack.c.bf16 %v1127, %v1127
  %v1192 = vpack.c.bf16 %v1128, %v1128
  %1193 = vst [vmem:[%s2] sm:$0xf] %v1129
  %1194 = vst [vmem:[%s2 + $0x4] sm:$0xf] %v1130
  %1195 = vst [vmem:[%s2 + $0x8] sm:$0xf] %v1131
  %1196 = vst [vmem:[%s2 + $0xc] sm:$0xf] %v1132
  %1197 = vst [vmem:[%s2 + $0x10] sm:$0xf] %v1133
  %1198 = vst [vmem:[%s2 + $0x14] sm:$0xf] %v1134
  %1199 = vst [vmem:[%s2 + $0x18] sm:$0xf] %v1135
  %1200 = vst [vmem:[%s2 + $0x1c] sm:$0xf] %v1136
  %1201 = vst [vmem:[%s2 + $0x20] sm:$0xf] %v1137
  %1202 = vst [vmem:[%s2 + $0x24] sm:$0xf] %v1138
  %1203 = vst [vmem:[%s2 + $0x28] sm:$0xf] %v1139
  %1204 = vst [vmem:[%s2 + $0x2c] sm:$0xf] %v1140
  %1205 = vst [vmem:[%s2 + $0x30] sm:$0xf] %v1141
  %1206 = vst [vmem:[%s2 + $0x34] sm:$0xf] %v1142
  %1207 = vst [vmem:[%s2 + $0x38] sm:$0xf] %v1143
  %1208 = vst [vmem:[%s2 + $0x3c] sm:$0xf] %v1144
  %1209 = vst [vmem:[%s2 + $0x40] sm:$0xf] %v1145
  %1210 = vst [vmem:[%s2 + $0x44] sm:$0xf] %v1146
  %1211 = vst [vmem:[%s2 + $0x48] sm:$0xf] %v1147
  %1212 = vst [vmem:[%s2 + $0x4c] sm:$0xf] %v1148
  %1213 = vst [vmem:[%s2 + $0x50] sm:$0xf] %v1149
  %1214 = vst [vmem:[%s2 + $0x54] sm:$0xf] %v1150
  %1215 = vst [vmem:[%s2 + $0x58] sm:$0xf] %v1151
  %1216 = vst [vmem:[%s2 + $0x5c] sm:$0xf] %v1152
  %1217 = vst [vmem:[%s2 + $0x60] sm:$0xf] %v1153
  %1218 = vst [vmem:[%s2 + $0x64] sm:$0xf] %v1154
  %1219 = vst [vmem:[%s2 + $0x68] sm:$0xf] %v1155
  %1220 = vst [vmem:[%s2 + $0x6c] sm:$0xf] %v1156
  %1221 = vst [vmem:[%s2 + $0x70] sm:$0xf] %v1157
  %1222 = vst [vmem:[%s2 + $0x74] sm:$0xf] %v1158
  %1223 = vst [vmem:[%s2 + $0x78] sm:$0xf] %v1159
  %1224 = vst [vmem:[%s2 + $0x7c] sm:$0xf] %v1160
  %1225 = vst [vmem:[%s2 + $0x80] sm:$0xf] %v1161
  %1226 = vst [vmem:[%s2 + $0x84] sm:$0xf] %v1162
  %1227 = vst [vmem:[%s2 + $0x88] sm:$0xf] %v1163
  %1228 = vst [vmem:[%s2 + $0x8c] sm:$0xf] %v1164
  %1229 = vst [vmem:[%s2 + $0x90] sm:$0xf] %v1165
  %1230 = vst [vmem:[%s2 + $0x94] sm:$0xf] %v1166
  %1231 = vst [vmem:[%s2 + $0x98] sm:$0xf] %v1167
  %1232 = vst [vmem:[%s2 + $0x9c] sm:$0xf] %v1168
  %1233 = vst [vmem:[%s2 + $0xa0] sm:$0xf] %v1169
  %1234 = vst [vmem:[%s2 + $0xa4] sm:$0xf] %v1170
  %1235 = vst [vmem:[%s2 + $0xa8] sm:$0xf] %v1171
  %1236 = vst [vmem:[%s2 + $0xac] sm:$0xf] %v1172
  %1237 = vst [vmem:[%s2 + $0xb0] sm:$0xf] %v1173
  %1238 = vst [vmem:[%s2 + $0xb4] sm:$0xf] %v1174
  %1239 = vst [vmem:[%s2 + $0xb8] sm:$0xf] %v1175
  %1240 = vst [vmem:[%s2 + $0xbc] sm:$0xf] %v1176
  %1241 = vst [vmem:[%s2 + $0xc0] sm:$0xf] %v1177
  %1242 = vst [vmem:[%s2 + $0xc4] sm:$0xf] %v1178
  %1243 = vst [vmem:[%s2 + $0xc8] sm:$0xf] %v1179
  %1244 = vst [vmem:[%s2 + $0xcc] sm:$0xf] %v1180
  %1245 = vst [vmem:[%s2 + $0xd0] sm:$0xf] %v1181
  %1246 = vst [vmem:[%s2 + $0xd4] sm:$0xf] %v1182
  %1247 = vst [vmem:[%s2 + $0xd8] sm:$0xf] %v1183
  %1248 = vst [vmem:[%s2 + $0xdc] sm:$0xf] %v1184
  %1249 = vst [vmem:[%s2 + $0xe0] sm:$0xf] %v1185
  %1250 = vst [vmem:[%s2 + $0xe4] sm:$0xf] %v1186
  %1251 = vst [vmem:[%s2 + $0xe8] sm:$0xf] %v1187
  %1252 = vst [vmem:[%s2 + $0xec] sm:$0xf] %v1188
  %1253 = vst [vmem:[%s2 + $0xf0] sm:$0xf] %v1189
  %1254 = vst [vmem:[%s2 + $0xf4] sm:$0xf] %v1190
  %1255 = vst [vmem:[%s2 + $0xf8] sm:$0xf] %v1191
  %1256 = vst [vmem:[%s2 + $0xfc] sm:$0xf] %v1192
  // Predicated region
  $region10: #{_lambda_.6} parent=0 // pred_check
    _
  $region11: #{_lambda_.6} parent=0 // pred_check_branch
    %1258 = sbr.rel (0) target = $region13
  $region12: #{_lambda_.6} parent=0 // pred_region
    _
  $region13: #{_lambda_.6} parent=0 // pred_fallthru
    _
  // Predicated region
  $region14: #{_lambda_.6} parent=0 // pred_check
    _
  $region15: #{_lambda_.6} parent=0 // pred_check_branch
    %1260 = sbr.rel (0) target = $region17
  $region16: #{_lambda_.6} parent=0 // pred_region
    _
  $region17: #{_lambda_.6} parent=0 // pred_fallthru
    _

// kernel: _lambda_.7
$region0: #{_lambda_.7}
  #allocation0 [shape = 'u32[]', space=smem, size = 0x4, offset = 0x4, fixed_abs, tag = 'smem constant byte address 0x4 - core index']
  #allocation1 [shape = 'u32[72,128]{1,0:T(1,128)}', space=vmem, size = 0x9000, scoped, tag = 'internal scratch']
  %s0 = inlined_call_operand.vmem [shape: bf16[4,512,128], index: 0, kind: input, shape index: {}]
  %s1 = inlined_call_operand.vmem [shape: bf16[4,128,128], index: 1, kind: input, shape index: {}]
  %s2 = inlined_call_operand.vmem [shape: f32[4,512,128], index: 2, kind: output, shape index: {}]
  %s3 = sld [smem:[#allocation0]]
  $region41: #{_lambda_.7} parent=0
    _
  %s5 = ssub.s32 1, %s3
  %s6 = scalar_select 0, %s5, %s3
  loop: start=0, step=1, limit=10
  $region2: #{_lambda_.7} parent=0 // loop_pre_header
    _
  $region3: #{_lambda_.7} parent=0 // loop_header
    %s8 = sphi 0, %s12
    %p9 = scmp.ge.s32.totalorder %s8, 10
    %s15 = sphi 0, %s27
    %s16 = sphi 0, %s23
    %s17 = sphi 0, %s15
    %s18 = sphi 0, %s16
    %s19 = sphi 0, %s17
    %s20 = sphi 0, %s18
    %s32 = sphi 0, %s34
    %s35 = sphi 0, %s32
    %s36 = sphi 0, %s35
    %s52 = sphi 0, %s36
    %s58 = sphi 0, %s60
    %s61 = sphi 0, %s58
    %s62 = sphi 0, %s61
    %s78 = sphi 0, %s62
    %s86 = sphi 0, %s88
    %s89 = sphi 0, %s86
    %s90 = sphi 0, %s89
    %s106 = sphi 0, %s90
  $region4: #{_lambda_.7} parent=0 // loop_header_branch
    %11 = sbr.rel (%p9) target = $region8
  $region5: #{_lambda_.7} parent=0 // loop_body
    %s13 = ssub.s32 %s8, 1
    %s14 = ssub.s32 %s8, 2
    %s21 = sadd.s32 1, %s16
    %p22 = scmp.ge.s32.totalorder %s21, 2
    %s23 = scalar_select %p22, 0, %s21
    %s24 = sadd.s32 1, %s15
    %s25 = scalar_select %p22, %s24, %s15
    %p26 = scmp.ge.s32.totalorder %s25, 4
    %s27 = scalar_select %p26, 0, %s25
    %s28 = ssub.s32 %s15, %s27
    %s29 = ssub.s32 %s16, %s23
    %s30 = sor.u32 %s28, %s29
    %p31 = scmp.eq.s32.totalorder %s30, 0
    %s33 = sadd.s32 %s32, 1
    %s34 = scalar_select %p31, %s32, %s33
    %p37 = pneg %p31
    %p38 = scmp.eq.s32.totalorder %s8, 7
    %p39 = por %p37, %p38
    %p40 = scmp.ne.s32.totalorder %s32, %s35
    %p41 = scmp.eq.s32.totalorder %s8, 0
    %p42 = por %p40, %p41
    %p43 = scmp.ne.s32.totalorder %s32, %s35
    %p44 = scmp.eq.s32.totalorder %s13, 7
    %p45 = por %p43, %p44
    %p46 = scmp.ne.s32.totalorder %s35, %s36
    %p47 = scmp.eq.s32.totalorder %s13, 0
    %p48 = por %p46, %p47
    %p49 = scmp.ne.s32.totalorder %s35, %s36
    %p50 = scmp.eq.s32.totalorder %s14, 7
    %p51 = por %p49, %p50
    %p53 = scmp.ne.s32.totalorder %s36, %s52
    %p54 = scmp.eq.s32.totalorder %s14, 0
    %p55 = por %p53, %p54
    %s56 = ssub.s32 %s15, %s27
    %p57 = scmp.eq.s32.totalorder %s56, 0
    %s59 = sadd.s32 %s58, 1
    %s60 = scalar_select %p57, %s58, %s59
    %p63 = pneg %p57
    %p64 = scmp.eq.s32.totalorder %s8, 7
    %p65 = por %p63, %p64
    %p66 = scmp.ne.s32.totalorder %s58, %s61
    %p67 = scmp.eq.s32.totalorder %s8, 0
    %p68 = por %p66, %p67
    %p69 = scmp.ne.s32.totalorder %s58, %s61
    %p70 = scmp.eq.s32.totalorder %s13, 7
    %p71 = por %p69, %p70
    %p72 = scmp.ne.s32.totalorder %s61, %s62
    %p73 = scmp.eq.s32.totalorder %s13, 0
    %p74 = por %p72, %p73
    %p75 = scmp.ne.s32.totalorder %s61, %s62
    %p76 = scmp.eq.s32.totalorder %s14, 7
    %p77 = por %p75, %p76
    %p79 = scmp.ne.s32.totalorder %s62, %s78
    %p80 = scmp.eq.s32.totalorder %s14, 0
    %p81 = por %p79, %p80
    %s82 = ssub.s32 %s15, %s27
    %s83 = ssub.s32 %s16, %s23
    %s84 = sor.u32 %s82, %s83
    %p85 = scmp.eq.s32.totalorder %s84, 0
    %s87 = sadd.s32 %s86, 1
    %s88 = scalar_select %p85, %s86, %s87
    %p91 = pneg %p85
    %p92 = scmp.eq.s32.totalorder %s8, 7
    %p93 = por %p91, %p92
    %p94 = scmp.ne.s32.totalorder %s86, %s89
    %p95 = scmp.eq.s32.totalorder %s8, 0
    %p96 = por %p94, %p95
    %p97 = scmp.ne.s32.totalorder %s86, %s89
    %p98 = scmp.eq.s32.totalorder %s13, 7
    %p99 = por %p97, %p98
    %p100 = scmp.ne.s32.totalorder %s89, %s90
    %p101 = scmp.eq.s32.totalorder %s13, 0
    %p102 = por %p100, %p101
    %p103 = scmp.ne.s32.totalorder %s89, %s90
    %p104 = scmp.eq.s32.totalorder %s14, 7
    %p105 = por %p103, %p104
    %p107 = scmp.ne.s32.totalorder %s90, %s106
    %p108 = scmp.eq.s32.totalorder %s14, 0
    %p109 = por %p107, %p108
    %p110 = scmp.le.s32.totalorder 1, %s8
    %p111 = scmp.lt.s32.totalorder %s8, 9
    %p112 = pnand %p110, %p111
    %p113 = pneg %p112
    // Predicated region
    $region9: #{_lambda_.7} parent=5 // pred_check
      _
    $region10: #{_lambda_.7} parent=5 // pred_check_branch
      %115 = sbr.rel (%p112) target = $region12
    $region11: #{_lambda_.7} parent=5 // pred_region
      %s116 = ssub.s32 %s8, 1
    $region12: #{_lambda_.7} parent=5 // pred_fallthru
      _
    %p117 = scmp.lt.s32.totalorder %s8, 8
    // Predicated region
    $region13: #{_lambda_.7} parent=5 // pred_check
      %p118 = pneg %p117
    $region14: #{_lambda_.7} parent=5 // pred_check_branch
      %120 = sbr.rel (%p118) target = $region16
    $region15: #{_lambda_.7} parent=5 // pred_region
      // Predicated region
      $region17: #{_lambda_.7} parent=15 // pred_check
        %p121 = pneg %p42
      $region18: #{_lambda_.7} parent=15 // pred_check_branch
        %123 = sbr.rel (%p121) target = $region20
      $region19: #{_lambda_.7} parent=15 // pred_region
        %s124 = smul.u32 32, %s16
        %p125 = scmp.lt.s32.totalorder %s15, 3
        %s126 = scalar_select %p125, %s15, 3
        %p127 = scmp.lt.s32.totalorder %s124, 63
        %s128 = scalar_select %p127, %s124, 63
        %s129 = smul.addr %s126, 64
        %s130 = sadd.s32 %s128, %s129
        %s131 = smul.addr %s130, 4
        %s132 = scalar_lea.vmem %s0, %s131
        %s133 = smul.u32 32, %s16
      $region20: #{_lambda_.7} parent=15 // pred_fallthru
        _
      // Predicated region
      $region21: #{_lambda_.7} parent=15 // pred_check
        %p134 = pneg %p68
      $region22: #{_lambda_.7} parent=15 // pred_check_branch
        %136 = sbr.rel (%p134) target = $region24
      $region23: #{_lambda_.7} parent=15 // pred_region
        %p137 = scmp.lt.s32.totalorder %s15, 3
        %s138 = scalar_select %p137, %s15, 3
        %s139 = smul.addr %s138, 16
        %s140 = smul.addr %s139, 4
        %s141 = scalar_lea.vmem %s1, %s140
      $region24: #{_lambda_.7} parent=15 // pred_fallthru
        _
    $region16: #{_lambda_.7} parent=5 // pred_fallthru
      _
    %p142 = scmp.le.s32.totalorder 1, %s8
    %p143 = scmp.lt.s32.totalorder %s8, 9
    %p144 = pnand %p142, %p143
    %p145 = pneg %p144
    // Predicated region
    $region25: #{_lambda_.7} parent=5 // pred_check
      _
    $region26: #{_lambda_.7} parent=5 // pred_check_branch
      %147 = sbr.rel (%p144) target = $region28
    $region27: #{_lambda_.7} parent=5 // pred_region
      %s148 = ssub.s32 %s8, 1
      %s149 = smul.u32 32, %s18
      %p150 = scmp.lt.s32.totalorder %s17, 3
      %s151 = scalar_select %p150, %s17, 3
      %p152 = scmp.lt.s32.totalorder %s149, 63
      %s153 = scalar_select %p152, %s149, 63
      %s154 = smul.addr %s151, 64
      %s155 = sadd.s32 %s153, %s154
      %s156 = smul.addr %s155, 4
      %s157 = scalar_lea.vmem %s0, %s156
      %p158 = pneg %p48
      %p159 = pneg %p45
      %p160 = scmp.lt.s32.totalorder %s17, 3
      %s161 = scalar_select %p160, %s17, 3
      %s162 = smul.addr %s161, 16
      %s163 = smul.addr %s162, 4
      %s164 = scalar_lea.vmem %s1, %s163
      %p165 = pneg %p74
      %p166 = pneg %p71
      %p167 = pneg %p102
      %p168 = pneg %p99
      %s169 = smul.u32 32, %s18
      %p170 = scmp.lt.s32.totalorder %s17, 3
      %s171 = scalar_select %p170, %s17, 3
      %p172 = scmp.lt.s32.totalorder %s169, 63
      %s173 = scalar_select %p172, %s169, 63
      %s174 = smul.addr %s171, 64
      %s175 = sadd.s32 %s173, %s174
      %s176 = smul.addr %s175, 8
      %s177 = scalar_lea.vmem %s2, %s176
      %s178 = smul.u32 32, %s18
      %p179 = scmp.lt.s32.totalorder %s17, 3
      %s180 = scalar_select %p179, %s17, 3
      %p181 = scmp.lt.s32.totalorder %s178, 63
      %s182 = scalar_select %p181, %s178, 63
      %s183 = smul.addr %s180, 64
      %s184 = sadd.s32 %s182, %s183
      %s185 = smul.addr %s184, 4
      %s186 = scalar_lea.vmem %s0, %s185
      %s187 = smul.u32 32, %s18
      %p188 = scmp.lt.s32.totalorder %s17, 3
      %s189 = scalar_select %p188, %s17, 3
      %s190 = smul.addr %s189, 16
      %s191 = smul.addr %s190, 4
      %s192 = scalar_lea.vmem %s1, %s191
      %s193 = smul.u32 32, %s18
      %p194 = scmp.lt.s32.totalorder %s17, 3
      %s195 = scalar_select %p194, %s17, 3
      %p196 = scmp.lt.s32.totalorder %s193, 63
      %s197 = scalar_select %p196, %s193, 63
      %s198 = smul.addr %s195, 64
      %s199 = sadd.s32 %s197, %s198
      %s200 = smul.addr %s199, 8
      %s201 = scalar_lea.vmem %s2, %s200
      %s202 = smul.u32 32, %s18
      %v203 = vld [vmem:[%s186] sm:$0xf]
      %v204 = vld [vmem:[%s186 + $0x4] sm:$0xf]
      %v205 = vld [vmem:[%s186 + $0x8] sm:$0xf]
      %v206 = vld [vmem:[%s186 + $0xc] sm:$0xf]
      %v207 = vld [vmem:[%s186 + $0x10] sm:$0xf]
      %v208 = vld [vmem:[%s186 + $0x14] sm:$0xf]
      %v209 = vld [vmem:[%s186 + $0x18] sm:$0xf]
      %v210 = vld [vmem:[%s186 + $0x1c] sm:$0xf]
      %v211 = vld [vmem:[%s186 + $0x20] sm:$0xf]
      %v212 = vld [vmem:[%s186 + $0x24] sm:$0xf]
      %v213 = vld [vmem:[%s186 + $0x28] sm:$0xf]
      %v214 = vld [vmem:[%s186 + $0x2c] sm:$0xf]
      %v215 = vld [vmem:[%s186 + $0x30] sm:$0xf]
      %v216 = vld [vmem:[%s186 + $0x34] sm:$0xf]
      %v217 = vld [vmem:[%s186 + $0x38] sm:$0xf]
      %v218 = vld [vmem:[%s186 + $0x3c] sm:$0xf]
      %v219 = vld [vmem:[%s186 + $0x40] sm:$0xf]
      %v220 = vld [vmem:[%s186 + $0x44] sm:$0xf]
      %v221 = vld [vmem:[%s186 + $0x48] sm:$0xf]
      %v222 = vld [vmem:[%s186 + $0x4c] sm:$0xf]
      %v223 = vld [vmem:[%s186 + $0x50] sm:$0xf]
      %v224 = vld [vmem:[%s186 + $0x54] sm:$0xf]
      %v225 = vld [vmem:[%s186 + $0x58] sm:$0xf]
      %v226 = vld [vmem:[%s186 + $0x5c] sm:$0xf]
      %v227 = vld [vmem:[%s186 + $0x60] sm:$0xf]
      %v228 = vld [vmem:[%s186 + $0x64] sm:$0xf]
      %v229 = vld [vmem:[%s186 + $0x68] sm:$0xf]
      %v230 = vld [vmem:[%s186 + $0x6c] sm:$0xf]
      %v231 = vld [vmem:[%s186 + $0x70] sm:$0xf]
      %v232 = vld [vmem:[%s186 + $0x74] sm:$0xf]
      %v233 = vld [vmem:[%s186 + $0x78] sm:$0xf]
      %v234 = vld [vmem:[%s186 + $0x7c] sm:$0xf]
      %v235 = vld [vmem:[%s192] sm:$0xf]
      %v236 = vld [vmem:[%s192 + $0x4] sm:$0xf]
      %v237 = vld [vmem:[%s192 + $0x8] sm:$0xf]
      %v238 = vld [vmem:[%s192 + $0xc] sm:$0xf]
      %v239 = vld [vmem:[%s192 + $0x10] sm:$0xf]
      %v240 = vld [vmem:[%s192 + $0x14] sm:$0xf]
      %v241 = vld [vmem:[%s192 + $0x18] sm:$0xf]
      %v242 = vld [vmem:[%s192 + $0x1c] sm:$0xf]
      %v243 = vld [vmem:[%s192 + $0x20] sm:$0xf]
      %v244 = vld [vmem:[%s192 + $0x24] sm:$0xf]
      %v245 = vld [vmem:[%s192 + $0x28] sm:$0xf]
      %v246 = vld [vmem:[%s192 + $0x2c] sm:$0xf]
      %v247 = vld [vmem:[%s192 + $0x30] sm:$0xf]
      %v248 = vld [vmem:[%s192 + $0x34] sm:$0xf]
      %v249 = vld [vmem:[%s192 + $0x38] sm:$0xf]
      %v250 = vld [vmem:[%s192 + $0x3c] sm:$0xf]
      %v283 = vunpack.c.l.b16 %v203
      %v284 = vunpack.c.l.b16 %v204
      %v285 = vunpack.c.l.b16 %v205
      %v286 = vunpack.c.l.b16 %v206
      %v287 = vunpack.c.l.b16 %v207
      %v288 = vunpack.c.l.b16 %v208
      %v289 = vunpack.c.l.b16 %v209
      %v290 = vunpack.c.l.b16 %v210
      %v291 = vunpack.c.l.b16 %v211
      %v292 = vunpack.c.l.b16 %v212
      %v293 = vunpack.c.l.b16 %v213
      %v294 = vunpack.c.l.b16 %v214
      %v295 = vunpack.c.l.b16 %v215
      %v296 = vunpack.c.l.b16 %v216
      %v297 = vunpack.c.l.b16 %v217
      %v298 = vunpack.c.l.b16 %v218
      %v299 = vunpack.c.l.b16 %v219
      %v300 = vunpack.c.l.b16 %v220
      %v301 = vunpack.c.l.b16 %v221
      %v302 = vunpack.c.l.b16 %v222
      %v303 = vunpack.c.l.b16 %v223
      %v304 = vunpack.c.l.b16 %v224
      %v305 = vunpack.c.l.b16 %v225
      %v306 = vunpack.c.l.b16 %v226
      %v307 = vunpack.c.l.b16 %v227
      %v308 = vunpack.c.l.b16 %v228
      %v309 = vunpack.c.l.b16 %v229
      %v310 = vunpack.c.l.b16 %v230
      %v311 = vunpack.c.l.b16 %v231
      %v312 = vunpack.c.l.b16 %v232
      %v313 = vunpack.c.l.b16 %v233
      %v314 = vunpack.c.l.b16 %v234
      %v315 = vpack.c.b16 %v284, %v283
      %v316 = vpack.c.b16 %v286, %v285
      %v317 = vpack.c.b16 %v288, %v287
      %v318 = vpack.c.b16 %v290, %v289
      %v319 = vpack.c.b16 %v292, %v291
      %v320 = vpack.c.b16 %v294, %v293
      %v321 = vpack.c.b16 %v296, %v295
      %v322 = vpack.c.b16 %v298, %v297
      %v323 = vpack.c.b16 %v300, %v299
      %v324 = vpack.c.b16 %v302, %v301
      %v325 = vpack.c.b16 %v304, %v303
      %v326 = vpack.c.b16 %v306, %v305
      %v327 = vpack.c.b16 %v308, %v307
      %v328 = vpack.c.b16 %v310, %v309
      %v329 = vpack.c.b16 %v312, %v311
      %v330 = vpack.c.b16 %v314, %v313
      %v363 = vunpack.c.l.b16 %v235
      %v364 = vunpack.c.l.b16 %v236
      %v365 = vunpack.c.l.b16 %v237
      %v366 = vunpack.c.l.b16 %v238
      %v367 = vunpack.c.l.b16 %v239
      %v368 = vunpack.c.l.b16 %v240
      %v369 = vunpack.c.l.b16 %v241
      %v370 = vunpack.c.l.b16 %v242
      %v371 = vunpack.c.l.b16 %v243
      %v372 = vunpack.c.l.b16 %v244
      %v373 = vunpack.c.l.b16 %v245
      %v374 = vunpack.c.l.b16 %v246
      %v375 = vunpack.c.l.b16 %v247
      %v376 = vunpack.c.l.b16 %v248
      %v377 = vunpack.c.l.b16 %v249
      %v378 = vunpack.c.l.b16 %v250
      %v379 = vpack.c.b16 %v364, %v363
      %v380 = vpack.c.b16 %v366, %v365
      %v381 = vpack.c.b16 %v368, %v367
      %v382 = vpack.c.b16 %v370, %v369
      %v383 = vpack.c.b16 %v372, %v371
      %v384 = vpack.c.b16 %v374, %v373
      %v385 = vpack.c.b16 %v376, %v375
      %v386 = vpack.c.b16 %v378, %v377
      %395 = vmatpush.bf16.msra.mxu0 %v386
      %396 = vmatpush.bf16.msra.mxu0 %v385
      %397 = vmatpush.bf16.msra.mxu0 %v384
      %398 = vmatpush.bf16.msra.mxu0 %v383
      %399 = vmatpush.bf16.msra.mxu0 %v382
      %400 = vmatpush.bf16.msra.mxu0 %v381
      %401 = vmatpush.bf16.msra.mxu0 %v380
      %402 = vmatpush.bf16.msra.mxu0 %v379
      %403 = vmatmul.bf16.gmra.mxu0 %v315
      %v404 = vpop.f32.mrf.mxu0
      %v405 = vadd.f32 0.0, %v404
      %v406 = vpop.f32.mrf.mxu0
      %v407 = vadd.f32 0.0, %v406
      %408 = vmatmul.bf16.gmra.mxu0 %v316
      %v409 = vpop.f32.mrf.mxu0
      %v410 = vadd.f32 0.0, %v409
      %v411 = vpop.f32.mrf.mxu0
      %v412 = vadd.f32 0.0, %v411
      %413 = vmatmul.bf16.gmra.mxu0 %v317
      %v414 = vpop.f32.mrf.mxu0
      %v415 = vadd.f32 0.0, %v414
      %v416 = vpop.f32.mrf.mxu0
      %v417 = vadd.f32 0.0, %v416
      %418 = vmatmul.bf16.gmra.mxu0 %v318
      %v419 = vpop.f32.mrf.mxu0
      %v420 = vadd.f32 0.0, %v419
      %v421 = vpop.f32.mrf.mxu0
      %v422 = vadd.f32 0.0, %v421
      %423 = vmatmul.bf16.gmra.mxu0 %v319
      %v424 = vpop.f32.mrf.mxu0
      %v425 = vadd.f32 0.0, %v424
      %v426 = vpop.f32.mrf.mxu0
      %v427 = vadd.f32 0.0, %v426
      %428 = vmatmul.bf16.gmra.mxu0 %v320
      %v429 = vpop.f32.mrf.mxu0
      %v430 = vadd.f32 0.0, %v429
      %v431 = vpop.f32.mrf.mxu0
      %v432 = vadd.f32 0.0, %v431
      %433 = vmatmul.bf16.gmra.mxu0 %v321
      %v434 = vpop.f32.mrf.mxu0
      %v435 = vadd.f32 0.0, %v434
      %v436 = vpop.f32.mrf.mxu0
      %v437 = vadd.f32 0.0, %v436
      %438 = vmatmul.bf16.gmra.mxu0 %v322
      %v439 = vpop.f32.mrf.mxu0
      %v440 = vadd.f32 0.0, %v439
      %v441 = vpop.f32.mrf.mxu0
      %v442 = vadd.f32 0.0, %v441
      %443 = vmatmul.bf16.gmra.mxu0 %v323
      %v444 = vpop.f32.mrf.mxu0
      %v445 = vadd.f32 0.0, %v444
      %v446 = vpop.f32.mrf.mxu0
      %v447 = vadd.f32 0.0, %v446
      %448 = vmatmul.bf16.gmra.mxu0 %v324
      %v449 = vpop.f32.mrf.mxu0
      %v450 = vadd.f32 0.0, %v449
      %v451 = vpop.f32.mrf.mxu0
      %v452 = vadd.f32 0.0, %v451
      %453 = vmatmul.bf16.gmra.mxu0 %v325
      %v454 = vpop.f32.mrf.mxu0
      %v455 = vadd.f32 0.0, %v454
      %v456 = vpop.f32.mrf.mxu0
      %v457 = vadd.f32 0.0, %v456
      %458 = vmatmul.bf16.gmra.mxu0 %v326
      %v459 = vpop.f32.mrf.mxu0
      %v460 = vadd.f32 0.0, %v459
      %v461 = vpop.f32.mrf.mxu0
      %v462 = vadd.f32 0.0, %v461
      %463 = vmatmul.bf16.gmra.mxu0 %v327
      %v464 = vpop.f32.mrf.mxu0
      %v465 = vadd.f32 0.0, %v464
      %v466 = vpop.f32.mrf.mxu0
      %v467 = vadd.f32 0.0, %v466
      %468 = vmatmul.bf16.gmra.mxu0 %v328
      %v469 = vpop.f32.mrf.mxu0
      %v470 = vadd.f32 0.0, %v469
      %v471 = vpop.f32.mrf.mxu0
      %v472 = vadd.f32 0.0, %v471
      %473 = vmatmul.bf16.gmra.mxu0 %v329
      %v474 = vpop.f32.mrf.mxu0
      %v475 = vadd.f32 0.0, %v474
      %v476 = vpop.f32.mrf.mxu0
      %v477 = vadd.f32 0.0, %v476
      %478 = vmatmul.bf16.gmra.mxu0 %v330
      %v479 = vpop.f32.mrf.mxu0
      %v480 = vadd.f32 0.0, %v479
      %v481 = vpop.f32.mrf.mxu0
      %v482 = vadd.f32 0.0, %v481
      %483 = vdwg.mxu0
      %v484 = vtanh.pop %v405
      %v485 = vtanh.pop %v407
      %v486 = vtanh.pop %v410
      %v487 = vtanh.pop %v412
      %v488 = vtanh.pop %v415
      %v489 = vtanh.pop %v417
      %v490 = vtanh.pop %v420
      %v491 = vtanh.pop %v422
      %v492 = vtanh.pop %v425
      %v493 = vtanh.pop %v427
      %v494 = vtanh.pop %v430
      %v495 = vtanh.pop %v432
      %v496 = vtanh.pop %v435
      %v497 = vtanh.pop %v437
      %v498 = vtanh.pop %v440
      %v499 = vtanh.pop %v442
      %v500 = vtanh.pop %v445
      %v501 = vtanh.pop %v447
      %v502 = vtanh.pop %v450
      %v503 = vtanh.pop %v452
      %v504 = vtanh.pop %v455
      %v505 = vtanh.pop %v457
      %v506 = vtanh.pop %v460
      %v507 = vtanh.pop %v462
      %v508 = vtanh.pop %v465
      %v509 = vtanh.pop %v467
      %v510 = vtanh.pop %v470
      %v511 = vtanh.pop %v472
      %v512 = vtanh.pop %v475
      %v513 = vtanh.pop %v477
      %v514 = vtanh.pop %v480
      %v515 = vtanh.pop %v482
      %516 = vst [vmem:[%s201] sm:$0xff] %v484
      %517 = vst [vmem:[%s201 + $0x8] sm:$0xff] %v485
      %518 = vst [vmem:[%s201 + $0x10] sm:$0xff] %v486
      %519 = vst [vmem:[%s201 + $0x18] sm:$0xff] %v487
      %520 = vst [vmem:[%s201 + $0x20] sm:$0xff] %v488
      %521 = vst [vmem:[%s201 + $0x28] sm:$0xff] %v489
      %522 = vst [vmem:[%s201 + $0x30] sm:$0xff] %v490
      %523 = vst [vmem:[%s201 + $0x38] sm:$0xff] %v491
      %524 = vst [vmem:[%s201 + $0x40] sm:$0xff] %v492
      %525 = vst [vmem:[%s201 + $0x48] sm:$0xff] %v493
      %526 = vst [vmem:[%s201 + $0x50] sm:$0xff] %v494
      %527 = vst [vmem:[%s201 + $0x58] sm:$0xff] %v495
      %528 = vst [vmem:[%s201 + $0x60] sm:$0xff] %v496
      %529 = vst [vmem:[%s201 + $0x68] sm:$0xff] %v497
      %530 = vst [vmem:[%s201 + $0x70] sm:$0xff] %v498
      %531 = vst [vmem:[%s201 + $0x78] sm:$0xff] %v499
      %532 = vst [vmem:[%s201 + $0x80] sm:$0xff] %v500
      %533 = vst [vmem:[%s201 + $0x88] sm:$0xff] %v501
      %534 = vst [vmem:[%s201 + $0x90] sm:$0xff] %v502
      %535 = vst [vmem:[%s201 + $0x98] sm:$0xff] %v503
      %536 = vst [vmem:[%s201 + $0xa0] sm:$0xff] %v504
      %537 = vst [vmem:[%s201 + $0xa8] sm:$0xff] %v505
      %538 = vst [vmem:[%s201 + $0xb0] sm:$0xff] %v506
      %539 = vst [vmem:[%s201 + $0xb8] sm:$0xff] %v507
      %540 = vst [vmem:[%s201 + $0xc0] sm:$0xff] %v508
      %541 = vst [vmem:[%s201 + $0xc8] sm:$0xff] %v509
      %542 = vst [vmem:[%s201 + $0xd0] sm:$0xff] %v510
      %543 = vst [vmem:[%s201 + $0xd8] sm:$0xff] %v511
      %544 = vst [vmem:[%s201 + $0xe0] sm:$0xff] %v512
      %545 = vst [vmem:[%s201 + $0xe8] sm:$0xff] %v513
      %546 = vst [vmem:[%s201 + $0xf0] sm:$0xff] %v514
      %547 = vst [vmem:[%s201 + $0xf8] sm:$0xff] %v515
      %s548 = smul.u32 32, %s18
      %p549 = scmp.lt.s32.totalorder %s17, 3
      %s550 = scalar_select %p549, %s17, 3
      %p551 = scmp.lt.s32.totalorder %s548, 63
      %s552 = scalar_select %p551, %s548, 63
      %s553 = smul.addr %s550, 64
      %s554 = sadd.s32 %s552, %s553
      %s555 = smul.addr %s554, 8
      %s556 = scalar_lea.vmem %s2, %s555
      // Predicated region
      $region29: #{_lambda_.7} parent=27 // pred_check
        %p557 = pneg %p99
      $region30: #{_lambda_.7} parent=27 // pred_check_branch
        %559 = sbr.rel (%p557) target = $region32
      $region31: #{_lambda_.7} parent=27 // pred_region
        %s560 = smul.u32 32, %s18
      $region32: #{_lambda_.7} parent=27 // pred_fallthru
        _
    $region28: #{_lambda_.7} parent=5 // pred_fallthru
      _
    %p561 = scmp.le.s32.totalorder 2, %s8
    // Predicated region
    $region33: #{_lambda_.7} parent=5 // pred_check
      %p562 = pneg %p561
    $region34: #{_lambda_.7} parent=5 // pred_check_branch
      %564 = sbr.rel (%p562) target = $region36
    $region35: #{_lambda_.7} parent=5 // pred_region
      %s565 = ssub.s32 %s8, 2
      // Predicated region
      $region37: #{_lambda_.7} parent=35 // pred_check
        %p566 = pneg %p105
      $region38: #{_lambda_.7} parent=35 // pred_check_branch
        %568 = sbr.rel (%p566) target = $region40
      $region39: #{_lambda_.7} parent=35 // pred_region
        %s569 = smul.u32 32, %s20
        %p570 = scmp.lt.s32.totalorder %s19, 3
        %s571 = scalar_select %p570, %s19, 3
        %p572 = scmp.lt.s32.totalorder %s569, 63
        %s573 = scalar_select %p572, %s569, 63
        %s574 = smul.addr %s571, 64
        %s575 = sadd.s32 %s573, %s574
        %s576 = smul.addr %s575, 8
        %s577 = scalar_lea.vmem %s2, %s576
      $region40: #{_lambda_.7} parent=35 // pred_fallthru
        _
    $region36: #{_lambda_.7} parent=5 // pred_fallthru
      _
  $region6: #{_lambda_.7} parent=0 // loop_footer
    %s12 = sadd.s32 1, %s8
  $region7: #{_lambda_.7} parent=0 // loop_footer_branch
    %7 = sbr.rel target = $region3
  $region8: #{_lambda_.7} parent=0 // loop_exit
    _

</llo_original>
